<compile_context>
chip_gen: v7x
topology: tpu7x:2x2x1
jax: 0.10.0
libtpu: 0.0.40
codegen_flags: <defaults>
</compile_context>

<pallas_src>
import functools

import jax
import jax.numpy as jnp
from jax.experimental import pallas as pl
from jax.experimental.pallas import tpu as pltpu

_LANE = 128


def _round_up(x, m):
    return (x + m - 1) // m * m


def _vmem_limit_bytes():
    # Generation-aware VMEM budget: ~75% of physical, capped at 100 MiB
    # (v7x: 64 MiB physical -> 48 MiB; v5e/v6e: 128 MiB -> 96 MiB).
    try:
        cap = int(pltpu.get_tpu_info().vmem_capacity_bytes)
    except Exception:
        cap = 64 * 1024 * 1024
    return int(min(cap * 3 // 4, 100 * 1024 * 1024))


_VMEM_LIMIT = _vmem_limit_bytes()


# ----------------------------------------------------------------------------
# Shared LSTM cell (gate order i, f, g, o -- PyTorch convention).
# Hp = gates.shape[-1] // 4 is a multiple of 128, so each slice is lane-aligned.
# ----------------------------------------------------------------------------
def _lstm_cell(gates, c_prev):
    hp = gates.shape[-1] // 4
    i_g = jax.nn.sigmoid(gates[:, 0 * hp:1 * hp])
    f_g = jax.nn.sigmoid(gates[:, 1 * hp:2 * hp])
    g_g = jnp.tanh(gates[:, 2 * hp:3 * hp])
    o_g = jax.nn.sigmoid(gates[:, 3 * hp:4 * hp])
    c_new = f_g * c_prev + i_g * g_g
    h_new = o_g * jnp.tanh(c_new)
    return h_new, c_new


# ----------------------------------------------------------------------------
# Kernel 1: one bidirectional LSTM layer (non-final), streamed over T.
#   grid = (batch_blocks, T); axis 0 parallel (megacore), axis 1 arbitrary.
#   x_f block (1,Bblk,Din) at time t; x_b block at time T-1-t (same array).
#   State h/c per direction lives in VMEM scratch, re-initialized at t==0.
# ----------------------------------------------------------------------------
def _bidir_layer_kernel(x_f_ref, x_b_ref, len_ref,
                        w_ih_f_ref, w_hh_f_ref, b_f_ref,
                        w_ih_b_ref, w_hh_b_ref, b_b_ref,
                        y_f_ref, y_b_ref,
                        h_f, c_f, h_b, c_b):
    t = pl.program_id(1)
    T = pl.num_programs(1)

    @pl.when(t == 0)
    def _init():
        h_f[...] = jnp.zeros_like(h_f)
        c_f[...] = jnp.zeros_like(c_f)
        h_b[...] = jnp.zeros_like(h_b)
        c_b[...] = jnp.zeros_like(c_b)

    lens = len_ref[...]                         # [Bblk, 1] int32
    m_f = t < lens                              # [Bblk, 1] bool
    m_b = (T - 1 - t) < lens

    # Fused input + recurrent projections.  Forward / backward dots are
    # adjacent and independent so the two MXU chains interleave (hides MRF
    # pop latency on v5e/v6e).
    g_f = (jnp.dot(x_f_ref[0], w_ih_f_ref[...],
                   preferred_element_type=jnp.float32)
           + jnp.dot(h_f[...].astype(jnp.bfloat16), w_hh_f_ref[...],
                     preferred_element_type=jnp.float32)
           + b_f_ref[...])
    g_b = (jnp.dot(x_b_ref[0], w_ih_b_ref[...],
                   preferred_element_type=jnp.float32)
           + jnp.dot(h_b[...].astype(jnp.bfloat16), w_hh_b_ref[...],
                     preferred_element_type=jnp.float32)
           + b_b_ref[...])

    hf_new, cf_new = _lstm_cell(g_f, c_f[...])
    hb_new, cb_new = _lstm_cell(g_b, c_b[...])

    # Outputs at padded positions are zero (pad_packed_sequence default).
    y_f_ref[0] = jnp.where(m_f, hf_new, 0.0).astype(y_f_ref.dtype)
    y_b_ref[0] = jnp.where(m_b, hb_new, 0.0).astype(y_b_ref.dtype)

    # Padded steps keep previous state (pack_padded semantics).
    h_f[...] = jnp.where(m_f, hf_new, h_f[...])
    c_f[...] = jnp.where(m_f, cf_new, c_f[...])
    h_b[...] = jnp.where(m_b, hb_new, h_b[...])
    c_b[...] = jnp.where(m_b, cb_new, c_b[...])


# ----------------------------------------------------------------------------
# Kernel 2: final layer recurrence fused with masked-mean pooling and the
# Linear/Tanh/Linear prediction head.  grid = (T,).
#   Pooling numerators accumulate in VMEM scratch; head runs once at t==T-1.
#   out: [B, C]  (rows 0..B-1 = sentence1, B..2B-1 = sentence2 in the batch).
# ----------------------------------------------------------------------------
def _bidir_head_kernel(x_f_ref, x_b_ref, len_ref,
                       w_ih_f_ref, w_hh_f_ref, b_f_ref,
                       w_ih_b_ref, w_hh_b_ref, b_b_ref,
                       w1_ref, b1_ref, w2_ref, b2_ref,
                       out_ref,
                       h_f, c_f, h_b, c_b, acc_f, acc_b):
    t = pl.program_id(0)
    T = pl.num_programs(0)
    B = out_ref.shape[0]

    @pl.when(t == 0)
    def _init():
        for r in (h_f, c_f, h_b, c_b, acc_f, acc_b):
            r[...] = jnp.zeros_like(r)

    lens = len_ref[...]
    m_f = t < lens
    m_b = (T - 1 - t) < lens

    g_f = (jnp.dot(x_f_ref[0], w_ih_f_ref[...],
                   preferred_element_type=jnp.float32)
           + jnp.dot(h_f[...].astype(jnp.bfloat16), w_hh_f_ref[...],
                     preferred_element_type=jnp.float32)
           + b_f_ref[...])
    g_b = (jnp.dot(x_b_ref[0], w_ih_b_ref[...],
                   preferred_element_type=jnp.float32)
           + jnp.dot(h_b[...].astype(jnp.bfloat16), w_hh_b_ref[...],
                     preferred_element_type=jnp.float32)
           + b_b_ref[...])

    hf_new, cf_new = _lstm_cell(g_f, c_f[...])
    hb_new, cb_new = _lstm_cell(g_b, c_b[...])

    # Masked-mean numerators (order-independent sums over valid positions).
    acc_f[...] = acc_f[...] + jnp.where(m_f, hf_new, 0.0)
    acc_b[...] = acc_b[...] + jnp.where(m_b, hb_new, 0.0)

    h_f[...] = jnp.where(m_f, hf_new, h_f[...])
    c_f[...] = jnp.where(m_f, cf_new, c_f[...])
    h_b[...] = jnp.where(m_b, hb_new, h_b[...])
    c_b[...] = jnp.where(m_b, cb_new, c_b[...])

    @pl.when(t == T - 1)
    def _head():
        # Exact divide (not pl.reciprocal approx) for parity with PyTorch.
        inv_len = 1.0 / jnp.maximum(len_ref[...].astype(jnp.float32), 1.0)
        mean = jnp.concatenate([acc_f[...], acc_b[...]], axis=-1) * inv_len
        m1 = mean[0:B, :]
        m2 = mean[B:2 * B, :]
        cat = jnp.concatenate([m1, m2, m1 - m2], axis=-1)         # [B, 6Hp]
        # Dropout layers in predict_fc are identity in eval mode.
        hid = jnp.tanh(jnp.dot(cat, w1_ref[...],
                               preferred_element_type=jnp.float32) + b1_ref[...])
        out = (jnp.dot(hid, w2_ref[...],
                       preferred_element_type=jnp.float32) + b2_ref[...])
        out_ref[...] = out.astype(out_ref.dtype)


# ----------------------------------------------------------------------------
# Pallas wrappers
# ----------------------------------------------------------------------------
def _pick_batch_block(bp):
    # Batch-parallel grid axis: shard batch blocks across TensorCores (2 on
    # v7x) while keeping each block a multiple of 8 sublanes.
    for blk in (256, 128, 64, 32, 16, 8):
        if bp > blk and bp % blk == 0:
            return blk
    return bp


def lstm_bidir_layer(x, lens, layer):
    """One bidirectional LSTM layer, streamed over T. Returns (y_f, y_b) bf16."""
    T, Bp, Din = x.shape
    Hp = layer["w_hh_f"].shape[0]
    b_block = _pick_batch_block(Bp)
    grid = (Bp // b_block, T)

    def full2(shape):  # whole 2-D array resident (constant block index)
        return pl.BlockSpec(shape, lambda b, t: (0, 0))

    x_f_spec = pl.BlockSpec((1, b_block, Din), lambda b, t: (t, b, 0))
    x_b_spec = pl.BlockSpec((1, b_block, Din), lambda b, t: (T - 1 - t, b, 0))
    len_spec = pl.BlockSpec((b_block, 1), lambda b, t: (b, 0))
    y_f_spec = pl.BlockSpec((1, b_block, Hp), lambda b, t: (t, b, 0))
    y_b_spec = pl.BlockSpec((1, b_block, Hp), lambda b, t: (T - 1 - t, b, 0))

    return pl.pallas_call(
        _bidir_layer_kernel,
        grid=grid,
        in_specs=[x_f_spec, x_b_spec, len_spec,
                  full2(layer["w_ih_f"].shape), full2(layer["w_hh_f"].shape),
                  full2(layer["b_f"].shape),
                  full2(layer["w_ih_b"].shape), full2(layer["w_hh_b"].shape),
                  full2(layer["b_b"].shape)],
        out_specs=(y_f_spec, y_b_spec),
        out_shape=(jax.ShapeDtypeStruct((T, Bp, Hp), jnp.bfloat16),
                   jax.ShapeDtypeStruct((T, Bp, Hp), jnp.bfloat16)),
        scratch_shapes=[pltpu.VMEM((b_block, Hp), jnp.float32)] * 4,
        compiler_params=pltpu.CompilerParams(
            dimension_semantics=("parallel", "arbitrary"),
            vmem_limit_bytes=_VMEM_LIMIT),
    )(x, x, lens, layer["w_ih_f"], layer["w_hh_f"], layer["b_f"],
      layer["w_ih_b"], layer["w_hh_b"], layer["b_b"])


def lstm_last_layer_head(x, lens, layer, head, n_sent):
    """Final layer recurrence + masked-mean pooling + MLP head -> [B, C]."""
    T, Bp, Din = x.shape
    Hp = layer["w_hh_f"].shape[0]
    n_classes = head["w2"].shape[1]

    def full2(shape):
        return pl.BlockSpec(shape, lambda t: (0, 0))

    x_f_spec = pl.BlockSpec((1, Bp, Din), lambda t: (t, 0, 0))
    x_b_spec = pl.BlockSpec((1, Bp, Din), lambda t: (T - 1 - t, 0, 0))

    # TODO(synk): shard this kernel over batch blocks too (blocks must keep the
    # (sentence1, sentence2) pairs together for the m1/m2 pairing in the head).
    return pl.pallas_call(
        _bidir_head_kernel,
        grid=(T,),
        in_specs=[x_f_spec, x_b_spec, full2(lens.shape),
                  full2(layer["w_ih_f"].shape), full2(layer["w_hh_f"].shape),
                  full2(layer["b_f"].shape),
                  full2(layer["w_ih_b"].shape), full2(layer["w_hh_b"].shape),
                  full2(layer["b_b"].shape),
                  full2(head["w1"].shape), full2(head["b1"].shape),
                  full2(head["w2"].shape), full2(head["b2"].shape)],
        out_specs=pl.BlockSpec((n_sent, n_classes), lambda t: (0, 0)),
        out_shape=jax.ShapeDtypeStruct((n_sent, n_classes), jnp.float32),
        scratch_shapes=[pltpu.VMEM((Bp, Hp), jnp.float32)] * 6,
        compiler_params=pltpu.CompilerParams(
            dimension_semantics=("arbitrary",),
            vmem_limit_bytes=_VMEM_LIMIT),
    )(x, x, lens, layer["w_ih_f"], layer["w_hh_f"], layer["b_f"],
      layer["w_ih_b"], layer["w_hh_b"], layer["b_b"],
      head["w1"], head["b1"], head["w2"], head["b2"])


# ----------------------------------------------------------------------------
# Full LSTMBase forward
# ----------------------------------------------------------------------------
def lstm_base_forward(params, sentences1, sentences2, padding_idx):
    emb = params["emb"]                       # [V, E] bf16
    layers = params["encoder"]
    head = params["head"]
    n_layers = len(layers)

    B, T = sentences1.shape
    Bp = 2 * B
    Bp_pad = _round_up(Bp, 8)                 # sublane-aligned batch

    # Both sentences share the encoder: stack them along batch.
    ids = jnp.concatenate([sentences1, sentences2], axis=0)        # [Bp, T]
    if Bp_pad > Bp:
        pad_rows = jnp.full((Bp_pad - Bp, T), padding_idx, ids.dtype)
        ids = jnp.concatenate([ids, pad_rows], axis=0)
    lens = jnp.sum(ids != padding_idx, axis=-1,
                   keepdims=True).astype(jnp.int32)                # [Bp_pad, 1]

    # Time-major bf16 embedding gather (no f32 activations in HBM).
    x = jnp.take(emb, ids.T, axis=0)                               # [T, Bp_pad, E]

    out = None
    for li, layer in enumerate(layers):
        if li < n_layers - 1:
            y_f, y_b = lstm_bidir_layer(x, lens, layer)
            # Next-layer input: lane-dense [T, Bp, 2Hp] fwd|bwd concat.  (The
            # two directions write different time blocks, so the merge happens
            # here in XLA rather than inside the kernel.)
            # TODO(synk): inter-layer LSTM dropout omitted (identity in eval).
            x = jnp.concatenate([y_f, y_b], axis=-1)
        else:
            # Dropout layers in predict_fc are identity in eval mode.
            out = lstm_last_layer_head(x, lens, layer, head, B)
    return out                                                     # [B, C]


# ----------------------------------------------------------------------------
# Parameter construction + TPU layout preparation (lane padding, bf16 cast)
# ----------------------------------------------------------------------------
def make_params(key, vocab, emb_dim, hidden, n_layers, n_classes):
    """Logical (unpadded) parameters; gate order i,f,g,o; biases pre-folded.

    From a real PyTorch checkpoint: w_ih = weight_ih_l{k}.T, w_hh =
    weight_hh_l{k}.T, b = bias_ih_l{k} + bias_hh_l{k} (and *_reverse for the
    backward direction); head weights are linear.weight.T.
    """
    keys = iter(jax.random.split(key, 6 * n_layers + 8))

    def normal(shape, scale=0.1):
        return scale * jax.random.normal(next(keys), shape, dtype=jnp.float32)

    params = {"emb": normal((vocab, emb_dim), 1.0), "encoder": [], "head": {}}
    for layer in range(n_layers):
        din = emb_dim if layer == 0 else 2 * hidden
        params["encoder"].append({
            "w_ih_f": normal((din, 4 * hidden)),
            "w_hh_f": normal((hidden, 4 * hidden)),
            "b_f": normal((4 * hidden,)),
            "w_ih_b": normal((din, 4 * hidden)),
            "w_hh_b": normal((hidden, 4 * hidden)),
            "b_b": normal((4 * hidden,)),
        })
    params["head"] = {
        "w1": normal((6 * hidden, hidden)),
        "b1": normal((hidden,)),
        "w2": normal((hidden, n_classes)),
        "b2": normal((n_classes,)),
    }
    return params


def prepare_params(params, hidden):
    """Pad hidden to a lane-aligned Hp (multiple of 128) and cast for the MXU.

    Padded hidden units have all-zero weights/biases, so they stay exactly zero
    through the recurrence and pooling, and the zero-padded w1 rows leave the
    logits unchanged (up to bf16 rounding of the real units).
    """
    H = hidden
    Hp = _round_up(H, _LANE)

    def pad_last(a, new):
        if a.shape[-1] == new:
            return a
        pads = [(0, 0)] * (a.ndim - 1) + [(0, new - a.shape[-1])]
        return jnp.pad(a, pads)

    def pad_gate_cols(w):                      # [..., 4H] -> [..., 4Hp]
        lead = w.shape[:-1]
        return pad_last(w.reshape(lead + (4, H)), Hp).reshape(lead + (4 * Hp,))

    def pad_h_rows(w, n_chunks):               # [n*H, N] -> [n*Hp, N]
        n_cols = w.shape[-1]
        w = w.reshape((n_chunks, H, n_cols))
        w = jnp.pad(w, ((0, 0), (0, Hp - H), (0, 0)))
        return w.reshape((n_chunks * Hp, n_cols))

    prepped = {"emb": params["emb"].astype(jnp.bfloat16), "encoder": [],
               "head": {}}
    for li, layer in enumerate(params["encoder"]):
        entry = {}
        for d in ("f", "b"):
            w_ih = layer["w_ih_" + d]
            if li > 0:                         # input is [y_fwd | y_bwd]
                w_ih = pad_h_rows(w_ih, 2)
            entry["w_ih_" + d] = pad_gate_cols(w_ih).astype(jnp.bfloat16)
            entry["w_hh_" + d] = pad_gate_cols(
                pad_h_rows(layer["w_hh_" + d], 1)).astype(jnp.bfloat16)
            entry["b_" + d] = pad_gate_cols(
                layer["b_" + d].reshape(1, 4 * H)).astype(jnp.float32)
        prepped["encoder"].append(entry)

    head = params["head"]
    prepped["head"] = {
        "w1": pad_h_rows(head["w1"], 6).astype(jnp.float32),  # m1f,m1b,m2f,m2b,df,db
        "b1": head["b1"].reshape(1, -1).astype(jnp.float32),
        "w2": head["w2"].astype(jnp.float32),
        "b2": head["b2"].reshape(1, -1).astype(jnp.float32),
    }
    return prepped


# ----------------------------------------------------------------------------
if __name__ == "__main__":
    VOCAB = 50
    EMB_DIM = 32
    HIDDEN = 32
    N_LAYERS = 2
    N_CLASSES = 3
    PADDING_IDX = 0
    B, T = 2, 8

    key = jax.random.PRNGKey(0)
    k_par, k_s1, k_s2 = jax.random.split(key, 3)

    params = prepare_params(
        make_params(k_par, VOCAB, EMB_DIM, HIDDEN, N_LAYERS, N_CLASSES), HIDDEN)

    s1 = jax.random.randint(k_s1, (B, T), 1, VOCAB)
    s2 = jax.random.randint(k_s2, (B, T), 1, VOCAB)
    pos = jnp.arange(T)[None, :]
    len1 = jnp.array([5, 8])
    len2 = jnp.array([8, 3])
    s1 = jnp.where(pos < len1[:, None], s1, PADDING_IDX)
    s2 = jnp.where(pos < len2[:, None], s2, PADDING_IDX)

    fwd = jax.jit(functools.partial(lstm_base_forward, padding_idx=PADDING_IDX))
    out = jax.block_until_ready(fwd(params, s1, s2))

    assert out.shape == (B, N_CLASSES)
    assert bool(jnp.all(jnp.isfinite(out)))
    print("KERNEL_OK")
</pallas_src>

<mosaic_0001>
module attributes {stable_mosaic.version = 11 : i64} {
  func.func @_bidir_head_kernel(%arg0: i32, %arg1: memref<1x8x256xbf16, #tpu.memory_space<vmem>>, %arg2: memref<1x8x256xbf16, #tpu.memory_space<vmem>>, %arg3: memref<8x1xi32, #tpu.memory_space<vmem>>, %arg4: memref<256x512xbf16, #tpu.memory_space<vmem>>, %arg5: memref<128x512xbf16, #tpu.memory_space<vmem>>, %arg6: memref<1x512xf32, #tpu.memory_space<vmem>>, %arg7: memref<256x512xbf16, #tpu.memory_space<vmem>>, %arg8: memref<128x512xbf16, #tpu.memory_space<vmem>>, %arg9: memref<1x512xf32, #tpu.memory_space<vmem>>, %arg10: memref<768x32xf32, #tpu.memory_space<vmem>>, %arg11: memref<1x32xf32, #tpu.memory_space<vmem>>, %arg12: memref<32x3xf32, #tpu.memory_space<vmem>>, %arg13: memref<1x3xf32, #tpu.memory_space<vmem>>, %arg14: memref<2x3xf32, #tpu.memory_space<vmem>>, %arg15: memref<8x128xf32, #tpu.memory_space<vmem>>, %arg16: memref<8x128xf32, #tpu.memory_space<vmem>>, %arg17: memref<8x128xf32, #tpu.memory_space<vmem>>, %arg18: memref<8x128xf32, #tpu.memory_space<vmem>>, %arg19: memref<8x128xf32, #tpu.memory_space<vmem>>, %arg20: memref<8x128xf32, #tpu.memory_space<vmem>>) attributes {dimension_semantics = [#tpu.dimension_semantics<arbitrary>], iteration_bounds = array<i64: 8>, scalar_prefetch = 0 : i64, scratch_operands = 6 : i64, tpu.core_type = #tpu.core_type<tc>, window_params = [{transform_indices = @transform_0, window_bounds = array<i64: 1, 8, 256>}, {transform_indices = @transform_1, window_bounds = array<i64: 1, 8, 256>}, {pipeline_mode = #tpu.pipeline_mode<synchronous>, transform_indices = @transform_2, window_bounds = array<i64: 8, 1>}, {pipeline_mode = #tpu.pipeline_mode<synchronous>, transform_indices = @transform_3, window_bounds = array<i64: 256, 512>}, {pipeline_mode = #tpu.pipeline_mode<synchronous>, transform_indices = @transform_4, window_bounds = array<i64: 128, 512>}, {pipeline_mode = #tpu.pipeline_mode<synchronous>, transform_indices = @transform_5, window_bounds = array<i64: 1, 512>}, {pipeline_mode = #tpu.pipeline_mode<synchronous>, transform_indices = @transform_6, window_bounds = array<i64: 256, 512>}, {pipeline_mode = #tpu.pipeline_mode<synchronous>, transform_indices = @transform_7, window_bounds = array<i64: 128, 512>}, {pipeline_mode = #tpu.pipeline_mode<synchronous>, transform_indices = @transform_8, window_bounds = array<i64: 1, 512>}, {pipeline_mode = #tpu.pipeline_mode<synchronous>, transform_indices = @transform_9, window_bounds = array<i64: 768, 32>}, {pipeline_mode = #tpu.pipeline_mode<synchronous>, transform_indices = @transform_10, window_bounds = array<i64: 1, 32>}, {pipeline_mode = #tpu.pipeline_mode<synchronous>, transform_indices = @transform_11, window_bounds = array<i64: 32, 3>}, {pipeline_mode = #tpu.pipeline_mode<synchronous>, transform_indices = @transform_12, window_bounds = array<i64: 1, 3>}, {pipeline_mode = #tpu.pipeline_mode<synchronous>, transform_indices = @transform_13, window_bounds = array<i64: 2, 3>}]} {
    %c0_i32 = arith.constant 0 : i32
    %0 = arith.cmpi eq, %arg0, %c0_i32 : i32
    %1 = arith.extui %0 : i1 to i32
    %c0_i32_0 = arith.constant 0 : i32
    %2 = arith.cmpi ne, %1, %c0_i32_0 : i32
    scf.if %2 {
      %cst_65 = arith.constant 0.000000e+00 : f32
      %122 = vector.broadcast %cst_65 : f32 to vector<8x128xf32>
      %c0_66 = arith.constant 0 : index
      %c0_67 = arith.constant 0 : index
      %123 = vector.load %arg15[%c0_66, %c0_67] : memref<8x128xf32, #tpu.memory_space<vmem>>, vector<8x128xf32>
      tpu.vector_store %arg15[%c0_66, %c0_67], %122 {strides = array<i32>} : memref<8x128xf32, #tpu.memory_space<vmem>>, vector<8x128xf32>,
      %cst_68 = arith.constant 0.000000e+00 : f32
      %124 = vector.broadcast %cst_68 : f32 to vector<8x128xf32>
      %c0_69 = arith.constant 0 : index
      %c0_70 = arith.constant 0 : index
      %125 = vector.load %arg16[%c0_69, %c0_70] : memref<8x128xf32, #tpu.memory_space<vmem>>, vector<8x128xf32>
      tpu.vector_store %arg16[%c0_69, %c0_70], %124 {strides = array<i32>} : memref<8x128xf32, #tpu.memory_space<vmem>>, vector<8x128xf32>,
      %cst_71 = arith.constant 0.000000e+00 : f32
      %126 = vector.broadcast %cst_71 : f32 to vector<8x128xf32>
      %c0_72 = arith.constant 0 : index
      %c0_73 = arith.constant 0 : index
      %127 = vector.load %arg17[%c0_72, %c0_73] : memref<8x128xf32, #tpu.memory_space<vmem>>, vector<8x128xf32>
      tpu.vector_store %arg17[%c0_72, %c0_73], %126 {strides = array<i32>} : memref<8x128xf32, #tpu.memory_space<vmem>>, vector<8x128xf32>,
      %cst_74 = arith.constant 0.000000e+00 : f32
      %128 = vector.broadcast %cst_74 : f32 to vector<8x128xf32>
      %c0_75 = arith.constant 0 : index
      %c0_76 = arith.constant 0 : index
      %129 = vector.load %arg18[%c0_75, %c0_76] : memref<8x128xf32, #tpu.memory_space<vmem>>, vector<8x128xf32>
      tpu.vector_store %arg18[%c0_75, %c0_76], %128 {strides = array<i32>} : memref<8x128xf32, #tpu.memory_space<vmem>>, vector<8x128xf32>,
      %cst_77 = arith.constant 0.000000e+00 : f32
      %130 = vector.broadcast %cst_77 : f32 to vector<8x128xf32>
      %c0_78 = arith.constant 0 : index
      %c0_79 = arith.constant 0 : index
      %131 = vector.load %arg19[%c0_78, %c0_79] : memref<8x128xf32, #tpu.memory_space<vmem>>, vector<8x128xf32>
      tpu.vector_store %arg19[%c0_78, %c0_79], %130 {strides = array<i32>} : memref<8x128xf32, #tpu.memory_space<vmem>>, vector<8x128xf32>,
      %cst_80 = arith.constant 0.000000e+00 : f32
      %132 = vector.broadcast %cst_80 : f32 to vector<8x128xf32>
      %c0_81 = arith.constant 0 : index
      %c0_82 = arith.constant 0 : index
      %133 = vector.load %arg20[%c0_81, %c0_82] : memref<8x128xf32, #tpu.memory_space<vmem>>, vector<8x128xf32>
      tpu.vector_store %arg20[%c0_81, %c0_82], %132 {strides = array<i32>} : memref<8x128xf32, #tpu.memory_space<vmem>>, vector<8x128xf32>,
    } else {
    }
    %c0 = arith.constant 0 : index
    %c0_1 = arith.constant 0 : index
    %3 = vector.load %arg3[%c0, %c0_1] : memref<8x1xi32, #tpu.memory_space<vmem>>, vector<8x1xi32>
    %4 = vector.broadcast %arg0 : i32 to vector<8x1xi32>
    %5 = arith.cmpi slt, %4, %3 : vector<8x1xi32>
    %c7_i32 = arith.constant 7 : i32
    %6 = arith.subi %c7_i32, %arg0 : i32
    %7 = vector.broadcast %6 : i32 to vector<8x1xi32>
    %8 = arith.cmpi slt, %7, %3 : vector<8x1xi32>
    %c0_2 = arith.constant 0 : index
    %c0_3 = arith.constant 0 : index
    %c0_4 = arith.constant 0 : index
    %9 = vector.load %arg1[%c0_2, %c0_3, %c0_4] : memref<1x8x256xbf16, #tpu.memory_space<vmem>>, vector<1x8x256xbf16>
    %10 = vector.shape_cast %9 : vector<1x8x256xbf16> to vector<8x256xbf16>
    %c0_5 = arith.constant 0 : index
    %c0_6 = arith.constant 0 : index
    %11 = vector.load %arg4[%c0_5, %c0_6] : memref<256x512xbf16, #tpu.memory_space<vmem>>, vector<256x512xbf16>
    %cst = arith.constant dense<0.000000e+00> : vector<8x512xf32>
    %12 = tpu.matmul %10, %11, %cst {dimension_numbers = #tpu.dot_dimension_numbers<[1], [0], [0], [1], [0, 0, 1, 1], [], []>} : vector<8x256xbf16>, vector<256x512xbf16>, vector<8x512xf32> -> vector<8x512xf32>
    %c0_7 = arith.constant 0 : index
    %c0_8 = arith.constant 0 : index
    %13 = vector.load %arg15[%c0_7, %c0_8] : memref<8x128xf32, #tpu.memory_space<vmem>>, vector<8x128xf32>
    %14 = arith.truncf %13 : vector<8x128xf32> to vector<8x128xbf16>
    %c0_9 = arith.constant 0 : index
    %c0_10 = arith.constant 0 : index
    %15 = vector.load %arg5[%c0_9, %c0_10] : memref<128x512xbf16, #tpu.memory_space<vmem>>, vector<128x512xbf16>
    %cst_11 = arith.constant dense<0.000000e+00> : vector<8x512xf32>
    %16 = tpu.matmul %14, %15, %cst_11 {dimension_numbers = #tpu.dot_dimension_numbers<[1], [0], [0], [1], [0, 0, 1, 1], [], []>} : vector<8x128xbf16>, vector<128x512xbf16>, vector<8x512xf32> -> vector<8x512xf32>
    %17 = arith.addf %12, %16 : vector<8x512xf32>
    %c0_12 = arith.constant 0 : index
    %c0_13 = arith.constant 0 : index
    %18 = vector.load %arg6[%c0_12, %c0_13] : memref<1x512xf32, #tpu.memory_space<vmem>>, vector<1x512xf32>
    %19 = vector.broadcast %18 : vector<1x512xf32> to vector<8x512xf32>
    %20 = arith.addf %17, %19 : vector<8x512xf32>
    %c0_14 = arith.constant 0 : index
    %c0_15 = arith.constant 0 : index
    %c0_16 = arith.constant 0 : index
    %21 = vector.load %arg2[%c0_14, %c0_15, %c0_16] : memref<1x8x256xbf16, #tpu.memory_space<vmem>>, vector<1x8x256xbf16>
    %22 = vector.shape_cast %21 : vector<1x8x256xbf16> to vector<8x256xbf16>
    %c0_17 = arith.constant 0 : index
    %c0_18 = arith.constant 0 : index
    %23 = vector.load %arg7[%c0_17, %c0_18] : memref<256x512xbf16, #tpu.memory_space<vmem>>, vector<256x512xbf16>
    %cst_19 = arith.constant dense<0.000000e+00> : vector<8x512xf32>
    %24 = tpu.matmul %22, %23, %cst_19 {dimension_numbers = #tpu.dot_dimension_numbers<[1], [0], [0], [1], [0, 0, 1, 1], [], []>} : vector<8x256xbf16>, vector<256x512xbf16>, vector<8x512xf32> -> vector<8x512xf32>
    %c0_20 = arith.constant 0 : index
    %c0_21 = arith.constant 0 : index
    %25 = vector.load %arg17[%c0_20, %c0_21] : memref<8x128xf32, #tpu.memory_space<vmem>>, vector<8x128xf32>
    %26 = arith.truncf %25 : vector<8x128xf32> to vector<8x128xbf16>
    %c0_22 = arith.constant 0 : index
    %c0_23 = arith.constant 0 : index
    %27 = vector.load %arg8[%c0_22, %c0_23] : memref<128x512xbf16, #tpu.memory_space<vmem>>, vector<128x512xbf16>
    %cst_24 = arith.constant dense<0.000000e+00> : vector<8x512xf32>
    %28 = tpu.matmul %26, %27, %cst_24 {dimension_numbers = #tpu.dot_dimension_numbers<[1], [0], [0], [1], [0, 0, 1, 1], [], []>} : vector<8x128xbf16>, vector<128x512xbf16>, vector<8x512xf32> -> vector<8x512xf32>
    %29 = arith.addf %24, %28 : vector<8x512xf32>
    %c0_25 = arith.constant 0 : index
    %c0_26 = arith.constant 0 : index
    %30 = vector.load %arg9[%c0_25, %c0_26] : memref<1x512xf32, #tpu.memory_space<vmem>>, vector<1x512xf32>
    %31 = vector.broadcast %30 : vector<1x512xf32> to vector<8x512xf32>
    %32 = arith.addf %29, %31 : vector<8x512xf32>
    %c0_27 = arith.constant 0 : index
    %c0_28 = arith.constant 0 : index
    %33 = vector.load %arg16[%c0_27, %c0_28] : memref<8x128xf32, #tpu.memory_space<vmem>>, vector<8x128xf32>
    %34 = vector.extract_strided_slice %20 {offsets = [0, 0], sizes = [8, 128], strides = [1, 1]} : vector<8x512xf32> to vector<8x128xf32>
    %35 = arith.negf %34 : vector<8x128xf32>
    %36 = math.exp %35 : vector<8x128xf32>
    %cst_29 = arith.constant 1.000000e+00 : f32
    %37 = vector.broadcast %cst_29 : f32 to vector<8x128xf32>
    %38 = arith.addf %37, %36 : vector<8x128xf32>
    %39 = arith.divf %37, %38 : vector<8x128xf32>
    %40 = vector.extract_strided_slice %20 {offsets = [0, 128], sizes = [8, 128], strides = [1, 1]} : vector<8x512xf32> to vector<8x128xf32>
    %41 = arith.negf %40 : vector<8x128xf32>
    %42 = math.exp %41 : vector<8x128xf32>
    %cst_30 = arith.constant 1.000000e+00 : f32
    %43 = vector.broadcast %cst_30 : f32 to vector<8x128xf32>
    %44 = arith.addf %43, %42 : vector<8x128xf32>
    %45 = arith.divf %43, %44 : vector<8x128xf32>
    %46 = vector.extract_strided_slice %20 {offsets = [0, 256], sizes = [8, 128], strides = [1, 1]} : vector<8x512xf32> to vector<8x128xf32>
    %47 = math.tanh %46 : vector<8x128xf32>
    %48 = vector.extract_strided_slice %20 {offsets = [0, 384], sizes = [8, 128], strides = [1, 1]} : vector<8x512xf32> to vector<8x128xf32>
    %49 = arith.negf %48 : vector<8x128xf32>
    %50 = math.exp %49 : vector<8x128xf32>
    %cst_31 = arith.constant 1.000000e+00 : f32
    %51 = vector.broadcast %cst_31 : f32 to vector<8x128xf32>
    %52 = arith.addf %51, %50 : vector<8x128xf32>
    %53 = arith.divf %51, %52 : vector<8x128xf32>
    %54 = arith.mulf %45, %33 : vector<8x128xf32>
    %55 = arith.mulf %39, %47 : vector<8x128xf32>
    %56 = arith.addf %54, %55 : vector<8x128xf32>
    %57 = math.tanh %56 : vector<8x128xf32>
    %58 = arith.mulf %53, %57 : vector<8x128xf32>
    %c0_32 = arith.constant 0 : index
    %c0_33 = arith.constant 0 : index
    %59 = vector.load %arg18[%c0_32, %c0_33] : memref<8x128xf32, #tpu.memory_space<vmem>>, vector<8x128xf32>
    %60 = vector.extract_strided_slice %32 {offsets = [0, 0], sizes = [8, 128], strides = [1, 1]} : vector<8x512xf32> to vector<8x128xf32>
    %61 = arith.negf %60 : vector<8x128xf32>
    %62 = math.exp %61 : vector<8x128xf32>
    %cst_34 = arith.constant 1.000000e+00 : f32
    %63 = vector.broadcast %cst_34 : f32 to vector<8x128xf32>
    %64 = arith.addf %63, %62 : vector<8x128xf32>
    %65 = arith.divf %63, %64 : vector<8x128xf32>
    %66 = vector.extract_strided_slice %32 {offsets = [0, 128], sizes = [8, 128], strides = [1, 1]} : vector<8x512xf32> to vector<8x128xf32>
    %67 = arith.negf %66 : vector<8x128xf32>
    %68 = math.exp %67 : vector<8x128xf32>
    %cst_35 = arith.constant 1.000000e+00 : f32
    %69 = vector.broadcast %cst_35 : f32 to vector<8x128xf32>
    %70 = arith.addf %69, %68 : vector<8x128xf32>
    %71 = arith.divf %69, %70 : vector<8x128xf32>
    %72 = vector.extract_strided_slice %32 {offsets = [0, 256], sizes = [8, 128], strides = [1, 1]} : vector<8x512xf32> to vector<8x128xf32>
    %73 = math.tanh %72 : vector<8x128xf32>
    %74 = vector.extract_strided_slice %32 {offsets = [0, 384], sizes = [8, 128], strides = [1, 1]} : vector<8x512xf32> to vector<8x128xf32>
    %75 = arith.negf %74 : vector<8x128xf32>
    %76 = math.exp %75 : vector<8x128xf32>
    %cst_36 = arith.constant 1.000000e+00 : f32
    %77 = vector.broadcast %cst_36 : f32 to vector<8x128xf32>
    %78 = arith.addf %77, %76 : vector<8x128xf32>
    %79 = arith.divf %77, %78 : vector<8x128xf32>
    %80 = arith.mulf %71, %59 : vector<8x128xf32>
    %81 = arith.mulf %65, %73 : vector<8x128xf32>
    %82 = arith.addf %80, %81 : vector<8x128xf32>
    %83 = math.tanh %82 : vector<8x128xf32>
    %84 = arith.mulf %79, %83 : vector<8x128xf32>
    %c0_37 = arith.constant 0 : index
    %c0_38 = arith.constant 0 : index
    %85 = vector.load %arg19[%c0_37, %c0_38] : memref<8x128xf32, #tpu.memory_space<vmem>>, vector<8x128xf32>
    %cst_39 = arith.constant 0.000000e+00 : f32
    %86 = vector.shape_cast %5 : vector<8x1xi1> to vector<8x1xi1>
    %87 = vector.broadcast %86 : vector<8x1xi1> to vector<8x128xi1>
    %88 = vector.broadcast %cst_39 : f32 to vector<8x128xf32>
    %89 = arith.select %87, %58, %88 : vector<8x128xi1>, vector<8x128xf32>
    %90 = arith.addf %85, %89 : vector<8x128xf32>
    %c0_40 = arith.constant 0 : index
    %c0_41 = arith.constant 0 : index
    %91 = vector.load %arg19[%c0_40, %c0_41] : memref<8x128xf32, #tpu.memory_space<vmem>>, vector<8x128xf32>
    tpu.vector_store %arg19[%c0_40, %c0_41], %90 {strides = array<i32>} : memref<8x128xf32, #tpu.memory_space<vmem>>, vector<8x128xf32>,
    %c0_42 = arith.constant 0 : index
    %c0_43 = arith.constant 0 : index
    %92 = vector.load %arg20[%c0_42, %c0_43] : memref<8x128xf32, #tpu.memory_space<vmem>>, vector<8x128xf32>
    %cst_44 = arith.constant 0.000000e+00 : f32
    %93 = vector.shape_cast %8 : vector<8x1xi1> to vector<8x1xi1>
    %94 = vector.broadcast %93 : vector<8x1xi1> to vector<8x128xi1>
    %95 = vector.broadcast %cst_44 : f32 to vector<8x128xf32>
    %96 = arith.select %94, %84, %95 : vector<8x128xi1>, vector<8x128xf32>
    %97 = arith.addf %92, %96 : vector<8x128xf32>
    %c0_45 = arith.constant 0 : index
    %c0_46 = arith.constant 0 : index
    %98 = vector.load %arg20[%c0_45, %c0_46] : memref<8x128xf32, #tpu.memory_space<vmem>>, vector<8x128xf32>
    tpu.vector_store %arg20[%c0_45, %c0_46], %97 {strides = array<i32>} : memref<8x128xf32, #tpu.memory_space<vmem>>, vector<8x128xf32>,
    %c0_47 = arith.constant 0 : index
    %c0_48 = arith.constant 0 : index
    %99 = vector.load %arg15[%c0_47, %c0_48] : memref<8x128xf32, #tpu.memory_space<vmem>>, vector<8x128xf32>
    %100 = vector.shape_cast %5 : vector<8x1xi1> to vector<8x1xi1>
    %101 = vector.broadcast %100 : vector<8x1xi1> to vector<8x128xi1>
    %102 = arith.select %101, %58, %99 : vector<8x128xi1>, vector<8x128xf32>
    %c0_49 = arith.constant 0 : index
    %c0_50 = arith.constant 0 : index
    %103 = vector.load %arg15[%c0_49, %c0_50] : memref<8x128xf32, #tpu.memory_space<vmem>>, vector<8x128xf32>
    tpu.vector_store %arg15[%c0_49, %c0_50], %102 {strides = array<i32>} : memref<8x128xf32, #tpu.memory_space<vmem>>, vector<8x128xf32>,
    %c0_51 = arith.constant 0 : index
    %c0_52 = arith.constant 0 : index
    %104 = vector.load %arg16[%c0_51, %c0_52] : memref<8x128xf32, #tpu.memory_space<vmem>>, vector<8x128xf32>
    %105 = vector.shape_cast %5 : vector<8x1xi1> to vector<8x1xi1>
    %106 = vector.broadcast %105 : vector<8x1xi1> to vector<8x128xi1>
    %107 = arith.select %106, %56, %104 : vector<8x128xi1>, vector<8x128xf32>
    %c0_53 = arith.constant 0 : index
    %c0_54 = arith.constant 0 : index
    %108 = vector.load %arg16[%c0_53, %c0_54] : memref<8x128xf32, #tpu.memory_space<vmem>>, vector<8x128xf32>
    tpu.vector_store %arg16[%c0_53, %c0_54], %107 {strides = array<i32>} : memref<8x128xf32, #tpu.memory_space<vmem>>, vector<8x128xf32>,
    %c0_55 = arith.constant 0 : index
    %c0_56 = arith.constant 0 : index
    %109 = vector.load %arg17[%c0_55, %c0_56] : memref<8x128xf32, #tpu.memory_space<vmem>>, vector<8x128xf32>
    %110 = vector.shape_cast %8 : vector<8x1xi1> to vector<8x1xi1>
    %111 = vector.broadcast %110 : vector<8x1xi1> to vector<8x128xi1>
    %112 = arith.select %111, %84, %109 : vector<8x128xi1>, vector<8x128xf32>
    %c0_57 = arith.constant 0 : index
    %c0_58 = arith.constant 0 : index
    %113 = vector.load %arg17[%c0_57, %c0_58] : memref<8x128xf32, #tpu.memory_space<vmem>>, vector<8x128xf32>
    tpu.vector_store %arg17[%c0_57, %c0_58], %112 {strides = array<i32>} : memref<8x128xf32, #tpu.memory_space<vmem>>, vector<8x128xf32>,
    %c0_59 = arith.constant 0 : index
    %c0_60 = arith.constant 0 : index
    %114 = vector.load %arg18[%c0_59, %c0_60] : memref<8x128xf32, #tpu.memory_space<vmem>>, vector<8x128xf32>
    %115 = vector.shape_cast %8 : vector<8x1xi1> to vector<8x1xi1>
    %116 = vector.broadcast %115 : vector<8x1xi1> to vector<8x128xi1>
    %117 = arith.select %116, %82, %114 : vector<8x128xi1>, vector<8x128xf32>
    %c0_61 = arith.constant 0 : index
    %c0_62 = arith.constant 0 : index
    %118 = vector.load %arg18[%c0_61, %c0_62] : memref<8x128xf32, #tpu.memory_space<vmem>>, vector<8x128xf32>
    tpu.vector_store %arg18[%c0_61, %c0_62], %117 {strides = array<i32>} : memref<8x128xf32, #tpu.memory_space<vmem>>, vector<8x128xf32>,
    %c7_i32_63 = arith.constant 7 : i32
    %119 = arith.cmpi eq, %arg0, %c7_i32_63 : i32
    %120 = arith.extui %119 : i1 to i32
    %c0_i32_64 = arith.constant 0 : i32
    %121 = arith.cmpi ne, %120, %c0_i32_64 : i32
    scf.if %121 {
      %c0_65 = arith.constant 0 : index
      %c0_66 = arith.constant 0 : index
      %122 = vector.load %arg3[%c0_65, %c0_66] : memref<8x1xi32, #tpu.memory_space<vmem>>, vector<8x1xi32>
      %123 = arith.sitofp %122 : vector<8x1xi32> to vector<8x1xf32>
      %cst_67 = arith.constant 1.000000e+00 : f32
      %124 = vector.broadcast %cst_67 : f32 to vector<8x1xf32>
      %125 = arith.maximumf %123, %124 : vector<8x1xf32>
      %cst_68 = arith.constant 1.000000e+00 : f32
      %126 = vector.broadcast %cst_68 : f32 to vector<8x1xf32>
      %127 = arith.divf %126, %125 : vector<8x1xf32>
      %c0_69 = arith.constant 0 : index
      %c0_70 = arith.constant 0 : index
      %128 = vector.load %arg19[%c0_69, %c0_70] : memref<8x128xf32, #tpu.memory_space<vmem>>, vector<8x128xf32>
      %c0_71 = arith.constant 0 : index
      %c0_72 = arith.constant 0 : index
      %129 = vector.load %arg20[%c0_71, %c0_72] : memref<8x128xf32, #tpu.memory_space<vmem>>, vector<8x128xf32>
      %130 = tpu.concatenate %128, %129 in 1 : vector<8x128xf32>, vector<8x128xf32> -> vector<8x256xf32>
      %131 = vector.broadcast %127 : vector<8x1xf32> to vector<8x256xf32>
      %132 = arith.mulf %130, %131 : vector<8x256xf32>
      %133 = vector.extract_strided_slice %132 {offsets = [0, 0], sizes = [2, 256], strides = [1, 1]} : vector<8x256xf32> to vector<2x256xf32>
      %134 = vector.extract_strided_slice %132 {offsets = [2, 0], sizes = [2, 256], strides = [1, 1]} : vector<8x256xf32> to vector<2x256xf32>
      %135 = arith.subf %133, %134 : vector<2x256xf32>
      %136 = tpu.concatenate %133, %134, %135 in 1 : vector<2x256xf32>, vector<2x256xf32>, vector<2x256xf32> -> vector<2x768xf32>
      %c0_73 = arith.constant 0 : index
      %c0_74 = arith.constant 0 : index
      %137 = vector.load %arg10[%c0_73, %c0_74] : memref<768x32xf32, #tpu.memory_space<vmem>>, vector<768x32xf32>
      %cst_75 = arith.constant dense<0.000000e+00> : vector<2x32xf32>
      %138 = tpu.matmul %136, %137, %cst_75 {dimension_numbers = #tpu.dot_dimension_numbers<[1], [0], [0], [1], [0, 0, 1, 1], [], []>} : vector<2x768xf32>, vector<768x32xf32>, vector<2x32xf32> -> vector<2x32xf32>
      %c0_76 = arith.constant 0 : index
      %c0_77 = arith.constant 0 : index
      %139 = vector.load %arg11[%c0_76, %c0_77] : memref<1x32xf32, #tpu.memory_space<vmem>>, vector<1x32xf32>
      %140 = vector.broadcast %139 : vector<1x32xf32> to vector<2x32xf32>
      %141 = arith.addf %138, %140 : vector<2x32xf32>
      %142 = math.tanh %141 : vector<2x32xf32>
      %c0_78 = arith.constant 0 : index
      %c0_79 = arith.constant 0 : index
      %143 = vector.load %arg12[%c0_78, %c0_79] : memref<32x3xf32, #tpu.memory_space<vmem>>, vector<32x3xf32>
      %cst_80 = arith.constant dense<0.000000e+00> : vector<2x3xf32>
      %144 = tpu.matmul %142, %143, %cst_80 {dimension_numbers = #tpu.dot_dimension_numbers<[1], [0], [0], [1], [0, 0, 1, 1], [], []>} : vector<2x32xf32>, vector<32x3xf32>, vector<2x3xf32> -> vector<2x3xf32>
      %c0_81 = arith.constant 0 : index
      %c0_82 = arith.constant 0 : index
      %145 = vector.load %arg13[%c0_81, %c0_82] : memref<1x3xf32, #tpu.memory_space<vmem>>, vector<1x3xf32>
      %146 = vector.broadcast %145 : vector<1x3xf32> to vector<2x3xf32>
      %147 = arith.addf %144, %146 : vector<2x3xf32>
      %c0_83 = arith.constant 0 : index
      %c0_84 = arith.constant 0 : index
      %148 = vector.load %arg14[%c0_83, %c0_84] : memref<2x3xf32, #tpu.memory_space<vmem>>, vector<2x3xf32>
      tpu.vector_store %arg14[%c0_83, %c0_84], %147 {strides = array<i32>} : memref<2x3xf32, #tpu.memory_space<vmem>>, vector<2x3xf32>,
    } else {
    }
    return
  }
  func.func @transform_0(%arg0: i32) -> (i32, i32, i32) {
    %c0_i32 = arith.constant 0 : i32
    %c0_i32_0 = arith.constant 0 : i32
    %c0_i32_1 = arith.constant 0 : i32
    return %arg0, %c0_i32, %c0_i32_0 : i32, i32, i32
  }
  func.func @transform_1(%arg0: i32) -> (i32, i32, i32) {
    %c7_i32 = arith.constant 7 : i32
    %0 = arith.subi %c7_i32, %arg0 : i32
    %c0_i32 = arith.constant 0 : i32
    %c0_i32_0 = arith.constant 0 : i32
    %c0_i32_1 = arith.constant 0 : i32
    return %0, %c0_i32, %c0_i32_0 : i32, i32, i32
  }
  func.func @transform_2(%arg0: i32) -> (i32, i32) {
    %c0_i32 = arith.constant 0 : i32
    %c0_i32_0 = arith.constant 0 : i32
    %c0_i32_1 = arith.constant 0 : i32
    return %c0_i32, %c0_i32_0 : i32, i32
  }
  func.func @transform_3(%arg0: i32) -> (i32, i32) {
    %c0_i32 = arith.constant 0 : i32
    %c0_i32_0 = arith.constant 0 : i32
    %c0_i32_1 = arith.constant 0 : i32
    return %c0_i32, %c0_i32_0 : i32, i32
  }
  func.func @transform_4(%arg0: i32) -> (i32, i32) {
    %c0_i32 = arith.constant 0 : i32
    %c0_i32_0 = arith.constant 0 : i32
    %c0_i32_1 = arith.constant 0 : i32
    return %c0_i32, %c0_i32_0 : i32, i32
  }
  func.func @transform_5(%arg0: i32) -> (i32, i32) {
    %c0_i32 = arith.constant 0 : i32
    %c0_i32_0 = arith.constant 0 : i32
    %c0_i32_1 = arith.constant 0 : i32
    return %c0_i32, %c0_i32_0 : i32, i32
  }
  func.func @transform_6(%arg0: i32) -> (i32, i32) {
    %c0_i32 = arith.constant 0 : i32
    %c0_i32_0 = arith.constant 0 : i32
    %c0_i32_1 = arith.constant 0 : i32
    return %c0_i32, %c0_i32_0 : i32, i32
  }
  func.func @transform_7(%arg0: i32) -> (i32, i32) {
    %c0_i32 = arith.constant 0 : i32
    %c0_i32_0 = arith.constant 0 : i32
    %c0_i32_1 = arith.constant 0 : i32
    return %c0_i32, %c0_i32_0 : i32, i32
  }
  func.func @transform_8(%arg0: i32) -> (i32, i32) {
    %c0_i32 = arith.constant 0 : i32
    %c0_i32_0 = arith.constant 0 : i32
    %c0_i32_1 = arith.constant 0 : i32
    return %c0_i32, %c0_i32_0 : i32, i32
  }
  func.func @transform_9(%arg0: i32) -> (i32, i32) {
    %c0_i32 = arith.constant 0 : i32
    %c0_i32_0 = arith.constant 0 : i32
    %c0_i32_1 = arith.constant 0 : i32
    return %c0_i32, %c0_i32_0 : i32, i32
  }
  func.func @transform_10(%arg0: i32) -> (i32, i32) {
    %c0_i32 = arith.constant 0 : i32
    %c0_i32_0 = arith.constant 0 : i32
    %c0_i32_1 = arith.constant 0 : i32
    return %c0_i32, %c0_i32_0 : i32, i32
  }
  func.func @transform_11(%arg0: i32) -> (i32, i32) {
    %c0_i32 = arith.constant 0 : i32
    %c0_i32_0 = arith.constant 0 : i32
    %c0_i32_1 = arith.constant 0 : i32
    return %c0_i32, %c0_i32_0 : i32, i32
  }
  func.func @transform_12(%arg0: i32) -> (i32, i32) {
    %c0_i32 = arith.constant 0 : i32
    %c0_i32_0 = arith.constant 0 : i32
    %c0_i32_1 = arith.constant 0 : i32
    return %c0_i32, %c0_i32_0 : i32, i32
  }
  func.func @transform_13(%arg0: i32) -> (i32, i32) {
    %c0_i32 = arith.constant 0 : i32
    %c0_i32_0 = arith.constant 0 : i32
    %c0_i32_1 = arith.constant 0 : i32
    return %c0_i32, %c0_i32_0 : i32, i32
  }
}

module attributes {stable_mosaic.version = 11 : i64} {
  func.func @_bidir_layer_kernel(%arg0: i32, %arg1: i32, %arg2: memref<1x8x32xbf16, #tpu.memory_space<vmem>>, %arg3: memref<1x8x32xbf16, #tpu.memory_space<vmem>>, %arg4: memref<8x1xi32, #tpu.memory_space<vmem>>, %arg5: memref<32x512xbf16, #tpu.memory_space<vmem>>, %arg6: memref<128x512xbf16, #tpu.memory_space<vmem>>, %arg7: memref<1x512xf32, #tpu.memory_space<vmem>>, %arg8: memref<32x512xbf16, #tpu.memory_space<vmem>>, %arg9: memref<128x512xbf16, #tpu.memory_space<vmem>>, %arg10: memref<1x512xf32, #tpu.memory_space<vmem>>, %arg11: memref<1x8x128xbf16, #tpu.memory_space<vmem>>, %arg12: memref<1x8x128xbf16, #tpu.memory_space<vmem>>, %arg13: memref<8x128xf32, #tpu.memory_space<vmem>>, %arg14: memref<8x128xf32, #tpu.memory_space<vmem>>, %arg15: memref<8x128xf32, #tpu.memory_space<vmem>>, %arg16: memref<8x128xf32, #tpu.memory_space<vmem>>) attributes {dimension_semantics = [#tpu.dimension_semantics<parallel>, #tpu.dimension_semantics<arbitrary>], iteration_bounds = array<i64: 1, 8>, scalar_prefetch = 0 : i64, scratch_operands = 4 : i64, tpu.core_type = #tpu.core_type<tc>, window_params = [{transform_indices = @transform_0, window_bounds = array<i64: 1, 8, 32>}, {transform_indices = @transform_1, window_bounds = array<i64: 1, 8, 32>}, {transform_indices = @transform_2, window_bounds = array<i64: 8, 1>}, {pipeline_mode = #tpu.pipeline_mode<synchronous>, transform_indices = @transform_3, window_bounds = array<i64: 32, 512>}, {pipeline_mode = #tpu.pipeline_mode<synchronous>, transform_indices = @transform_4, window_bounds = array<i64: 128, 512>}, {pipeline_mode = #tpu.pipeline_mode<synchronous>, transform_indices = @transform_5, window_bounds = array<i64: 1, 512>}, {pipeline_mode = #tpu.pipeline_mode<synchronous>, transform_indices = @transform_6, window_bounds = array<i64: 32, 512>}, {pipeline_mode = #tpu.pipeline_mode<synchronous>, transform_indices = @transform_7, window_bounds = array<i64: 128, 512>}, {pipeline_mode = #tpu.pipeline_mode<synchronous>, transform_indices = @transform_8, window_bounds = array<i64: 1, 512>}, {transform_indices = @transform_9, window_bounds = array<i64: 1, 8, 128>}, {transform_indices = @transform_10, window_bounds = array<i64: 1, 8, 128>}]} {
    %c0_i32 = arith.constant 0 : i32
    %0 = arith.cmpi eq, %arg1, %c0_i32 : i32
    %1 = arith.extui %0 : i1 to i32
    %c0_i32_0 = arith.constant 0 : i32
    %2 = arith.cmpi ne, %1, %c0_i32_0 : i32
    scf.if %2 {
      %cst_61 = arith.constant 0.000000e+00 : f32
      %121 = vector.broadcast %cst_61 : f32 to vector<8x128xf32>
      %c0_62 = arith.constant 0 : index
      %c0_63 = arith.constant 0 : index
      %122 = vector.load %arg13[%c0_62, %c0_63] : memref<8x128xf32, #tpu.memory_space<vmem>>, vector<8x128xf32>
      tpu.vector_store %arg13[%c0_62, %c0_63], %121 {strides = array<i32>} : memref<8x128xf32, #tpu.memory_space<vmem>>, vector<8x128xf32>,
      %cst_64 = arith.constant 0.000000e+00 : f32
      %123 = vector.broadcast %cst_64 : f32 to vector<8x128xf32>
      %c0_65 = arith.constant 0 : index
      %c0_66 = arith.constant 0 : index
      %124 = vector.load %arg14[%c0_65, %c0_66] : memref<8x128xf32, #tpu.memory_space<vmem>>, vector<8x128xf32>
      tpu.vector_store %arg14[%c0_65, %c0_66], %123 {strides = array<i32>} : memref<8x128xf32, #tpu.memory_space<vmem>>, vector<8x128xf32>,
      %cst_67 = arith.constant 0.000000e+00 : f32
      %125 = vector.broadcast %cst_67 : f32 to vector<8x128xf32>
      %c0_68 = arith.constant 0 : index
      %c0_69 = arith.constant 0 : index
      %126 = vector.load %arg15[%c0_68, %c0_69] : memref<8x128xf32, #tpu.memory_space<vmem>>, vector<8x128xf32>
      tpu.vector_store %arg15[%c0_68, %c0_69], %125 {strides = array<i32>} : memref<8x128xf32, #tpu.memory_space<vmem>>, vector<8x128xf32>,
      %cst_70 = arith.constant 0.000000e+00 : f32
      %127 = vector.broadcast %cst_70 : f32 to vector<8x128xf32>
      %c0_71 = arith.constant 0 : index
      %c0_72 = arith.constant 0 : index
      %128 = vector.load %arg16[%c0_71, %c0_72] : memref<8x128xf32, #tpu.memory_space<vmem>>, vector<8x128xf32>
      tpu.vector_store %arg16[%c0_71, %c0_72], %127 {strides = array<i32>} : memref<8x128xf32, #tpu.memory_space<vmem>>, vector<8x128xf32>,
    } else {
    }
    %c0 = arith.constant 0 : index
    %c0_1 = arith.constant 0 : index
    %3 = vector.load %arg4[%c0, %c0_1] : memref<8x1xi32, #tpu.memory_space<vmem>>, vector<8x1xi32>
    %4 = vector.broadcast %arg1 : i32 to vector<8x1xi32>
    %5 = arith.cmpi slt, %4, %3 : vector<8x1xi32>
    %c7_i32 = arith.constant 7 : i32
    %6 = arith.subi %c7_i32, %arg1 : i32
    %7 = vector.broadcast %6 : i32 to vector<8x1xi32>
    %8 = arith.cmpi slt, %7, %3 : vector<8x1xi32>
    %c0_2 = arith.constant 0 : index
    %c0_3 = arith.constant 0 : index
    %c0_4 = arith.constant 0 : index
    %9 = vector.load %arg2[%c0_2, %c0_3, %c0_4] : memref<1x8x32xbf16, #tpu.memory_space<vmem>>, vector<1x8x32xbf16>
    %10 = vector.shape_cast %9 : vector<1x8x32xbf16> to vector<8x32xbf16>
    %c0_5 = arith.constant 0 : index
    %c0_6 = arith.constant 0 : index
    %11 = vector.load %arg5[%c0_5, %c0_6] : memref<32x512xbf16, #tpu.memory_space<vmem>>, vector<32x512xbf16>
    %cst = arith.constant dense<0.000000e+00> : vector<8x512xf32>
    %12 = tpu.matmul %10, %11, %cst {dimension_numbers = #tpu.dot_dimension_numbers<[1], [0], [0], [1], [0, 0, 1, 1], [], []>} : vector<8x32xbf16>, vector<32x512xbf16>, vector<8x512xf32> -> vector<8x512xf32>
    %c0_7 = arith.constant 0 : index
    %c0_8 = arith.constant 0 : index
    %13 = vector.load %arg13[%c0_7, %c0_8] : memref<8x128xf32, #tpu.memory_space<vmem>>, vector<8x128xf32>
    %14 = arith.truncf %13 : vector<8x128xf32> to vector<8x128xbf16>
    %c0_9 = arith.constant 0 : index
    %c0_10 = arith.constant 0 : index
    %15 = vector.load %arg6[%c0_9, %c0_10] : memref<128x512xbf16, #tpu.memory_space<vmem>>, vector<128x512xbf16>
    %cst_11 = arith.constant dense<0.000000e+00> : vector<8x512xf32>
    %16 = tpu.matmul %14, %15, %cst_11 {dimension_numbers = #tpu.dot_dimension_numbers<[1], [0], [0], [1], [0, 0, 1, 1], [], []>} : vector<8x128xbf16>, vector<128x512xbf16>, vector<8x512xf32> -> vector<8x512xf32>
    %17 = arith.addf %12, %16 : vector<8x512xf32>
    %c0_12 = arith.constant 0 : index
    %c0_13 = arith.constant 0 : index
    %18 = vector.load %arg7[%c0_12, %c0_13] : memref<1x512xf32, #tpu.memory_space<vmem>>, vector<1x512xf32>
    %19 = vector.broadcast %18 : vector<1x512xf32> to vector<8x512xf32>
    %20 = arith.addf %17, %19 : vector<8x512xf32>
    %c0_14 = arith.constant 0 : index
    %c0_15 = arith.constant 0 : index
    %c0_16 = arith.constant 0 : index
    %21 = vector.load %arg3[%c0_14, %c0_15, %c0_16] : memref<1x8x32xbf16, #tpu.memory_space<vmem>>, vector<1x8x32xbf16>
    %22 = vector.shape_cast %21 : vector<1x8x32xbf16> to vector<8x32xbf16>
    %c0_17 = arith.constant 0 : index
    %c0_18 = arith.constant 0 : index
    %23 = vector.load %arg8[%c0_17, %c0_18] : memref<32x512xbf16, #tpu.memory_space<vmem>>, vector<32x512xbf16>
    %cst_19 = arith.constant dense<0.000000e+00> : vector<8x512xf32>
    %24 = tpu.matmul %22, %23, %cst_19 {dimension_numbers = #tpu.dot_dimension_numbers<[1], [0], [0], [1], [0, 0, 1, 1], [], []>} : vector<8x32xbf16>, vector<32x512xbf16>, vector<8x512xf32> -> vector<8x512xf32>
    %c0_20 = arith.constant 0 : index
    %c0_21 = arith.constant 0 : index
    %25 = vector.load %arg15[%c0_20, %c0_21] : memref<8x128xf32, #tpu.memory_space<vmem>>, vector<8x128xf32>
    %26 = arith.truncf %25 : vector<8x128xf32> to vector<8x128xbf16>
    %c0_22 = arith.constant 0 : index
    %c0_23 = arith.constant 0 : index
    %27 = vector.load %arg9[%c0_22, %c0_23] : memref<128x512xbf16, #tpu.memory_space<vmem>>, vector<128x512xbf16>
    %cst_24 = arith.constant dense<0.000000e+00> : vector<8x512xf32>
    %28 = tpu.matmul %26, %27, %cst_24 {dimension_numbers = #tpu.dot_dimension_numbers<[1], [0], [0], [1], [0, 0, 1, 1], [], []>} : vector<8x128xbf16>, vector<128x512xbf16>, vector<8x512xf32> -> vector<8x512xf32>
    %29 = arith.addf %24, %28 : vector<8x512xf32>
    %c0_25 = arith.constant 0 : index
    %c0_26 = arith.constant 0 : index
    %30 = vector.load %arg10[%c0_25, %c0_26] : memref<1x512xf32, #tpu.memory_space<vmem>>, vector<1x512xf32>
    %31 = vector.broadcast %30 : vector<1x512xf32> to vector<8x512xf32>
    %32 = arith.addf %29, %31 : vector<8x512xf32>
    %c0_27 = arith.constant 0 : index
    %c0_28 = arith.constant 0 : index
    %33 = vector.load %arg14[%c0_27, %c0_28] : memref<8x128xf32, #tpu.memory_space<vmem>>, vector<8x128xf32>
    %34 = vector.extract_strided_slice %20 {offsets = [0, 0], sizes = [8, 128], strides = [1, 1]} : vector<8x512xf32> to vector<8x128xf32>
    %35 = arith.negf %34 : vector<8x128xf32>
    %36 = math.exp %35 : vector<8x128xf32>
    %cst_29 = arith.constant 1.000000e+00 : f32
    %37 = vector.broadcast %cst_29 : f32 to vector<8x128xf32>
    %38 = arith.addf %37, %36 : vector<8x128xf32>
    %39 = arith.divf %37, %38 : vector<8x128xf32>
    %40 = vector.extract_strided_slice %20 {offsets = [0, 128], sizes = [8, 128], strides = [1, 1]} : vector<8x512xf32> to vector<8x128xf32>
    %41 = arith.negf %40 : vector<8x128xf32>
    %42 = math.exp %41 : vector<8x128xf32>
    %cst_30 = arith.constant 1.000000e+00 : f32
    %43 = vector.broadcast %cst_30 : f32 to vector<8x128xf32>
    %44 = arith.addf %43, %42 : vector<8x128xf32>
    %45 = arith.divf %43, %44 : vector<8x128xf32>
    %46 = vector.extract_strided_slice %20 {offsets = [0, 256], sizes = [8, 128], strides = [1, 1]} : vector<8x512xf32> to vector<8x128xf32>
    %47 = math.tanh %46 : vector<8x128xf32>
    %48 = vector.extract_strided_slice %20 {offsets = [0, 384], sizes = [8, 128], strides = [1, 1]} : vector<8x512xf32> to vector<8x128xf32>
    %49 = arith.negf %48 : vector<8x128xf32>
    %50 = math.exp %49 : vector<8x128xf32>
    %cst_31 = arith.constant 1.000000e+00 : f32
    %51 = vector.broadcast %cst_31 : f32 to vector<8x128xf32>
    %52 = arith.addf %51, %50 : vector<8x128xf32>
    %53 = arith.divf %51, %52 : vector<8x128xf32>
    %54 = arith.mulf %45, %33 : vector<8x128xf32>
    %55 = arith.mulf %39, %47 : vector<8x128xf32>
    %56 = arith.addf %54, %55 : vector<8x128xf32>
    %57 = math.tanh %56 : vector<8x128xf32>
    %58 = arith.mulf %53, %57 : vector<8x128xf32>
    %c0_32 = arith.constant 0 : index
    %c0_33 = arith.constant 0 : index
    %59 = vector.load %arg16[%c0_32, %c0_33] : memref<8x128xf32, #tpu.memory_space<vmem>>, vector<8x128xf32>
    %60 = vector.extract_strided_slice %32 {offsets = [0, 0], sizes = [8, 128], strides = [1, 1]} : vector<8x512xf32> to vector<8x128xf32>
    %61 = arith.negf %60 : vector<8x128xf32>
    %62 = math.exp %61 : vector<8x128xf32>
    %cst_34 = arith.constant 1.000000e+00 : f32
    %63 = vector.broadcast %cst_34 : f32 to vector<8x128xf32>
    %64 = arith.addf %63, %62 : vector<8x128xf32>
    %65 = arith.divf %63, %64 : vector<8x128xf32>
    %66 = vector.extract_strided_slice %32 {offsets = [0, 128], sizes = [8, 128], strides = [1, 1]} : vector<8x512xf32> to vector<8x128xf32>
    %67 = arith.negf %66 : vector<8x128xf32>
    %68 = math.exp %67 : vector<8x128xf32>
    %cst_35 = arith.constant 1.000000e+00 : f32
    %69 = vector.broadcast %cst_35 : f32 to vector<8x128xf32>
    %70 = arith.addf %69, %68 : vector<8x128xf32>
    %71 = arith.divf %69, %70 : vector<8x128xf32>
    %72 = vector.extract_strided_slice %32 {offsets = [0, 256], sizes = [8, 128], strides = [1, 1]} : vector<8x512xf32> to vector<8x128xf32>
    %73 = math.tanh %72 : vector<8x128xf32>
    %74 = vector.extract_strided_slice %32 {offsets = [0, 384], sizes = [8, 128], strides = [1, 1]} : vector<8x512xf32> to vector<8x128xf32>
    %75 = arith.negf %74 : vector<8x128xf32>
    %76 = math.exp %75 : vector<8x128xf32>
    %cst_36 = arith.constant 1.000000e+00 : f32
    %77 = vector.broadcast %cst_36 : f32 to vector<8x128xf32>
    %78 = arith.addf %77, %76 : vector<8x128xf32>
    %79 = arith.divf %77, %78 : vector<8x128xf32>
    %80 = arith.mulf %71, %59 : vector<8x128xf32>
    %81 = arith.mulf %65, %73 : vector<8x128xf32>
    %82 = arith.addf %80, %81 : vector<8x128xf32>
    %83 = math.tanh %82 : vector<8x128xf32>
    %84 = arith.mulf %79, %83 : vector<8x128xf32>
    %cst_37 = arith.constant 0.000000e+00 : f32
    %85 = vector.shape_cast %5 : vector<8x1xi1> to vector<8x1xi1>
    %86 = vector.broadcast %85 : vector<8x1xi1> to vector<8x128xi1>
    %87 = vector.broadcast %cst_37 : f32 to vector<8x128xf32>
    %88 = arith.select %86, %58, %87 : vector<8x128xi1>, vector<8x128xf32>
    %89 = arith.truncf %88 : vector<8x128xf32> to vector<8x128xbf16>
    %c0_38 = arith.constant 0 : index
    %c0_39 = arith.constant 0 : index
    %c0_40 = arith.constant 0 : index
    %90 = vector.load %arg11[%c0_38, %c0_39, %c0_40] : memref<1x8x128xbf16, #tpu.memory_space<vmem>>, vector<1x8x128xbf16>
    %91 = vector.shape_cast %90 : vector<1x8x128xbf16> to vector<8x128xbf16>
    %92 = vector.shape_cast %89 : vector<8x128xbf16> to vector<1x8x128xbf16>
    tpu.vector_store %arg11[%c0_38, %c0_39, %c0_40], %92 {strides = array<i32>} : memref<1x8x128xbf16, #tpu.memory_space<vmem>>, vector<1x8x128xbf16>,
    %cst_41 = arith.constant 0.000000e+00 : f32
    %93 = vector.shape_cast %8 : vector<8x1xi1> to vector<8x1xi1>
    %94 = vector.broadcast %93 : vector<8x1xi1> to vector<8x128xi1>
    %95 = vector.broadcast %cst_41 : f32 to vector<8x128xf32>
    %96 = arith.select %94, %84, %95 : vector<8x128xi1>, vector<8x128xf32>
    %97 = arith.truncf %96 : vector<8x128xf32> to vector<8x128xbf16>
    %c0_42 = arith.constant 0 : index
    %c0_43 = arith.constant 0 : index
    %c0_44 = arith.constant 0 : index
    %98 = vector.load %arg12[%c0_42, %c0_43, %c0_44] : memref<1x8x128xbf16, #tpu.memory_space<vmem>>, vector<1x8x128xbf16>
    %99 = vector.shape_cast %98 : vector<1x8x128xbf16> to vector<8x128xbf16>
    %100 = vector.shape_cast %97 : vector<8x128xbf16> to vector<1x8x128xbf16>
    tpu.vector_store %arg12[%c0_42, %c0_43, %c0_44], %100 {strides = array<i32>} : memref<1x8x128xbf16, #tpu.memory_space<vmem>>, vector<1x8x128xbf16>,
    %c0_45 = arith.constant 0 : index
    %c0_46 = arith.constant 0 : index
    %101 = vector.load %arg13[%c0_45, %c0_46] : memref<8x128xf32, #tpu.memory_space<vmem>>, vector<8x128xf32>
    %102 = vector.shape_cast %5 : vector<8x1xi1> to vector<8x1xi1>
    %103 = vector.broadcast %102 : vector<8x1xi1> to vector<8x128xi1>
    %104 = arith.select %103, %58, %101 : vector<8x128xi1>, vector<8x128xf32>
    %c0_47 = arith.constant 0 : index
    %c0_48 = arith.constant 0 : index
    %105 = vector.load %arg13[%c0_47, %c0_48] : memref<8x128xf32, #tpu.memory_space<vmem>>, vector<8x128xf32>
    tpu.vector_store %arg13[%c0_47, %c0_48], %104 {strides = array<i32>} : memref<8x128xf32, #tpu.memory_space<vmem>>, vector<8x128xf32>,
    %c0_49 = arith.constant 0 : index
    %c0_50 = arith.constant 0 : index
    %106 = vector.load %arg14[%c0_49, %c0_50] : memref<8x128xf32, #tpu.memory_space<vmem>>, vector<8x128xf32>
    %107 = vector.shape_cast %5 : vector<8x1xi1> to vector<8x1xi1>
    %108 = vector.broadcast %107 : vector<8x1xi1> to vector<8x128xi1>
    %109 = arith.select %108, %56, %106 : vector<8x128xi1>, vector<8x128xf32>
    %c0_51 = arith.constant 0 : index
    %c0_52 = arith.constant 0 : index
    %110 = vector.load %arg14[%c0_51, %c0_52] : memref<8x128xf32, #tpu.memory_space<vmem>>, vector<8x128xf32>
    tpu.vector_store %arg14[%c0_51, %c0_52], %109 {strides = array<i32>} : memref<8x128xf32, #tpu.memory_space<vmem>>, vector<8x128xf32>,
    %c0_53 = arith.constant 0 : index
    %c0_54 = arith.constant 0 : index
    %111 = vector.load %arg15[%c0_53, %c0_54] : memref<8x128xf32, #tpu.memory_space<vmem>>, vector<8x128xf32>
    %112 = vector.shape_cast %8 : vector<8x1xi1> to vector<8x1xi1>
    %113 = vector.broadcast %112 : vector<8x1xi1> to vector<8x128xi1>
    %114 = arith.select %113, %84, %111 : vector<8x128xi1>, vector<8x128xf32>
    %c0_55 = arith.constant 0 : index
    %c0_56 = arith.constant 0 : index
    %115 = vector.load %arg15[%c0_55, %c0_56] : memref<8x128xf32, #tpu.memory_space<vmem>>, vector<8x128xf32>
    tpu.vector_store %arg15[%c0_55, %c0_56], %114 {strides = array<i32>} : memref<8x128xf32, #tpu.memory_space<vmem>>, vector<8x128xf32>,
    %c0_57 = arith.constant 0 : index
    %c0_58 = arith.constant 0 : index
    %116 = vector.load %arg16[%c0_57, %c0_58] : memref<8x128xf32, #tpu.memory_space<vmem>>, vector<8x128xf32>
    %117 = vector.shape_cast %8 : vector<8x1xi1> to vector<8x1xi1>
    %118 = vector.broadcast %117 : vector<8x1xi1> to vector<8x128xi1>
    %119 = arith.select %118, %82, %116 : vector<8x128xi1>, vector<8x128xf32>
    %c0_59 = arith.constant 0 : index
    %c0_60 = arith.constant 0 : index
    %120 = vector.load %arg16[%c0_59, %c0_60] : memref<8x128xf32, #tpu.memory_space<vmem>>, vector<8x128xf32>
    tpu.vector_store %arg16[%c0_59, %c0_60], %119 {strides = array<i32>} : memref<8x128xf32, #tpu.memory_space<vmem>>, vector<8x128xf32>,
    return
  }
  func.func @transform_0(%arg0: i32, %arg1: i32) -> (i32, i32, i32) {
    %c0_i32 = arith.constant 0 : i32
    %c0_i32_0 = arith.constant 0 : i32
    return %arg1, %arg0, %c0_i32 : i32, i32, i32
  }
  func.func @transform_1(%arg0: i32, %arg1: i32) -> (i32, i32, i32) {
    %c7_i32 = arith.constant 7 : i32
    %0 = arith.subi %c7_i32, %arg1 : i32
    %c0_i32 = arith.constant 0 : i32
    %c0_i32_0 = arith.constant 0 : i32
    return %0, %arg0, %c0_i32 : i32, i32, i32
  }
  func.func @transform_2(%arg0: i32, %arg1: i32) -> (i32, i32) {
    %c0_i32 = arith.constant 0 : i32
    %c0_i32_0 = arith.constant 0 : i32
    return %arg0, %c0_i32 : i32, i32
  }
  func.func @transform_3(%arg0: i32, %arg1: i32) -> (i32, i32) {
    %c0_i32 = arith.constant 0 : i32
    %c0_i32_0 = arith.constant 0 : i32
    %c0_i32_1 = arith.constant 0 : i32
    return %c0_i32, %c0_i32_0 : i32, i32
  }
  func.func @transform_4(%arg0: i32, %arg1: i32) -> (i32, i32) {
    %c0_i32 = arith.constant 0 : i32
    %c0_i32_0 = arith.constant 0 : i32
    %c0_i32_1 = arith.constant 0 : i32
    return %c0_i32, %c0_i32_0 : i32, i32
  }
  func.func @transform_5(%arg0: i32, %arg1: i32) -> (i32, i32) {
    %c0_i32 = arith.constant 0 : i32
    %c0_i32_0 = arith.constant 0 : i32
    %c0_i32_1 = arith.constant 0 : i32
    return %c0_i32, %c0_i32_0 : i32, i32
  }
  func.func @transform_6(%arg0: i32, %arg1: i32) -> (i32, i32) {
    %c0_i32 = arith.constant 0 : i32
    %c0_i32_0 = arith.constant 0 : i32
    %c0_i32_1 = arith.constant 0 : i32
    return %c0_i32, %c0_i32_0 : i32, i32
  }
  func.func @transform_7(%arg0: i32, %arg1: i32) -> (i32, i32) {
    %c0_i32 = arith.constant 0 : i32
    %c0_i32_0 = arith.constant 0 : i32
    %c0_i32_1 = arith.constant 0 : i32
    return %c0_i32, %c0_i32_0 : i32, i32
  }
  func.func @transform_8(%arg0: i32, %arg1: i32) -> (i32, i32) {
    %c0_i32 = arith.constant 0 : i32
    %c0_i32_0 = arith.constant 0 : i32
    %c0_i32_1 = arith.constant 0 : i32
    return %c0_i32, %c0_i32_0 : i32, i32
  }
  func.func @transform_9(%arg0: i32, %arg1: i32) -> (i32, i32, i32) {
    %c0_i32 = arith.constant 0 : i32
    %c0_i32_0 = arith.constant 0 : i32
    return %arg1, %arg0, %c0_i32 : i32, i32, i32
  }
  func.func @transform_10(%arg0: i32, %arg1: i32) -> (i32, i32, i32) {
    %c7_i32 = arith.constant 7 : i32
    %0 = arith.subi %c7_i32, %arg1 : i32
    %c0_i32 = arith.constant 0 : i32
    %c0_i32_0 = arith.constant 0 : i32
    return %0, %arg0, %c0_i32 : i32, i32, i32
  }
}

</mosaic_0001>

<llo_original>
// kernel: lstm_base_forward.2
$region0: #{lstm_base_forward.2}
  #allocation0 [shape = 'u32[]', space=smem, size = 0x4, offset = 0x4, fixed_abs, tag = 'smem constant byte address 0x4 - core index']
  #allocation1 [shape = 'u32[144,128]{1,0:T(1,128)}', space=vmem, size = 0x12000, scoped, tag = 'internal scratch']
  #allocation2 [shape = 'f32[8,128]{1,0:T(8,128)}', space=vmem, size = 0x1000, scoped, tag = 'scratch operand']
  #allocation3 [shape = 'f32[8,128]{1,0:T(8,128)}', space=vmem, size = 0x1000, scoped, tag = 'scratch operand']
  #allocation4 [shape = 'f32[8,128]{1,0:T(8,128)}', space=vmem, size = 0x1000, scoped, tag = 'scratch operand']
  #allocation5 [shape = 'f32[8,128]{1,0:T(8,128)}', space=vmem, size = 0x1000, scoped, tag = 'scratch operand']
  %s0 = inlined_call_operand.vmem [shape: bf16[8,8,32], index: 0, kind: input, shape index: {}, may-alias: {0,1}]
  %s1 = inlined_call_operand.vmem [shape: bf16[8,8,32], index: 1, kind: input, shape index: {}, may-alias: {0,1}]
  %s2 = inlined_call_operand.vmem [shape: s32[8,1], index: 2, kind: input, shape index: {}]
  %s3 = inlined_call_operand.vmem [shape: bf16[32,512], index: 3, kind: input, shape index: {}]
  %s4 = inlined_call_operand.vmem [shape: bf16[128,512], index: 4, kind: input, shape index: {}]
  %s5 = inlined_call_operand.vmem [shape: f32[1,512], index: 5, kind: input, shape index: {}]
  %s6 = inlined_call_operand.hbm [shape: bf16[32,512], index: 6, kind: input, shape index: {}]
  %s7 = inlined_call_operand.vmem [shape: bf16[128,512], index: 7, kind: input, shape index: {}]
  %s8 = inlined_call_operand.vmem [shape: f32[1,512], index: 8, kind: input, shape index: {}]
  %s9 = inlined_call_operand.vmem [shape: bf16[8,8,128], index: 9, kind: output, shape index: {0}]
  %s10 = inlined_call_operand.vmem [shape: bf16[8,8,128], index: 10, kind: output, shape index: {1}]
  %11 = xla_tuple %s9, %s10
  %s12 = sld [smem:[#allocation0]]
  $region85: #{lstm_base_forward.2} parent=0
    _
  %s14 = ssub.s32 1, %s12
  %s15 = scalar_select 0, %s14, %s12
  $region1: #{lstm_base_forward.2} parent=0
    #allocation6 [shape = 'u8[32768]{0}', space=vmem, size = 0x8000, scoped, tag = 'input window, operand 6, single buffered']
    #allocation7 [shape = 's32[2]{0}', space=sflag, size = 0x8, scoped, tag = 'scoped memory for lstm_base_forward.2']
    %16 = vsyncpa [#allocation7], 0
    loop: start=0, step=1, limit=10
    $region2: #{lstm_base_forward.2} parent=1 // loop_pre_header
      _
    $region3: #{lstm_base_forward.2} parent=1 // loop_header
      %s18 = sphi 0, %s22
      %p19 = scmp.ge.s32.totalorder %s18, 10
      %s25 = sphi 0, %s37
      %s26 = sphi 0, %s33
      %s27 = sphi 0, %s25
      %s28 = sphi 0, %s26
      %s29 = sphi 0, %s27
      %s30 = sphi 0, %s28
      %s42 = sphi 0, %s44
      %s45 = sphi 0, %s42
      %s46 = sphi 0, %s45
      %s62 = sphi 0, %s46
      %s72 = sphi 0, %s74
      %s75 = sphi 0, %s72
      %s76 = sphi 0, %s75
      %s92 = sphi 0, %s76
      %s98 = sphi 0, %s100
      %s101 = sphi 0, %s98
      %s102 = sphi 0, %s101
      %s118 = sphi 0, %s102
      %s122 = sphi 0, %s122
      %s124 = sphi 0, %s122
      %s125 = sphi 0, %s124
      %s139 = sphi 0, %s125
      %s143 = sphi 0, %s143
      %s145 = sphi 0, %s143
      %s146 = sphi 0, %s145
      %s160 = sphi 0, %s146
      %s164 = sphi 0, %s164
      %s166 = sphi 0, %s164
      %s167 = sphi 0, %s166
      %s181 = sphi 0, %s167
      %s185 = sphi 0, %s185
      %s187 = sphi 0, %s185
      %s188 = sphi 0, %s187
      %s202 = sphi 0, %s188
      %s206 = sphi 0, %s206
      %s208 = sphi 0, %s206
      %s209 = sphi 0, %s208
      %s223 = sphi 0, %s209
      %s227 = sphi 0, %s227
      %s229 = sphi 0, %s227
      %s230 = sphi 0, %s229
      %s244 = sphi 0, %s230
      %s252 = sphi 0, %s254
      %s255 = sphi 0, %s252
      %s256 = sphi 0, %s255
      %s272 = sphi 0, %s256
      %s282 = sphi 0, %s284
      %s285 = sphi 0, %s282
      %s286 = sphi 0, %s285
      %s302 = sphi 0, %s286
    $region4: #{lstm_base_forward.2} parent=1 // loop_header_branch
      %21 = sbr.rel (%p19) target = $region8
    $region5: #{lstm_base_forward.2} parent=1 // loop_body
      %s23 = ssub.s32 %s18, 1
      %s24 = ssub.s32 %s18, 2
      %s31 = sadd.s32 1, %s26
      %p32 = scmp.ge.s32.totalorder %s31, 8
      %s33 = scalar_select %p32, 0, %s31
      %s34 = sadd.s32 1, %s25
      %s35 = scalar_select %p32, %s34, %s25
      %p36 = scmp.ge.s32.totalorder %s35, 1
      %s37 = scalar_select %p36, 0, %s35
      %s38 = ssub.s32 %s26, %s33
      %s39 = ssub.s32 %s25, %s37
      %s40 = sor.u32 %s38, %s39
      %p41 = scmp.eq.s32.totalorder %s40, 0
      %s43 = sadd.s32 %s42, 1
      %s44 = scalar_select %p41, %s42, %s43
      %p47 = pneg %p41
      %p48 = scmp.eq.s32.totalorder %s18, 7
      %p49 = por %p47, %p48
      %p50 = scmp.ne.s32.totalorder %s42, %s45
      %p51 = scmp.eq.s32.totalorder %s18, 0
      %p52 = por %p50, %p51
      %p53 = scmp.ne.s32.totalorder %s42, %s45
      %p54 = scmp.eq.s32.totalorder %s23, 7
      %p55 = por %p53, %p54
      %p56 = scmp.ne.s32.totalorder %s45, %s46
      %p57 = scmp.eq.s32.totalorder %s23, 0
      %p58 = por %p56, %p57
      %p59 = scmp.ne.s32.totalorder %s45, %s46
      %p60 = scmp.eq.s32.totalorder %s24, 7
      %p61 = por %p59, %p60
      %p63 = scmp.ne.s32.totalorder %s46, %s62
      %p64 = scmp.eq.s32.totalorder %s24, 0
      %p65 = por %p63, %p64
      %s66 = ssub.s32 7, %s26
      %s67 = ssub.s32 7, %s33
      %s68 = ssub.s32 %s66, %s67
      %s69 = ssub.s32 %s25, %s37
      %s70 = sor.u32 %s68, %s69
      %p71 = scmp.eq.s32.totalorder %s70, 0
      %s73 = sadd.s32 %s72, 1
      %s74 = scalar_select %p71, %s72, %s73
      %p77 = pneg %p71
      %p78 = scmp.eq.s32.totalorder %s18, 7
      %p79 = por %p77, %p78
      %p80 = scmp.ne.s32.totalorder %s72, %s75
      %p81 = scmp.eq.s32.totalorder %s18, 0
      %p82 = por %p80, %p81
      %p83 = scmp.ne.s32.totalorder %s72, %s75
      %p84 = scmp.eq.s32.totalorder %s23, 7
      %p85 = por %p83, %p84
      %p86 = scmp.ne.s32.totalorder %s75, %s76
      %p87 = scmp.eq.s32.totalorder %s23, 0
      %p88 = por %p86, %p87
      %p89 = scmp.ne.s32.totalorder %s75, %s76
      %p90 = scmp.eq.s32.totalorder %s24, 7
      %p91 = por %p89, %p90
      %p93 = scmp.ne.s32.totalorder %s76, %s92
      %p94 = scmp.eq.s32.totalorder %s24, 0
      %p95 = por %p93, %p94
      %s96 = ssub.s32 %s25, %s37
      %p97 = scmp.eq.s32.totalorder %s96, 0
      %s99 = sadd.s32 %s98, 1
      %s100 = scalar_select %p97, %s98, %s99
      %p103 = pneg %p97
      %p104 = scmp.eq.s32.totalorder %s18, 7
      %p105 = por %p103, %p104
      %p106 = scmp.ne.s32.totalorder %s98, %s101
      %p107 = scmp.eq.s32.totalorder %s18, 0
      %p108 = por %p106, %p107
      %p109 = scmp.ne.s32.totalorder %s98, %s101
      %p110 = scmp.eq.s32.totalorder %s23, 7
      %p111 = por %p109, %p110
      %p112 = scmp.ne.s32.totalorder %s101, %s102
      %p113 = scmp.eq.s32.totalorder %s23, 0
      %p114 = por %p112, %p113
      %p115 = scmp.ne.s32.totalorder %s101, %s102
      %p116 = scmp.eq.s32.totalorder %s24, 7
      %p117 = por %p115, %p116
      %p119 = scmp.ne.s32.totalorder %s102, %s118
      %p120 = scmp.eq.s32.totalorder %s24, 0
      %p121 = por %p119, %p120
      %s123 = sadd.s32 %s122, 1
      %p126 = scmp.eq.s32.totalorder %s18, 7
      %p127 = scmp.ne.s32.totalorder %s122, %s124
      %p128 = scmp.eq.s32.totalorder %s18, 0
      %p129 = por %p127, %p128
      %p130 = scmp.ne.s32.totalorder %s122, %s124
      %p131 = scmp.eq.s32.totalorder %s23, 7
      %p132 = por %p130, %p131
      %p133 = scmp.ne.s32.totalorder %s124, %s125
      %p134 = scmp.eq.s32.totalorder %s23, 0
      %p135 = por %p133, %p134
      %p136 = scmp.ne.s32.totalorder %s124, %s125
      %p137 = scmp.eq.s32.totalorder %s24, 7
      %p138 = por %p136, %p137
      %p140 = scmp.ne.s32.totalorder %s125, %s139
      %p141 = scmp.eq.s32.totalorder %s24, 0
      %p142 = por %p140, %p141
      %s144 = sadd.s32 %s143, 1
      %p147 = scmp.eq.s32.totalorder %s18, 7
      %p148 = scmp.ne.s32.totalorder %s143, %s145
      %p149 = scmp.eq.s32.totalorder %s18, 0
      %p150 = por %p148, %p149
      %p151 = scmp.ne.s32.totalorder %s143, %s145
      %p152 = scmp.eq.s32.totalorder %s23, 7
      %p153 = por %p151, %p152
      %p154 = scmp.ne.s32.totalorder %s145, %s146
      %p155 = scmp.eq.s32.totalorder %s23, 0
      %p156 = por %p154, %p155
      %p157 = scmp.ne.s32.totalorder %s145, %s146
      %p158 = scmp.eq.s32.totalorder %s24, 7
      %p159 = por %p157, %p158
      %p161 = scmp.ne.s32.totalorder %s146, %s160
      %p162 = scmp.eq.s32.totalorder %s24, 0
      %p163 = por %p161, %p162
      %s165 = sadd.s32 %s164, 1
      %p168 = scmp.eq.s32.totalorder %s18, 7
      %p169 = scmp.ne.s32.totalorder %s164, %s166
      %p170 = scmp.eq.s32.totalorder %s18, 0
      %p171 = por %p169, %p170
      %p172 = scmp.ne.s32.totalorder %s164, %s166
      %p173 = scmp.eq.s32.totalorder %s23, 7
      %p174 = por %p172, %p173
      %p175 = scmp.ne.s32.totalorder %s166, %s167
      %p176 = scmp.eq.s32.totalorder %s23, 0
      %p177 = por %p175, %p176
      %p178 = scmp.ne.s32.totalorder %s166, %s167
      %p179 = scmp.eq.s32.totalorder %s24, 7
      %p180 = por %p178, %p179
      %p182 = scmp.ne.s32.totalorder %s167, %s181
      %p183 = scmp.eq.s32.totalorder %s24, 0
      %p184 = por %p182, %p183
      %s186 = sadd.s32 %s185, 1
      %p189 = scmp.eq.s32.totalorder %s18, 7
      %p190 = scmp.ne.s32.totalorder %s185, %s187
      %p191 = scmp.eq.s32.totalorder %s18, 0
      %p192 = por %p190, %p191
      %p193 = scmp.ne.s32.totalorder %s185, %s187
      %p194 = scmp.eq.s32.totalorder %s23, 7
      %p195 = por %p193, %p194
      %p196 = scmp.ne.s32.totalorder %s187, %s188
      %p197 = scmp.eq.s32.totalorder %s23, 0
      %p198 = por %p196, %p197
      %p199 = scmp.ne.s32.totalorder %s187, %s188
      %p200 = scmp.eq.s32.totalorder %s24, 7
      %p201 = por %p199, %p200
      %p203 = scmp.ne.s32.totalorder %s188, %s202
      %p204 = scmp.eq.s32.totalorder %s24, 0
      %p205 = por %p203, %p204
      %s207 = sadd.s32 %s206, 1
      %p210 = scmp.eq.s32.totalorder %s18, 7
      %p211 = scmp.ne.s32.totalorder %s206, %s208
      %p212 = scmp.eq.s32.totalorder %s18, 0
      %p213 = por %p211, %p212
      %p214 = scmp.ne.s32.totalorder %s206, %s208
      %p215 = scmp.eq.s32.totalorder %s23, 7
      %p216 = por %p214, %p215
      %p217 = scmp.ne.s32.totalorder %s208, %s209
      %p218 = scmp.eq.s32.totalorder %s23, 0
      %p219 = por %p217, %p218
      %p220 = scmp.ne.s32.totalorder %s208, %s209
      %p221 = scmp.eq.s32.totalorder %s24, 7
      %p222 = por %p220, %p221
      %p224 = scmp.ne.s32.totalorder %s209, %s223
      %p225 = scmp.eq.s32.totalorder %s24, 0
      %p226 = por %p224, %p225
      %s228 = sadd.s32 %s227, 1
      %p231 = scmp.eq.s32.totalorder %s18, 7
      %p232 = scmp.ne.s32.totalorder %s227, %s229
      %p233 = scmp.eq.s32.totalorder %s18, 0
      %p234 = por %p232, %p233
      %p235 = scmp.ne.s32.totalorder %s227, %s229
      %p236 = scmp.eq.s32.totalorder %s23, 7
      %p237 = por %p235, %p236
      %p238 = scmp.ne.s32.totalorder %s229, %s230
      %p239 = scmp.eq.s32.totalorder %s23, 0
      %p240 = por %p238, %p239
      %p241 = scmp.ne.s32.totalorder %s229, %s230
      %p242 = scmp.eq.s32.totalorder %s24, 7
      %p243 = por %p241, %p242
      %p245 = scmp.ne.s32.totalorder %s230, %s244
      %p246 = scmp.eq.s32.totalorder %s24, 0
      %p247 = por %p245, %p246
      %s248 = ssub.s32 %s26, %s33
      %s249 = ssub.s32 %s25, %s37
      %s250 = sor.u32 %s248, %s249
      %p251 = scmp.eq.s32.totalorder %s250, 0
      %s253 = sadd.s32 %s252, 1
      %s254 = scalar_select %p251, %s252, %s253
      %p257 = pneg %p251
      %p258 = scmp.eq.s32.totalorder %s18, 7
      %p259 = por %p257, %p258
      %p260 = scmp.ne.s32.totalorder %s252, %s255
      %p261 = scmp.eq.s32.totalorder %s18, 0
      %p262 = por %p260, %p261
      %p263 = scmp.ne.s32.totalorder %s252, %s255
      %p264 = scmp.eq.s32.totalorder %s23, 7
      %p265 = por %p263, %p264
      %p266 = scmp.ne.s32.totalorder %s255, %s256
      %p267 = scmp.eq.s32.totalorder %s23, 0
      %p268 = por %p266, %p267
      %p269 = scmp.ne.s32.totalorder %s255, %s256
      %p270 = scmp.eq.s32.totalorder %s24, 7
      %p271 = por %p269, %p270
      %p273 = scmp.ne.s32.totalorder %s256, %s272
      %p274 = scmp.eq.s32.totalorder %s24, 0
      %p275 = por %p273, %p274
      %s276 = ssub.s32 7, %s26
      %s277 = ssub.s32 7, %s33
      %s278 = ssub.s32 %s276, %s277
      %s279 = ssub.s32 %s25, %s37
      %s280 = sor.u32 %s278, %s279
      %p281 = scmp.eq.s32.totalorder %s280, 0
      %s283 = sadd.s32 %s282, 1
      %s284 = scalar_select %p281, %s282, %s283
      %p287 = pneg %p281
      %p288 = scmp.eq.s32.totalorder %s18, 7
      %p289 = por %p287, %p288
      %p290 = scmp.ne.s32.totalorder %s282, %s285
      %p291 = scmp.eq.s32.totalorder %s18, 0
      %p292 = por %p290, %p291
      %p293 = scmp.ne.s32.totalorder %s282, %s285
      %p294 = scmp.eq.s32.totalorder %s23, 7
      %p295 = por %p293, %p294
      %p296 = scmp.ne.s32.totalorder %s285, %s286
      %p297 = scmp.eq.s32.totalorder %s23, 0
      %p298 = por %p296, %p297
      %p299 = scmp.ne.s32.totalorder %s285, %s286
      %p300 = scmp.eq.s32.totalorder %s24, 7
      %p301 = por %p299, %p300
      %p303 = scmp.ne.s32.totalorder %s286, %s302
      %p304 = scmp.eq.s32.totalorder %s24, 0
      %p305 = por %p303, %p304
      %p306 = scmp.le.s32.totalorder 1, %s18
      %p307 = scmp.lt.s32.totalorder %s18, 9
      %p308 = pnand %p306, %p307
      %p309 = pneg %p308
      // Predicated region
      $region9: #{lstm_base_forward.2} parent=5 // pred_check
        _
      $region10: #{lstm_base_forward.2} parent=5 // pred_check_branch
        %311 = sbr.rel (%p308) target = $region12
      $region11: #{lstm_base_forward.2} parent=5 // pred_region
        %s312 = ssub.s32 %s18, 1
        // Predicated region
        $region13: #{lstm_base_forward.2} parent=11 // pred_check
          %p313 = pneg %p114
        $region14: #{lstm_base_forward.2} parent=11 // pred_check_branch
          %315 = sbr.rel (%p313) target = $region16
        $region15: #{lstm_base_forward.2} parent=11 // pred_region
          %p316 = scmp.lt.s32.totalorder %s27, 0
          %s317 = scalar_select %p316, %s27, 0
          %s318 = smul.addr %s317, 8
          %s319 = scalar_lea.vmem %s2, %s318
        $region16: #{lstm_base_forward.2} parent=11 // pred_fallthru
          _
        // Predicated region
        $region17: #{lstm_base_forward.2} parent=11 // pred_check
          %p320 = pneg %p135
        $region18: #{lstm_base_forward.2} parent=11 // pred_check_branch
          %322 = sbr.rel (%p320) target = $region20
        $region19: #{lstm_base_forward.2} parent=11 // pred_region
          _
        $region20: #{lstm_base_forward.2} parent=11 // pred_fallthru
          _
        // Predicated region
        $region21: #{lstm_base_forward.2} parent=11 // pred_check
          %p323 = pneg %p156
        $region22: #{lstm_base_forward.2} parent=11 // pred_check_branch
          %325 = sbr.rel (%p323) target = $region24
        $region23: #{lstm_base_forward.2} parent=11 // pred_region
          _
        $region24: #{lstm_base_forward.2} parent=11 // pred_fallthru
          _
        // Predicated region
        $region25: #{lstm_base_forward.2} parent=11 // pred_check
          %p326 = pneg %p177
        $region26: #{lstm_base_forward.2} parent=11 // pred_check_branch
          %328 = sbr.rel (%p326) target = $region28
        $region27: #{lstm_base_forward.2} parent=11 // pred_region
          _
        $region28: #{lstm_base_forward.2} parent=11 // pred_fallthru
          _
        // Predicated region
        $region29: #{lstm_base_forward.2} parent=11 // pred_check
          %p329 = pneg %p198
        $region30: #{lstm_base_forward.2} parent=11 // pred_check_branch
          %331 = sbr.rel (%p329) target = $region32
        $region31: #{lstm_base_forward.2} parent=11 // pred_region
          %s333 = ssub.s32 1024, 1024
          %334 = vsyncadd [#allocation7], %s333
          %s335 = sshll.u32 [#allocation6], 4
          %s336 = int_to_ptr.vmem [resolvable:$true] %s335
          %341 = dma.hbm_to_vmem [thread:$0]  %s6, 1024, %s336, [#allocation7], 256, 256, 16
        $region32: #{lstm_base_forward.2} parent=11 // pred_fallthru
          _
        // Predicated region
        $region33: #{lstm_base_forward.2} parent=11 // pred_check
          %p342 = pneg %p219
        $region34: #{lstm_base_forward.2} parent=11 // pred_check_branch
          %344 = sbr.rel (%p342) target = $region36
        $region35: #{lstm_base_forward.2} parent=11 // pred_region
          _
        $region36: #{lstm_base_forward.2} parent=11 // pred_fallthru
          _
        // Predicated region
        $region37: #{lstm_base_forward.2} parent=11 // pred_check
          %p345 = pneg %p240
        $region38: #{lstm_base_forward.2} parent=11 // pred_check_branch
          %347 = sbr.rel (%p345) target = $region40
        $region39: #{lstm_base_forward.2} parent=11 // pred_region
          _
        $region40: #{lstm_base_forward.2} parent=11 // pred_fallthru
          _
      $region12: #{lstm_base_forward.2} parent=5 // pred_fallthru
        _
      %p348 = scmp.lt.s32.totalorder %s18, 8
      // Predicated region
      $region41: #{lstm_base_forward.2} parent=5 // pred_check
        %p349 = pneg %p348
      $region42: #{lstm_base_forward.2} parent=5 // pred_check_branch
        %351 = sbr.rel (%p349) target = $region44
      $region43: #{lstm_base_forward.2} parent=5 // pred_region
        // Predicated region
        $region45: #{lstm_base_forward.2} parent=43 // pred_check
          %p352 = pneg %p52
        $region46: #{lstm_base_forward.2} parent=43 // pred_check_branch
          %354 = sbr.rel (%p352) target = $region48
        $region47: #{lstm_base_forward.2} parent=43 // pred_region
          %p355 = scmp.lt.s32.totalorder %s26, 7
          %s356 = scalar_select %p355, %s26, 7
          %p357 = scmp.lt.s32.totalorder %s25, 0
          %s358 = scalar_select %p357, %s25, 0
          %s359 = sadd.s32 %s358, %s356
          %s360 = smul.addr %s359, 4
          %s361 = scalar_lea.vmem %s0, %s360
        $region48: #{lstm_base_forward.2} parent=43 // pred_fallthru
          _
        // Predicated region
        $region49: #{lstm_base_forward.2} parent=43 // pred_check
          %p362 = pneg %p82
        $region50: #{lstm_base_forward.2} parent=43 // pred_check_branch
          %364 = sbr.rel (%p362) target = $region52
        $region51: #{lstm_base_forward.2} parent=43 // pred_region
          %s365 = ssub.s32 7, %s26
          %p366 = scmp.lt.s32.totalorder %s365, 7
          %s367 = scalar_select %p366, %s365, 7
          %p368 = scmp.lt.s32.totalorder %s25, 0
          %s369 = scalar_select %p368, %s25, 0
          %s370 = sadd.s32 %s369, %s367
          %s371 = smul.addr %s370, 4
          %s372 = scalar_lea.vmem %s1, %s371
          %s373 = ssub.s32 7, %s26
        $region52: #{lstm_base_forward.2} parent=43 // pred_fallthru
          _
      $region44: #{lstm_base_forward.2} parent=5 // pred_fallthru
        _
      %p374 = scmp.le.s32.totalorder 1, %s18
      %p375 = scmp.lt.s32.totalorder %s18, 9
      %p376 = pnand %p374, %p375
      %p377 = pneg %p376
      // Predicated region
      $region53: #{lstm_base_forward.2} parent=5 // pred_check
        _
      $region54: #{lstm_base_forward.2} parent=5 // pred_check_branch
        %379 = sbr.rel (%p376) target = $region56
      $region55: #{lstm_base_forward.2} parent=5 // pred_region
        %s380 = ssub.s32 %s18, 1
        // Predicated region
        $region57: #{lstm_base_forward.2} parent=55 // pred_check
          %p381 = pneg %p198
        $region58: #{lstm_base_forward.2} parent=55 // pred_check_branch
          %383 = sbr.rel (%p381) target = $region60
        $region59: #{lstm_base_forward.2} parent=55 // pred_region
          %384 = dma.done [#allocation7], 1024
        $region60: #{lstm_base_forward.2} parent=55 // pred_fallthru
          _
        %p385 = scmp.lt.s32.totalorder %s28, 7
        %s386 = scalar_select %p385, %s28, 7
        %p387 = scmp.lt.s32.totalorder %s27, 0
        %s388 = scalar_select %p387, %s27, 0
        %s389 = sadd.s32 %s388, %s386
        %s390 = smul.addr %s389, 4
        %s391 = scalar_lea.vmem %s0, %s390
        %p392 = pneg %p58
        %p393 = pneg %p55
        %s394 = ssub.s32 7, %s28
        %p395 = scmp.lt.s32.totalorder %s394, 7
        %s396 = scalar_select %p395, %s394, 7
        %p397 = scmp.lt.s32.totalorder %s27, 0
        %s398 = scalar_select %p397, %s27, 0
        %s399 = sadd.s32 %s398, %s396
        %s400 = smul.addr %s399, 4
        %s401 = scalar_lea.vmem %s1, %s400
        %p402 = pneg %p88
        %p403 = pneg %p85
        %p404 = scmp.lt.s32.totalorder %s27, 0
        %s405 = scalar_select %p404, %s27, 0
        %s406 = smul.addr %s405, 8
        %s407 = scalar_lea.vmem %s2, %s406
        %p408 = pneg %p114
        %p409 = pneg %p111
        %p410 = pneg %p135
        %p411 = pneg %p132
        %p412 = pneg %p156
        %p413 = pneg %p153
        %p414 = pneg %p177
        %p415 = pneg %p174
        %p416 = pneg %p198
        %p417 = pneg %p195
        %p418 = pneg %p219
        %p419 = pneg %p216
        %p420 = pneg %p240
        %p421 = pneg %p237
        %p422 = pneg %p268
        %p423 = pneg %p265
        %p424 = scmp.lt.s32.totalorder %s28, 7
        %s425 = scalar_select %p424, %s28, 7
        %p426 = scmp.lt.s32.totalorder %s27, 0
        %s427 = scalar_select %p426, %s27, 0
        %s428 = sadd.s32 %s427, %s425
        %s429 = smul.addr %s428, 4
        %s430 = scalar_lea.vmem %s9, %s429
        %p431 = pneg %p298
        %p432 = pneg %p295
        %s433 = ssub.s32 7, %s28
        %p434 = scmp.lt.s32.totalorder %s433, 7
        %s435 = scalar_select %p434, %s433, 7
        %p436 = scmp.lt.s32.totalorder %s27, 0
        %s437 = scalar_select %p436, %s27, 0
        %s438 = sadd.s32 %s437, %s435
        %s439 = smul.addr %s438, 4
        %s440 = scalar_lea.vmem %s10, %s439
        %p441 = scmp.lt.s32.totalorder %s28, 7
        %s442 = scalar_select %p441, %s28, 7
        %p443 = scmp.lt.s32.totalorder %s27, 0
        %s444 = scalar_select %p443, %s27, 0
        %s445 = sadd.s32 %s444, %s442
        %s446 = smul.addr %s445, 4
        %s447 = scalar_lea.vmem %s0, %s446
        %s448 = ssub.s32 7, %s28
        %p449 = scmp.lt.s32.totalorder %s448, 7
        %s450 = scalar_select %p449, %s448, 7
        %p451 = scmp.lt.s32.totalorder %s27, 0
        %s452 = scalar_select %p451, %s27, 0
        %s453 = sadd.s32 %s452, %s450
        %s454 = smul.addr %s453, 4
        %s455 = scalar_lea.vmem %s1, %s454
        %s456 = ssub.s32 7, %s28
        %p457 = scmp.lt.s32.totalorder %s27, 0
        %s458 = scalar_select %p457, %s27, 0
        %s459 = smul.addr %s458, 8
        %s460 = scalar_lea.vmem %s2, %s459
        %p461 = scmp.lt.s32.totalorder %s28, 7
        %s462 = scalar_select %p461, %s28, 7
        %p463 = scmp.lt.s32.totalorder %s27, 0
        %s464 = scalar_select %p463, %s27, 0
        %s465 = sadd.s32 %s464, %s462
        %s466 = smul.addr %s465, 4
        %s467 = scalar_lea.vmem %s9, %s466
        %s468 = ssub.s32 7, %s28
        %p469 = scmp.lt.s32.totalorder %s468, 7
        %s470 = scalar_select %p469, %s468, 7
        %p471 = scmp.lt.s32.totalorder %s27, 0
        %s472 = scalar_select %p471, %s27, 0
        %s473 = sadd.s32 %s472, %s470
        %s474 = smul.addr %s473, 4
        %s475 = scalar_lea.vmem %s10, %s474
        %s476 = ssub.s32 7, %s28
        %p478 = scmp.eq.s32.totalorder %s28, 0
        // Predicated region
        $region61: #{lstm_base_forward.2} parent=55 // pred_check
          %p479 = pneg %p478
        $region62: #{lstm_base_forward.2} parent=55 // pred_check_branch
          %481 = sbr.rel (%p479) target = $region64
        $region63: #{lstm_base_forward.2} parent=55 // pred_region
          %482 = vst [vmem:[#allocation2] sm:$0xff] 0.0
          %483 = vst [vmem:[#allocation3] sm:$0xff] 0.0
          %484 = vst [vmem:[#allocation4] sm:$0xff] 0.0
          %485 = vst [vmem:[#allocation5] sm:$0xff] 0.0
        $region64: #{lstm_base_forward.2} parent=55 // pred_fallthru
          _
        %v486 = vld [vmem:[%s460] sm:$0xff]
        %v487 = vstv %s28
        %vm488 = vcmp.lt.s32.totalorder %v487, %v486
        %s489 = ssub.s32 7, %s28
        %v490 = vstv %s489
        %vm491 = vcmp.lt.s32.totalorder %v490, %v486
        %v492 = vld [vmem:[%s447] sm:$0xf]
        %v493 = vld [vmem:[%s3] sm:$0xff]
        %v494 = vld [vmem:[%s3 + $0x8] sm:$0xff]
        %v495 = vld [vmem:[%s3 + $0x10] sm:$0xff]
        %v496 = vld [vmem:[%s3 + $0x18] sm:$0xff]
        %v497 = vld [vmem:[%s3 + $0x20] sm:$0xff]
        %v498 = vld [vmem:[%s3 + $0x28] sm:$0xff]
        %v499 = vld [vmem:[%s3 + $0x30] sm:$0xff]
        %v500 = vld [vmem:[%s3 + $0x38] sm:$0xff]
        %v501 = vld [vmem:[#allocation2] sm:$0xff]
        %v502 = vpack.c.bf16 %v501, %v501
        %v503 = vld [vmem:[%s4] sm:$0xff]
        %v504 = vld [vmem:[%s4 + $0x8] sm:$0xff]
        %v505 = vld [vmem:[%s4 + $0x10] sm:$0xff]
        %v506 = vld [vmem:[%s4 + $0x18] sm:$0xff]
        %v507 = vld [vmem:[%s4 + $0x20] sm:$0xff]
        %v508 = vld [vmem:[%s4 + $0x28] sm:$0xff]
        %v509 = vld [vmem:[%s4 + $0x30] sm:$0xff]
        %v510 = vld [vmem:[%s4 + $0x38] sm:$0xff]
        %v511 = vld [vmem:[%s4 + $0x40] sm:$0xff]
        %v512 = vld [vmem:[%s4 + $0x48] sm:$0xff]
        %v513 = vld [vmem:[%s4 + $0x50] sm:$0xff]
        %v514 = vld [vmem:[%s4 + $0x58] sm:$0xff]
        %v515 = vld [vmem:[%s4 + $0x60] sm:$0xff]
        %v516 = vld [vmem:[%s4 + $0x68] sm:$0xff]
        %v517 = vld [vmem:[%s4 + $0x70] sm:$0xff]
        %v518 = vld [vmem:[%s4 + $0x78] sm:$0xff]
        %v519 = vld [vmem:[%s4 + $0x80] sm:$0xff]
        %v520 = vld [vmem:[%s4 + $0x88] sm:$0xff]
        %v521 = vld [vmem:[%s4 + $0x90] sm:$0xff]
        %v522 = vld [vmem:[%s4 + $0x98] sm:$0xff]
        %v523 = vld [vmem:[%s4 + $0xa0] sm:$0xff]
        %v524 = vld [vmem:[%s4 + $0xa8] sm:$0xff]
        %v525 = vld [vmem:[%s4 + $0xb0] sm:$0xff]
        %v526 = vld [vmem:[%s4 + $0xb8] sm:$0xff]
        %v527 = vld [vmem:[%s4 + $0xc0] sm:$0xff]
        %v528 = vld [vmem:[%s4 + $0xc8] sm:$0xff]
        %v529 = vld [vmem:[%s4 + $0xd0] sm:$0xff]
        %v530 = vld [vmem:[%s4 + $0xd8] sm:$0xff]
        %v531 = vld [vmem:[%s4 + $0xe0] sm:$0xff]
        %v532 = vld [vmem:[%s4 + $0xe8] sm:$0xff]
        %v533 = vld [vmem:[%s4 + $0xf0] sm:$0xff]
        %v534 = vld [vmem:[%s4 + $0xf8] sm:$0xff]
        %v567 = vunpack.c.l.b16 %v503
        %v568 = vunpack.c.h.b16 %v503
        %v569 = vunpack.c.l.b16 %v504
        %v570 = vunpack.c.h.b16 %v504
        %v571 = vunpack.c.l.b16 %v505
        %v572 = vunpack.c.h.b16 %v505
        %v573 = vunpack.c.l.b16 %v506
        %v574 = vunpack.c.h.b16 %v506
        %v575 = vunpack.c.l.b16 %v507
        %v576 = vunpack.c.h.b16 %v507
        %v577 = vunpack.c.l.b16 %v508
        %v578 = vunpack.c.h.b16 %v508
        %v579 = vunpack.c.l.b16 %v509
        %v580 = vunpack.c.h.b16 %v509
        %v581 = vunpack.c.l.b16 %v510
        %v582 = vunpack.c.h.b16 %v510
        %v583 = vunpack.c.l.b16 %v511
        %v584 = vunpack.c.h.b16 %v511
        %v585 = vunpack.c.l.b16 %v512
        %v586 = vunpack.c.h.b16 %v512
        %v587 = vunpack.c.l.b16 %v513
        %v588 = vunpack.c.h.b16 %v513
        %v589 = vunpack.c.l.b16 %v514
        %v590 = vunpack.c.h.b16 %v514
        %v591 = vunpack.c.l.b16 %v515
        %v592 = vunpack.c.h.b16 %v515
        %v593 = vunpack.c.l.b16 %v516
        %v594 = vunpack.c.h.b16 %v516
        %v595 = vunpack.c.l.b16 %v517
        %v596 = vunpack.c.h.b16 %v517
        %v597 = vunpack.c.l.b16 %v518
        %v598 = vunpack.c.h.b16 %v518
        %v599 = vunpack.c.l.b16 %v519
        %v600 = vunpack.c.h.b16 %v519
        %v601 = vunpack.c.l.b16 %v520
        %v602 = vunpack.c.h.b16 %v520
        %v603 = vunpack.c.l.b16 %v521
        %v604 = vunpack.c.h.b16 %v521
        %v605 = vunpack.c.l.b16 %v522
        %v606 = vunpack.c.h.b16 %v522
        %v607 = vunpack.c.l.b16 %v523
        %v608 = vunpack.c.h.b16 %v523
        %v609 = vunpack.c.l.b16 %v524
        %v610 = vunpack.c.h.b16 %v524
        %v611 = vunpack.c.l.b16 %v525
        %v612 = vunpack.c.h.b16 %v525
        %v613 = vunpack.c.l.b16 %v526
        %v614 = vunpack.c.h.b16 %v526
        %v615 = vunpack.c.l.b16 %v527
        %v616 = vunpack.c.h.b16 %v527
        %v617 = vunpack.c.l.b16 %v528
        %v618 = vunpack.c.h.b16 %v528
        %v619 = vunpack.c.l.b16 %v529
        %v620 = vunpack.c.h.b16 %v529
        %v621 = vunpack.c.l.b16 %v530
        %v622 = vunpack.c.h.b16 %v530
        %v623 = vunpack.c.l.b16 %v531
        %v624 = vunpack.c.h.b16 %v531
        %v625 = vunpack.c.l.b16 %v532
        %v626 = vunpack.c.h.b16 %v532
        %v627 = vunpack.c.l.b16 %v533
        %v628 = vunpack.c.h.b16 %v533
        %v629 = vunpack.c.l.b16 %v534
        %v630 = vunpack.c.h.b16 %v534
        %v631 = vpack.c.b16 %v571, %v567
        %v632 = vpack.c.b16 %v572, %v568
        %v633 = vpack.c.b16 %v573, %v569
        %v634 = vpack.c.b16 %v574, %v570
        %v635 = vpack.c.b16 %v579, %v575
        %v636 = vpack.c.b16 %v580, %v576
        %v637 = vpack.c.b16 %v581, %v577
        %v638 = vpack.c.b16 %v582, %v578
        %v639 = vpack.c.b16 %v587, %v583
        %v640 = vpack.c.b16 %v588, %v584
        %v641 = vpack.c.b16 %v589, %v585
        %v642 = vpack.c.b16 %v590, %v586
        %v643 = vpack.c.b16 %v595, %v591
        %v644 = vpack.c.b16 %v596, %v592
        %v645 = vpack.c.b16 %v597, %v593
        %v646 = vpack.c.b16 %v598, %v594
        %v647 = vpack.c.b16 %v603, %v599
        %v648 = vpack.c.b16 %v604, %v600
        %v649 = vpack.c.b16 %v605, %v601
        %v650 = vpack.c.b16 %v606, %v602
        %v651 = vpack.c.b16 %v611, %v607
        %v652 = vpack.c.b16 %v612, %v608
        %v653 = vpack.c.b16 %v613, %v609
        %v654 = vpack.c.b16 %v614, %v610
        %v655 = vpack.c.b16 %v619, %v615
        %v656 = vpack.c.b16 %v620, %v616
        %v657 = vpack.c.b16 %v621, %v617
        %v658 = vpack.c.b16 %v622, %v618
        %v659 = vpack.c.b16 %v627, %v623
        %v660 = vpack.c.b16 %v628, %v624
        %v661 = vpack.c.b16 %v629, %v625
        %v662 = vpack.c.b16 %v630, %v626
        %695 = vmatprep.subr.bf16.mxu0 %v632
        %696 = vmatpush1.bf16.msra.mxu0 %v631
        %697 = vmatprep.subr.bf16.mxu0 %v636
        %698 = vmatpush1.bf16.msra.mxu0 %v635
        %699 = vmatprep.subr.bf16.mxu0 %v640
        %700 = vmatpush1.bf16.msra.mxu0 %v639
        %701 = vmatprep.subr.bf16.mxu0 %v644
        %702 = vmatpush1.bf16.msra.mxu0 %v643
        %703 = vmatprep.subr.bf16.mxu0 %v648
        %704 = vmatpush1.bf16.msra.mxu0 %v647
        %705 = vmatprep.subr.bf16.mxu0 %v652
        %706 = vmatpush1.bf16.msra.mxu0 %v651
        %707 = vmatprep.subr.bf16.mxu0 %v656
        %708 = vmatpush1.bf16.msra.mxu0 %v655
        %709 = vmatprep.subr.bf16.mxu0 %v660
        %710 = vmatpush1.bf16.msra.mxu0 %v659
        %711 = vmatprep.subr.bf16.mxu0 0
        %712 = vmatpush1.bf16.msra.mxu0 0
        %713 = vmatprep.subr.bf16.mxu0 0
        %714 = vmatpush1.bf16.msra.mxu0 0
        %715 = vmatprep.subr.bf16.mxu0 0
        %716 = vmatpush1.bf16.msra.mxu0 0
        %717 = vmatprep.subr.bf16.mxu0 0
        %718 = vmatpush1.bf16.msra.mxu0 0
        %719 = vmatprep.subr.bf16.mxu0 0
        %720 = vmatpush1.bf16.msra.mxu0 0
        %721 = vmatprep.subr.bf16.mxu0 0
        %722 = vmatpush1.bf16.msra.mxu0 0
        %723 = vmatprep.subr.bf16.mxu0 0
        %724 = vmatpush1.bf16.msra.mxu0 0
        %725 = vmatprep.subr.bf16.mxu0 0
        %726 = vmatpush1.bf16.msra.mxu0 0
        %727 = vmatprep.mubr.bf16.mxu0 0
        %728 = vmatmul.mubr.bf16.gmra.mrb[0].mxu0 %v502
        %v729 = vpop.f32.mrb[0].mxu0
        %v730 = vadd.f32 0.0, %v729
        %v731 = vpop.f32.mrb[0].mxu0
        %v732 = vadd.f32 0.0, %v731
        %v733 = vpop.f32.mrb[0].mxu0
        %v734 = vpop.f32.mrb[0].mxu0
        %735 = vdwg.mxu0
        %736 = vmatprep.subr.bf16.mxu0 %v634
        %737 = vmatpush1.bf16.msra.mxu0 %v633
        %738 = vmatprep.subr.bf16.mxu0 %v638
        %739 = vmatpush1.bf16.msra.mxu0 %v637
        %740 = vmatprep.subr.bf16.mxu0 %v642
        %741 = vmatpush1.bf16.msra.mxu0 %v641
        %742 = vmatprep.subr.bf16.mxu0 %v646
        %743 = vmatpush1.bf16.msra.mxu0 %v645
        %744 = vmatprep.subr.bf16.mxu0 %v650
        %745 = vmatpush1.bf16.msra.mxu0 %v649
        %746 = vmatprep.subr.bf16.mxu0 %v654
        %747 = vmatpush1.bf16.msra.mxu0 %v653
        %748 = vmatprep.subr.bf16.mxu0 %v658
        %749 = vmatpush1.bf16.msra.mxu0 %v657
        %750 = vmatprep.subr.bf16.mxu0 %v662
        %751 = vmatpush1.bf16.msra.mxu0 %v661
        %752 = vmatprep.subr.bf16.mxu0 0
        %753 = vmatpush1.bf16.msra.mxu0 0
        %754 = vmatprep.subr.bf16.mxu0 0
        %755 = vmatpush1.bf16.msra.mxu0 0
        %756 = vmatprep.subr.bf16.mxu0 0
        %757 = vmatpush1.bf16.msra.mxu0 0
        %758 = vmatprep.subr.bf16.mxu0 0
        %759 = vmatpush1.bf16.msra.mxu0 0
        %760 = vmatprep.subr.bf16.mxu0 0
        %761 = vmatpush1.bf16.msra.mxu0 0
        %762 = vmatprep.subr.bf16.mxu0 0
        %763 = vmatpush1.bf16.msra.mxu0 0
        %764 = vmatprep.subr.bf16.mxu0 0
        %765 = vmatpush1.bf16.msra.mxu0 0
        %766 = vmatprep.subr.bf16.mxu0 0
        %767 = vmatpush1.bf16.msra.mxu0 0
        %768 = vmatprep.mubr.bf16.mxu0 0
        %769 = vmatmul.mubr.bf16.gmra.mrb[0].mxu0 %v502
        %v770 = vpop.f32.mrb[0].mxu0
        %v771 = vadd.f32 0.0, %v770
        %v772 = vpop.f32.mrb[0].mxu0
        %v773 = vadd.f32 0.0, %v772
        %v774 = vpop.f32.mrb[0].mxu0
        %v775 = vpop.f32.mrb[0].mxu0
        %776 = vdwg.mxu0
        %v785 = vunpack.c.l.b16 %v493
        %v786 = vunpack.c.h.b16 %v493
        %v787 = vunpack.c.l.b16 %v494
        %v788 = vunpack.c.h.b16 %v494
        %v789 = vunpack.c.l.b16 %v495
        %v790 = vunpack.c.h.b16 %v495
        %v791 = vunpack.c.l.b16 %v496
        %v792 = vunpack.c.h.b16 %v496
        %v793 = vunpack.c.l.b16 %v497
        %v794 = vunpack.c.h.b16 %v497
        %v795 = vunpack.c.l.b16 %v498
        %v796 = vunpack.c.h.b16 %v498
        %v797 = vunpack.c.l.b16 %v499
        %v798 = vunpack.c.h.b16 %v499
        %v799 = vunpack.c.l.b16 %v500
        %v800 = vunpack.c.h.b16 %v500
        %v801 = vpack.c.b16 %v789, %v785
        %v802 = vpack.c.b16 %v790, %v786
        %v803 = vpack.c.b16 %v791, %v787
        %v804 = vpack.c.b16 %v792, %v788
        %v805 = vpack.c.b16 %v797, %v793
        %v806 = vpack.c.b16 %v798, %v794
        %v807 = vpack.c.b16 %v799, %v795
        %v808 = vpack.c.b16 %v800, %v796
        %vm817 = vcmask 261120
        %v819 = vsel %vm817, %v492, 0
        %821 = vmatprep.subr.bf16.mxu0 %v802
        %822 = vmatpush1.bf16.msra.mxu0 %v801
        %823 = vmatprep.subr.bf16.mxu0 %v806
        %824 = vmatpush1.bf16.msra.mxu0 %v805
        %825 = vmatprep.subr.bf16.mxu0 0
        %826 = vmatpush1.bf16.msra.mxu0 0
        %827 = vmatprep.subr.bf16.mxu0 0
        %828 = vmatpush1.bf16.msra.mxu0 0
        %829 = vmatprep.subr.bf16.mxu0 0
        %830 = vmatpush1.bf16.msra.mxu0 0
        %831 = vmatprep.subr.bf16.mxu0 0
        %832 = vmatpush1.bf16.msra.mxu0 0
        %833 = vmatprep.subr.bf16.mxu0 0
        %834 = vmatpush1.bf16.msra.mxu0 0
        %835 = vmatprep.subr.bf16.mxu0 0
        %836 = vmatpush1.bf16.msra.mxu0 0
        %837 = vmatprep.subr.bf16.mxu0 0
        %838 = vmatpush1.bf16.msra.mxu0 0
        %839 = vmatprep.subr.bf16.mxu0 0
        %840 = vmatpush1.bf16.msra.mxu0 0
        %841 = vmatprep.subr.bf16.mxu0 0
        %842 = vmatpush1.bf16.msra.mxu0 0
        %843 = vmatprep.subr.bf16.mxu0 0
        %844 = vmatpush1.bf16.msra.mxu0 0
        %845 = vmatprep.subr.bf16.mxu0 0
        %846 = vmatpush1.bf16.msra.mxu0 0
        %847 = vmatprep.subr.bf16.mxu0 0
        %848 = vmatpush1.bf16.msra.mxu0 0
        %849 = vmatprep.subr.bf16.mxu0 0
        %850 = vmatpush1.bf16.msra.mxu0 0
        %851 = vmatprep.subr.bf16.mxu0 0
        %852 = vmatpush1.bf16.msra.mxu0 0
        %853 = vmatprep.mubr.bf16.mxu0 0
        %854 = vmatmul.mubr.bf16.gmra.mrb[0].mxu0 %v819
        %v855 = vpop.f32.mrb[0].mxu0
        %v856 = vadd.f32 %v730, %v855
        %v857 = vpop.f32.mrb[0].mxu0
        %v858 = vadd.f32 %v732, %v857
        %v859 = vpop.f32.mrb[0].mxu0
        %v860 = vpop.f32.mrb[0].mxu0
        %861 = vdwg.mxu0
        %862 = vmatprep.subr.bf16.mxu0 %v804
        %863 = vmatpush1.bf16.msra.mxu0 %v803
        %864 = vmatprep.subr.bf16.mxu0 %v808
        %865 = vmatpush1.bf16.msra.mxu0 %v807
        %866 = vmatprep.subr.bf16.mxu0 0
        %867 = vmatpush1.bf16.msra.mxu0 0
        %868 = vmatprep.subr.bf16.mxu0 0
        %869 = vmatpush1.bf16.msra.mxu0 0
        %870 = vmatprep.subr.bf16.mxu0 0
        %871 = vmatpush1.bf16.msra.mxu0 0
        %872 = vmatprep.subr.bf16.mxu0 0
        %873 = vmatpush1.bf16.msra.mxu0 0
        %874 = vmatprep.subr.bf16.mxu0 0
        %875 = vmatpush1.bf16.msra.mxu0 0
        %876 = vmatprep.subr.bf16.mxu0 0
        %877 = vmatpush1.bf16.msra.mxu0 0
        %878 = vmatprep.subr.bf16.mxu0 0
        %879 = vmatpush1.bf16.msra.mxu0 0
        %880 = vmatprep.subr.bf16.mxu0 0
        %881 = vmatpush1.bf16.msra.mxu0 0
        %882 = vmatprep.subr.bf16.mxu0 0
        %883 = vmatpush1.bf16.msra.mxu0 0
        %884 = vmatprep.subr.bf16.mxu0 0
        %885 = vmatpush1.bf16.msra.mxu0 0
        %886 = vmatprep.subr.bf16.mxu0 0
        %887 = vmatpush1.bf16.msra.mxu0 0
        %888 = vmatprep.subr.bf16.mxu0 0
        %889 = vmatpush1.bf16.msra.mxu0 0
        %890 = vmatprep.subr.bf16.mxu0 0
        %891 = vmatpush1.bf16.msra.mxu0 0
        %892 = vmatprep.subr.bf16.mxu0 0
        %893 = vmatpush1.bf16.msra.mxu0 0
        %894 = vmatprep.mubr.bf16.mxu0 0
        %895 = vmatmul.mubr.bf16.gmra.mrb[0].mxu0 %v819
        %v896 = vpop.f32.mrb[0].mxu0
        %v897 = vadd.f32 %v771, %v896
        %v898 = vpop.f32.mrb[0].mxu0
        %v899 = vadd.f32 %v773, %v898
        %v900 = vpop.f32.mrb[0].mxu0
        %v901 = vpop.f32.mrb[0].mxu0
        %902 = vdwg.mxu0
        %v903 = vld [vmem:[%s5] sm:$0xf]
        %v905 = vlaneseq
        %v906 = vshrl.u32 %v905, 7
        %v907 = vsub.s32 0, %v906
        %v908 = vrot.slane %v903, %v907
        %v909 = vlaneseq
        %v910 = vshrl.u32 %v909, 7
        %v911 = vsub.s32 1, %v910
        %v912 = vrot.slane %v903, %v911
        %v913 = vlaneseq
        %v914 = vshrl.u32 %v913, 7
        %v915 = vsub.s32 2, %v914
        %v916 = vrot.slane %v903, %v915
        %v917 = vlaneseq
        %v918 = vshrl.u32 %v917, 7
        %v919 = vsub.s32 3, %v918
        %v920 = vrot.slane %v903, %v919
        %v925 = vadd.f32 %v856, %v908
        %v926 = vadd.f32 %v858, %v912
        %v927 = vadd.f32 %v897, %v916
        %v928 = vadd.f32 %v899, %v920
        %v929 = vld [vmem:[%s455] sm:$0xf]
        %v930 = vld [vmem:[#allocation6] sm:$0xff]
        %v931 = vld [vmem:[#allocation6 + $0x8] sm:$0xff]
        %v932 = vld [vmem:[#allocation6 + $0x10] sm:$0xff]
        %v933 = vld [vmem:[#allocation6 + $0x18] sm:$0xff]
        %v934 = vld [vmem:[#allocation6 + $0x20] sm:$0xff]
        %v935 = vld [vmem:[#allocation6 + $0x28] sm:$0xff]
        %v936 = vld [vmem:[#allocation6 + $0x30] sm:$0xff]
        %v937 = vld [vmem:[#allocation6 + $0x38] sm:$0xff]
        %v938 = vld [vmem:[#allocation4] sm:$0xff]
        %v939 = vpack.c.bf16 %v938, %v938
        %v940 = vld [vmem:[%s7] sm:$0xff]
        %v941 = vld [vmem:[%s7 + $0x8] sm:$0xff]
        %v942 = vld [vmem:[%s7 + $0x10] sm:$0xff]
        %v943 = vld [vmem:[%s7 + $0x18] sm:$0xff]
        %v944 = vld [vmem:[%s7 + $0x20] sm:$0xff]
        %v945 = vld [vmem:[%s7 + $0x28] sm:$0xff]
        %v946 = vld [vmem:[%s7 + $0x30] sm:$0xff]
        %v947 = vld [vmem:[%s7 + $0x38] sm:$0xff]
        %v948 = vld [vmem:[%s7 + $0x40] sm:$0xff]
        %v949 = vld [vmem:[%s7 + $0x48] sm:$0xff]
        %v950 = vld [vmem:[%s7 + $0x50] sm:$0xff]
        %v951 = vld [vmem:[%s7 + $0x58] sm:$0xff]
        %v952 = vld [vmem:[%s7 + $0x60] sm:$0xff]
        %v953 = vld [vmem:[%s7 + $0x68] sm:$0xff]
        %v954 = vld [vmem:[%s7 + $0x70] sm:$0xff]
        %v955 = vld [vmem:[%s7 + $0x78] sm:$0xff]
        %v956 = vld [vmem:[%s7 + $0x80] sm:$0xff]
        %v957 = vld [vmem:[%s7 + $0x88] sm:$0xff]
        %v958 = vld [vmem:[%s7 + $0x90] sm:$0xff]
        %v959 = vld [vmem:[%s7 + $0x98] sm:$0xff]
        %v960 = vld [vmem:[%s7 + $0xa0] sm:$0xff]
        %v961 = vld [vmem:[%s7 + $0xa8] sm:$0xff]
        %v962 = vld [vmem:[%s7 + $0xb0] sm:$0xff]
        %v963 = vld [vmem:[%s7 + $0xb8] sm:$0xff]
        %v964 = vld [vmem:[%s7 + $0xc0] sm:$0xff]
        %v965 = vld [vmem:[%s7 + $0xc8] sm:$0xff]
        %v966 = vld [vmem:[%s7 + $0xd0] sm:$0xff]
        %v967 = vld [vmem:[%s7 + $0xd8] sm:$0xff]
        %v968 = vld [vmem:[%s7 + $0xe0] sm:$0xff]
        %v969 = vld [vmem:[%s7 + $0xe8] sm:$0xff]
        %v970 = vld [vmem:[%s7 + $0xf0] sm:$0xff]
        %v971 = vld [vmem:[%s7 + $0xf8] sm:$0xff]
        %v1004 = vunpack.c.l.b16 %v940
        %v1005 = vunpack.c.h.b16 %v940
        %v1006 = vunpack.c.l.b16 %v941
        %v1007 = vunpack.c.h.b16 %v941
        %v1008 = vunpack.c.l.b16 %v942
        %v1009 = vunpack.c.h.b16 %v942
        %v1010 = vunpack.c.l.b16 %v943
        %v1011 = vunpack.c.h.b16 %v943
        %v1012 = vunpack.c.l.b16 %v944
        %v1013 = vunpack.c.h.b16 %v944
        %v1014 = vunpack.c.l.b16 %v945
        %v1015 = vunpack.c.h.b16 %v945
        %v1016 = vunpack.c.l.b16 %v946
        %v1017 = vunpack.c.h.b16 %v946
        %v1018 = vunpack.c.l.b16 %v947
        %v1019 = vunpack.c.h.b16 %v947
        %v1020 = vunpack.c.l.b16 %v948
        %v1021 = vunpack.c.h.b16 %v948
        %v1022 = vunpack.c.l.b16 %v949
        %v1023 = vunpack.c.h.b16 %v949
        %v1024 = vunpack.c.l.b16 %v950
        %v1025 = vunpack.c.h.b16 %v950
        %v1026 = vunpack.c.l.b16 %v951
        %v1027 = vunpack.c.h.b16 %v951
        %v1028 = vunpack.c.l.b16 %v952
        %v1029 = vunpack.c.h.b16 %v952
        %v1030 = vunpack.c.l.b16 %v953
        %v1031 = vunpack.c.h.b16 %v953
        %v1032 = vunpack.c.l.b16 %v954
        %v1033 = vunpack.c.h.b16 %v954
        %v1034 = vunpack.c.l.b16 %v955
        %v1035 = vunpack.c.h.b16 %v955
        %v1036 = vunpack.c.l.b16 %v956
        %v1037 = vunpack.c.h.b16 %v956
        %v1038 = vunpack.c.l.b16 %v957
        %v1039 = vunpack.c.h.b16 %v957
        %v1040 = vunpack.c.l.b16 %v958
        %v1041 = vunpack.c.h.b16 %v958
        %v1042 = vunpack.c.l.b16 %v959
        %v1043 = vunpack.c.h.b16 %v959
        %v1044 = vunpack.c.l.b16 %v960
        %v1045 = vunpack.c.h.b16 %v960
        %v1046 = vunpack.c.l.b16 %v961
        %v1047 = vunpack.c.h.b16 %v961
        %v1048 = vunpack.c.l.b16 %v962
        %v1049 = vunpack.c.h.b16 %v962
        %v1050 = vunpack.c.l.b16 %v963
        %v1051 = vunpack.c.h.b16 %v963
        %v1052 = vunpack.c.l.b16 %v964
        %v1053 = vunpack.c.h.b16 %v964
        %v1054 = vunpack.c.l.b16 %v965
        %v1055 = vunpack.c.h.b16 %v965
        %v1056 = vunpack.c.l.b16 %v966
        %v1057 = vunpack.c.h.b16 %v966
        %v1058 = vunpack.c.l.b16 %v967
        %v1059 = vunpack.c.h.b16 %v967
        %v1060 = vunpack.c.l.b16 %v968
        %v1061 = vunpack.c.h.b16 %v968
        %v1062 = vunpack.c.l.b16 %v969
        %v1063 = vunpack.c.h.b16 %v969
        %v1064 = vunpack.c.l.b16 %v970
        %v1065 = vunpack.c.h.b16 %v970
        %v1066 = vunpack.c.l.b16 %v971
        %v1067 = vunpack.c.h.b16 %v971
        %v1068 = vpack.c.b16 %v1008, %v1004
        %v1069 = vpack.c.b16 %v1009, %v1005
        %v1070 = vpack.c.b16 %v1010, %v1006
        %v1071 = vpack.c.b16 %v1011, %v1007
        %v1072 = vpack.c.b16 %v1016, %v1012
        %v1073 = vpack.c.b16 %v1017, %v1013
        %v1074 = vpack.c.b16 %v1018, %v1014
        %v1075 = vpack.c.b16 %v1019, %v1015
        %v1076 = vpack.c.b16 %v1024, %v1020
        %v1077 = vpack.c.b16 %v1025, %v1021
        %v1078 = vpack.c.b16 %v1026, %v1022
        %v1079 = vpack.c.b16 %v1027, %v1023
        %v1080 = vpack.c.b16 %v1032, %v1028
        %v1081 = vpack.c.b16 %v1033, %v1029
        %v1082 = vpack.c.b16 %v1034, %v1030
        %v1083 = vpack.c.b16 %v1035, %v1031
        %v1084 = vpack.c.b16 %v1040, %v1036
        %v1085 = vpack.c.b16 %v1041, %v1037
        %v1086 = vpack.c.b16 %v1042, %v1038
        %v1087 = vpack.c.b16 %v1043, %v1039
        %v1088 = vpack.c.b16 %v1048, %v1044
        %v1089 = vpack.c.b16 %v1049, %v1045
        %v1090 = vpack.c.b16 %v1050, %v1046
        %v1091 = vpack.c.b16 %v1051, %v1047
        %v1092 = vpack.c.b16 %v1056, %v1052
        %v1093 = vpack.c.b16 %v1057, %v1053
        %v1094 = vpack.c.b16 %v1058, %v1054
        %v1095 = vpack.c.b16 %v1059, %v1055
        %v1096 = vpack.c.b16 %v1064, %v1060
        %v1097 = vpack.c.b16 %v1065, %v1061
        %v1098 = vpack.c.b16 %v1066, %v1062
        %v1099 = vpack.c.b16 %v1067, %v1063
        %1132 = vmatprep.subr.bf16.mxu0 %v1069
        %1133 = vmatpush1.bf16.msra.mxu0 %v1068
        %1134 = vmatprep.subr.bf16.mxu0 %v1073
        %1135 = vmatpush1.bf16.msra.mxu0 %v1072
        %1136 = vmatprep.subr.bf16.mxu0 %v1077
        %1137 = vmatpush1.bf16.msra.mxu0 %v1076
        %1138 = vmatprep.subr.bf16.mxu0 %v1081
        %1139 = vmatpush1.bf16.msra.mxu0 %v1080
        %1140 = vmatprep.subr.bf16.mxu0 %v1085
        %1141 = vmatpush1.bf16.msra.mxu0 %v1084
        %1142 = vmatprep.subr.bf16.mxu0 %v1089
        %1143 = vmatpush1.bf16.msra.mxu0 %v1088
        %1144 = vmatprep.subr.bf16.mxu0 %v1093
        %1145 = vmatpush1.bf16.msra.mxu0 %v1092
        %1146 = vmatprep.subr.bf16.mxu0 %v1097
        %1147 = vmatpush1.bf16.msra.mxu0 %v1096
        %1148 = vmatprep.subr.bf16.mxu0 0
        %1149 = vmatpush1.bf16.msra.mxu0 0
        %1150 = vmatprep.subr.bf16.mxu0 0
        %1151 = vmatpush1.bf16.msra.mxu0 0
        %1152 = vmatprep.subr.bf16.mxu0 0
        %1153 = vmatpush1.bf16.msra.mxu0 0
        %1154 = vmatprep.subr.bf16.mxu0 0
        %1155 = vmatpush1.bf16.msra.mxu0 0
        %1156 = vmatprep.subr.bf16.mxu0 0
        %1157 = vmatpush1.bf16.msra.mxu0 0
        %1158 = vmatprep.subr.bf16.mxu0 0
        %1159 = vmatpush1.bf16.msra.mxu0 0
        %1160 = vmatprep.subr.bf16.mxu0 0
        %1161 = vmatpush1.bf16.msra.mxu0 0
        %1162 = vmatprep.subr.bf16.mxu0 0
        %1163 = vmatpush1.bf16.msra.mxu0 0
        %1164 = vmatprep.mubr.bf16.mxu0 0
        %1165 = vmatmul.mubr.bf16.gmra.mrb[0].mxu0 %v939
        %v1166 = vpop.f32.mrb[0].mxu0
        %v1167 = vadd.f32 0.0, %v1166
        %v1168 = vpop.f32.mrb[0].mxu0
        %v1169 = vadd.f32 0.0, %v1168
        %v1170 = vpop.f32.mrb[0].mxu0
        %v1171 = vpop.f32.mrb[0].mxu0
        %1172 = vdwg.mxu0
        %1173 = vmatprep.subr.bf16.mxu0 %v1071
        %1174 = vmatpush1.bf16.msra.mxu0 %v1070
        %1175 = vmatprep.subr.bf16.mxu0 %v1075
        %1176 = vmatpush1.bf16.msra.mxu0 %v1074
        %1177 = vmatprep.subr.bf16.mxu0 %v1079
        %1178 = vmatpush1.bf16.msra.mxu0 %v1078
        %1179 = vmatprep.subr.bf16.mxu0 %v1083
        %1180 = vmatpush1.bf16.msra.mxu0 %v1082
        %1181 = vmatprep.subr.bf16.mxu0 %v1087
        %1182 = vmatpush1.bf16.msra.mxu0 %v1086
        %1183 = vmatprep.subr.bf16.mxu0 %v1091
        %1184 = vmatpush1.bf16.msra.mxu0 %v1090
        %1185 = vmatprep.subr.bf16.mxu0 %v1095
        %1186 = vmatpush1.bf16.msra.mxu0 %v1094
        %1187 = vmatprep.subr.bf16.mxu0 %v1099
        %1188 = vmatpush1.bf16.msra.mxu0 %v1098
        %1189 = vmatprep.subr.bf16.mxu0 0
        %1190 = vmatpush1.bf16.msra.mxu0 0
        %1191 = vmatprep.subr.bf16.mxu0 0
        %1192 = vmatpush1.bf16.msra.mxu0 0
        %1193 = vmatprep.subr.bf16.mxu0 0
        %1194 = vmatpush1.bf16.msra.mxu0 0
        %1195 = vmatprep.subr.bf16.mxu0 0
        %1196 = vmatpush1.bf16.msra.mxu0 0
        %1197 = vmatprep.subr.bf16.mxu0 0
        %1198 = vmatpush1.bf16.msra.mxu0 0
        %1199 = vmatprep.subr.bf16.mxu0 0
        %1200 = vmatpush1.bf16.msra.mxu0 0
        %1201 = vmatprep.subr.bf16.mxu0 0
        %1202 = vmatpush1.bf16.msra.mxu0 0
        %1203 = vmatprep.subr.bf16.mxu0 0
        %1204 = vmatpush1.bf16.msra.mxu0 0
        %1205 = vmatprep.mubr.bf16.mxu0 0
        %1206 = vmatmul.mubr.bf16.gmra.mrb[0].mxu0 %v939
        %v1207 = vpop.f32.mrb[0].mxu0
        %v1208 = vadd.f32 0.0, %v1207
        %v1209 = vpop.f32.mrb[0].mxu0
        %v1210 = vadd.f32 0.0, %v1209
        %v1211 = vpop.f32.mrb[0].mxu0
        %v1212 = vpop.f32.mrb[0].mxu0
        %1213 = vdwg.mxu0
        %v1222 = vunpack.c.l.b16 %v930
        %v1223 = vunpack.c.h.b16 %v930
        %v1224 = vunpack.c.l.b16 %v931
        %v1225 = vunpack.c.h.b16 %v931
        %v1226 = vunpack.c.l.b16 %v932
        %v1227 = vunpack.c.h.b16 %v932
        %v1228 = vunpack.c.l.b16 %v933
        %v1229 = vunpack.c.h.b16 %v933
        %v1230 = vunpack.c.l.b16 %v934
        %v1231 = vunpack.c.h.b16 %v934
        %v1232 = vunpack.c.l.b16 %v935
        %v1233 = vunpack.c.h.b16 %v935
        %v1234 = vunpack.c.l.b16 %v936
        %v1235 = vunpack.c.h.b16 %v936
        %v1236 = vunpack.c.l.b16 %v937
        %v1237 = vunpack.c.h.b16 %v937
        %v1238 = vpack.c.b16 %v1226, %v1222
        %v1239 = vpack.c.b16 %v1227, %v1223
        %v1240 = vpack.c.b16 %v1228, %v1224
        %v1241 = vpack.c.b16 %v1229, %v1225
        %v1242 = vpack.c.b16 %v1234, %v1230
        %v1243 = vpack.c.b16 %v1235, %v1231
        %v1244 = vpack.c.b16 %v1236, %v1232
        %v1245 = vpack.c.b16 %v1237, %v1233
        %v1255 = vsel %vm817, %v929, 0
        %1257 = vmatprep.subr.bf16.mxu0 %v1239
        %1258 = vmatpush1.bf16.msra.mxu0 %v1238
        %1259 = vmatprep.subr.bf16.mxu0 %v1243
        %1260 = vmatpush1.bf16.msra.mxu0 %v1242
        %1261 = vmatprep.subr.bf16.mxu0 0
        %1262 = vmatpush1.bf16.msra.mxu0 0
        %1263 = vmatprep.subr.bf16.mxu0 0
        %1264 = vmatpush1.bf16.msra.mxu0 0
        %1265 = vmatprep.subr.bf16.mxu0 0
        %1266 = vmatpush1.bf16.msra.mxu0 0
        %1267 = vmatprep.subr.bf16.mxu0 0
        %1268 = vmatpush1.bf16.msra.mxu0 0
        %1269 = vmatprep.subr.bf16.mxu0 0
        %1270 = vmatpush1.bf16.msra.mxu0 0
        %1271 = vmatprep.subr.bf16.mxu0 0
        %1272 = vmatpush1.bf16.msra.mxu0 0
        %1273 = vmatprep.subr.bf16.mxu0 0
        %1274 = vmatpush1.bf16.msra.mxu0 0
        %1275 = vmatprep.subr.bf16.mxu0 0
        %1276 = vmatpush1.bf16.msra.mxu0 0
        %1277 = vmatprep.subr.bf16.mxu0 0
        %1278 = vmatpush1.bf16.msra.mxu0 0
        %1279 = vmatprep.subr.bf16.mxu0 0
        %1280 = vmatpush1.bf16.msra.mxu0 0
        %1281 = vmatprep.subr.bf16.mxu0 0
        %1282 = vmatpush1.bf16.msra.mxu0 0
        %1283 = vmatprep.subr.bf16.mxu0 0
        %1284 = vmatpush1.bf16.msra.mxu0 0
        %1285 = vmatprep.subr.bf16.mxu0 0
        %1286 = vmatpush1.bf16.msra.mxu0 0
        %1287 = vmatprep.subr.bf16.mxu0 0
        %1288 = vmatpush1.bf16.msra.mxu0 0
        %1289 = vmatprep.mubr.bf16.mxu0 0
        %1290 = vmatmul.mubr.bf16.gmra.mrb[0].mxu0 %v1255
        %v1291 = vpop.f32.mrb[0].mxu0
        %v1292 = vadd.f32 %v1167, %v1291
        %v1293 = vpop.f32.mrb[0].mxu0
        %v1294 = vadd.f32 %v1169, %v1293
        %v1295 = vpop.f32.mrb[0].mxu0
        %v1296 = vpop.f32.mrb[0].mxu0
        %1297 = vdwg.mxu0
        %1298 = vmatprep.subr.bf16.mxu0 %v1241
        %1299 = vmatpush1.bf16.msra.mxu0 %v1240
        %1300 = vmatprep.subr.bf16.mxu0 %v1245
        %1301 = vmatpush1.bf16.msra.mxu0 %v1244
        %1302 = vmatprep.subr.bf16.mxu0 0
        %1303 = vmatpush1.bf16.msra.mxu0 0
        %1304 = vmatprep.subr.bf16.mxu0 0
        %1305 = vmatpush1.bf16.msra.mxu0 0
        %1306 = vmatprep.subr.bf16.mxu0 0
        %1307 = vmatpush1.bf16.msra.mxu0 0
        %1308 = vmatprep.subr.bf16.mxu0 0
        %1309 = vmatpush1.bf16.msra.mxu0 0
        %1310 = vmatprep.subr.bf16.mxu0 0
        %1311 = vmatpush1.bf16.msra.mxu0 0
        %1312 = vmatprep.subr.bf16.mxu0 0
        %1313 = vmatpush1.bf16.msra.mxu0 0
        %1314 = vmatprep.subr.bf16.mxu0 0
        %1315 = vmatpush1.bf16.msra.mxu0 0
        %1316 = vmatprep.subr.bf16.mxu0 0
        %1317 = vmatpush1.bf16.msra.mxu0 0
        %1318 = vmatprep.subr.bf16.mxu0 0
        %1319 = vmatpush1.bf16.msra.mxu0 0
        %1320 = vmatprep.subr.bf16.mxu0 0
        %1321 = vmatpush1.bf16.msra.mxu0 0
        %1322 = vmatprep.subr.bf16.mxu0 0
        %1323 = vmatpush1.bf16.msra.mxu0 0
        %1324 = vmatprep.subr.bf16.mxu0 0
        %1325 = vmatpush1.bf16.msra.mxu0 0
        %1326 = vmatprep.subr.bf16.mxu0 0
        %1327 = vmatpush1.bf16.msra.mxu0 0
        %1328 = vmatprep.subr.bf16.mxu0 0
        %1329 = vmatpush1.bf16.msra.mxu0 0
        %1330 = vmatprep.mubr.bf16.mxu0 0
        %1331 = vmatmul.mubr.bf16.gmra.mrb[0].mxu0 %v1255
        %v1332 = vpop.f32.mrb[0].mxu0
        %v1333 = vadd.f32 %v1208, %v1332
        %v1334 = vpop.f32.mrb[0].mxu0
        %v1335 = vadd.f32 %v1210, %v1334
        %v1336 = vpop.f32.mrb[0].mxu0
        %v1337 = vpop.f32.mrb[0].mxu0
        %1338 = vdwg.mxu0
        %v1339 = vld [vmem:[%s8] sm:$0xf]
        %v1341 = vlaneseq
        %v1342 = vshrl.u32 %v1341, 7
        %v1343 = vsub.s32 0, %v1342
        %v1344 = vrot.slane %v1339, %v1343
        %v1345 = vlaneseq
        %v1346 = vshrl.u32 %v1345, 7
        %v1347 = vsub.s32 1, %v1346
        %v1348 = vrot.slane %v1339, %v1347
        %v1349 = vlaneseq
        %v1350 = vshrl.u32 %v1349, 7
        %v1351 = vsub.s32 2, %v1350
        %v1352 = vrot.slane %v1339, %v1351
        %v1353 = vlaneseq
        %v1354 = vshrl.u32 %v1353, 7
        %v1355 = vsub.s32 3, %v1354
        %v1356 = vrot.slane %v1339, %v1355
        %v1361 = vadd.f32 %v1292, %v1344
        %v1362 = vadd.f32 %v1294, %v1348
        %v1363 = vadd.f32 %v1333, %v1352
        %v1364 = vadd.f32 %v1335, %v1356
        %v1365 = vld [vmem:[#allocation3] sm:$0xff]
        %v1366 = vxor.u32 %v925, 2147483648
        %v1367 = vmul.f32 %v1366, 1.442695
        %v1368 = vpow.pop %v1367
        %v1369 = vadd.f32 %v1368, 1.0
        %v1370 = vrcp.pop %v1369
        %v1371 = vmul.f32 1.0, %v1370
        %v1372 = vxor.u32 %v926, 2147483648
        %v1373 = vmul.f32 %v1372, 1.442695
        %v1374 = vpow.pop %v1373
        %v1375 = vadd.f32 %v1374, 1.0
        %v1376 = vrcp.pop %v1375
        %v1377 = vmul.f32 1.0, %v1376
        %v1378 = vtanh.pop %v927
        %v1379 = vxor.u32 %v928, 2147483648
        %v1380 = vmul.f32 %v1379, 1.442695
        %v1381 = vpow.pop %v1380
        %v1382 = vadd.f32 %v1381, 1.0
        %v1383 = vrcp.pop %v1382
        %v1384 = vmul.f32 1.0, %v1383
        %v1385 = vmul.f32 %v1377, %v1365
        %v1386 = vmul.f32 %v1371, %v1378
        %v1387 = vadd.f32 %v1385, %v1386
        %v1388 = vtanh.pop %v1387
        %v1389 = vmul.f32 %v1384, %v1388
        %v1390 = vld [vmem:[#allocation5] sm:$0xff]
        %v1391 = vxor.u32 %v1361, 2147483648
        %v1392 = vmul.f32 %v1391, 1.442695
        %v1393 = vpow.pop %v1392
        %v1394 = vadd.f32 %v1393, 1.0
        %v1395 = vrcp.pop %v1394
        %v1396 = vmul.f32 1.0, %v1395
        %v1397 = vxor.u32 %v1362, 2147483648
        %v1398 = vmul.f32 %v1397, 1.442695
        %v1399 = vpow.pop %v1398
        %v1400 = vadd.f32 %v1399, 1.0
        %v1401 = vrcp.pop %v1400
        %v1402 = vmul.f32 1.0, %v1401
        %v1403 = vtanh.pop %v1363
        %v1404 = vxor.u32 %v1364, 2147483648
        %v1405 = vmul.f32 %v1404, 1.442695
        %v1406 = vpow.pop %v1405
        %v1407 = vadd.f32 %v1406, 1.0
        %v1408 = vrcp.pop %v1407
        %v1409 = vmul.f32 1.0, %v1408
        %v1410 = vmul.f32 %v1402, %v1390
        %v1411 = vmul.f32 %v1396, %v1403
        %v1412 = vadd.f32 %v1410, %v1411
        %v1413 = vtanh.pop %v1412
        %v1414 = vmul.f32 %v1409, %v1413
        %v1415 = vsel %vm488, 1, 0
        %1416 = vset.pattern.permute.xlu0 0
        %1417 = vperm.xlu0 %1416, %v1415
        %v1418 = vpop.permute.xlu0 %1417
        %vm1419 = vcmp.eq.s32.totalorder %v1418, 1
        %v1420 = vsel %vm1419, %v1389, 0.0
        %v1421 = vpack.c.bf16 %v1420, %v1420
        %1422 = vst [vmem:[%s467] sm:$0xf] %v1421
        %v1423 = vsel %vm491, 1, 0
        %1424 = vset.pattern.permute.xlu0 0
        %1425 = vperm.xlu0 %1424, %v1423
        %v1426 = vpop.permute.xlu0 %1425
        %vm1427 = vcmp.eq.s32.totalorder %v1426, 1
        %v1428 = vsel %vm1427, %v1414, 0.0
        %v1429 = vpack.c.bf16 %v1428, %v1428
        %1430 = vst [vmem:[%s475] sm:$0xf] %v1429
        %v1431 = vld [vmem:[#allocation2] sm:$0xff]
        %v1432 = vsel %vm1419, %v1389, %v1431
        %1433 = vst [vmem:[#allocation2] sm:$0xff] %v1432
        %v1434 = vld [vmem:[#allocation3] sm:$0xff]
        %v1435 = vsel %vm1419, %v1387, %v1434
        %1436 = vst [vmem:[#allocation3] sm:$0xff] %v1435
        %v1437 = vld [vmem:[#allocation4] sm:$0xff]
        %v1438 = vsel %vm1427, %v1414, %v1437
        %1439 = vst [vmem:[#allocation4] sm:$0xff] %v1438
        %v1440 = vld [vmem:[#allocation5] sm:$0xff]
        %v1441 = vsel %vm1427, %v1412, %v1440
        %1442 = vst [vmem:[#allocation5] sm:$0xff] %v1441
        %p1443 = scmp.lt.s32.totalorder %s28, 7
        %s1444 = scalar_select %p1443, %s28, 7
        %p1445 = scmp.lt.s32.totalorder %s27, 0
        %s1446 = scalar_select %p1445, %s27, 0
        %s1447 = sadd.s32 %s1446, %s1444
        %s1448 = smul.addr %s1447, 4
        %s1449 = scalar_lea.vmem %s9, %s1448
        %s1450 = ssub.s32 7, %s28
        %p1451 = scmp.lt.s32.totalorder %s1450, 7
        %s1452 = scalar_select %p1451, %s1450, 7
        %p1453 = scmp.lt.s32.totalorder %s27, 0
        %s1454 = scalar_select %p1453, %s27, 0
        %s1455 = sadd.s32 %s1454, %s1452
        %s1456 = smul.addr %s1455, 4
        %s1457 = scalar_lea.vmem %s10, %s1456
        // Predicated region
        $region65: #{lstm_base_forward.2} parent=55 // pred_check
          %p1458 = pneg %p265
        $region66: #{lstm_base_forward.2} parent=55 // pred_check_branch
          %1460 = sbr.rel (%p1458) target = $region68
        $region67: #{lstm_base_forward.2} parent=55 // pred_region
          _
        $region68: #{lstm_base_forward.2} parent=55 // pred_fallthru
          _
        // Predicated region
        $region69: #{lstm_base_forward.2} parent=55 // pred_check
          %p1461 = pneg %p295
        $region70: #{lstm_base_forward.2} parent=55 // pred_check_branch
          %1463 = sbr.rel (%p1461) target = $region72
        $region71: #{lstm_base_forward.2} parent=55 // pred_region
          %s1464 = ssub.s32 7, %s28
        $region72: #{lstm_base_forward.2} parent=55 // pred_fallthru
          _
      $region56: #{lstm_base_forward.2} parent=5 // pred_fallthru
        _
      %p1465 = scmp.le.s32.totalorder 2, %s18
      // Predicated region
      $region73: #{lstm_base_forward.2} parent=5 // pred_check
        %p1466 = pneg %p1465
      $region74: #{lstm_base_forward.2} parent=5 // pred_check_branch
        %1468 = sbr.rel (%p1466) target = $region76
      $region75: #{lstm_base_forward.2} parent=5 // pred_region
        %s1469 = ssub.s32 %s18, 2
        // Predicated region
        $region77: #{lstm_base_forward.2} parent=75 // pred_check
          %p1470 = pneg %p271
        $region78: #{lstm_base_forward.2} parent=75 // pred_check_branch
          %1472 = sbr.rel (%p1470) target = $region80
        $region79: #{lstm_base_forward.2} parent=75 // pred_region
          %p1473 = scmp.lt.s32.totalorder %s30, 7
          %s1474 = scalar_select %p1473, %s30, 7
          %p1475 = scmp.lt.s32.totalorder %s29, 0
          %s1476 = scalar_select %p1475, %s29, 0
          %s1477 = sadd.s32 %s1476, %s1474
          %s1478 = smul.addr %s1477, 4
          %s1479 = scalar_lea.vmem %s9, %s1478
        $region80: #{lstm_base_forward.2} parent=75 // pred_fallthru
          _
        // Predicated region
        $region81: #{lstm_base_forward.2} parent=75 // pred_check
          %p1480 = pneg %p301
        $region82: #{lstm_base_forward.2} parent=75 // pred_check_branch
          %1482 = sbr.rel (%p1480) target = $region84
        $region83: #{lstm_base_forward.2} parent=75 // pred_region
          %s1483 = ssub.s32 7, %s30
          %p1484 = scmp.lt.s32.totalorder %s1483, 7
          %s1485 = scalar_select %p1484, %s1483, 7
          %p1486 = scmp.lt.s32.totalorder %s29, 0
          %s1487 = scalar_select %p1486, %s29, 0
          %s1488 = sadd.s32 %s1487, %s1485
          %s1489 = smul.addr %s1488, 4
          %s1490 = scalar_lea.vmem %s10, %s1489
        $region84: #{lstm_base_forward.2} parent=75 // pred_fallthru
          _
      $region76: #{lstm_base_forward.2} parent=5 // pred_fallthru
        _
    $region6: #{lstm_base_forward.2} parent=1 // loop_footer
      %s22 = sadd.s32 1, %s18
    $region7: #{lstm_base_forward.2} parent=1 // loop_footer_branch
      %17 = sbr.rel target = $region3
    $region8: #{lstm_base_forward.2} parent=1 // loop_exit
      _
    %1491 = vsyncpa [#allocation7], 1
    %s1492 = scalar_lea.sflag [#allocation7], 1
    %1493 = vsyncpa %s1492, 1

// kernel: lstm_base_forward.3
$region0: #{lstm_base_forward.3}
  #allocation0 [shape = 'u32[]', space=smem, size = 0x4, offset = 0x4, fixed_abs, tag = 'smem constant byte address 0x4 - core index']
  #allocation1 [shape = 'u32[144,128]{1,0:T(1,128)}', space=vmem, size = 0x12000, scoped, tag = 'internal scratch']
  #allocation2 [shape = 'f32[8,128]{1,0:T(8,128)}', space=vmem, size = 0x1000, scoped, tag = 'scratch operand']
  #allocation3 [shape = 'f32[8,128]{1,0:T(8,128)}', space=vmem, size = 0x1000, scoped, tag = 'scratch operand']
  #allocation4 [shape = 'f32[8,128]{1,0:T(8,128)}', space=vmem, size = 0x1000, scoped, tag = 'scratch operand']
  #allocation5 [shape = 'f32[8,128]{1,0:T(8,128)}', space=vmem, size = 0x1000, scoped, tag = 'scratch operand']
  #allocation6 [shape = 'f32[8,128]{1,0:T(8,128)}', space=vmem, size = 0x1000, scoped, tag = 'scratch operand']
  #allocation7 [shape = 'f32[8,128]{1,0:T(8,128)}', space=vmem, size = 0x1000, scoped, tag = 'scratch operand']
  %s0 = inlined_call_operand.vmem [shape: bf16[8,8,256], index: 0, kind: input, shape index: {}, may-alias: {0,1}]
  %s1 = inlined_call_operand.vmem [shape: bf16[8,8,256], index: 1, kind: input, shape index: {}, may-alias: {0,1}]
  %s2 = inlined_call_operand.vmem [shape: s32[8,1], index: 2, kind: input, shape index: {}]
  %s3 = inlined_call_operand.vmem [shape: bf16[256,512], index: 3, kind: input, shape index: {}]
  %s4 = inlined_call_operand.vmem [shape: bf16[128,512], index: 4, kind: input, shape index: {}]
  %s5 = inlined_call_operand.vmem [shape: f32[1,512], index: 5, kind: input, shape index: {}]
  %s6 = inlined_call_operand.vmem [shape: bf16[256,512], index: 6, kind: input, shape index: {}]
  %s7 = inlined_call_operand.vmem [shape: bf16[128,512], index: 7, kind: input, shape index: {}]
  %s8 = inlined_call_operand.vmem [shape: f32[1,512], index: 8, kind: input, shape index: {}]
  %s9 = inlined_call_operand.vmem [shape: f32[768,32], index: 9, kind: input, shape index: {}]
  %s10 = inlined_call_operand.vmem [shape: f32[1,32], index: 10, kind: input, shape index: {}]
  %s11 = inlined_call_operand.vmem [shape: f32[32,3], index: 11, kind: input, shape index: {}]
  %s12 = inlined_call_operand.vmem [shape: f32[1,3], index: 12, kind: input, shape index: {}]
  %s13 = inlined_call_operand.hbm [shape: f32[2,3], index: 13, kind: output, shape index: {}]
  %s14 = sld [smem:[#allocation0]]
  $region93: #{lstm_base_forward.3} parent=0
    _
  %s16 = ssub.s32 1, %s14
  %s17 = scalar_select 0, %s16, %s14
  $region1: #{lstm_base_forward.3} parent=0
    #allocation8 [shape = 'u8[1024]{0}', space=vmem, size = 0x400, scoped, tag = 'output window, operand 0, single buffered']
    #allocation9 [shape = 's32[2]{0}', space=sflag, size = 0x8, scoped, tag = 'scoped memory for lstm_base_forward.3']
    %18 = vsyncpa [#allocation9], 0
    loop: start=0, step=1, limit=10
    $region2: #{lstm_base_forward.3} parent=1 // loop_pre_header
      _
    $region3: #{lstm_base_forward.3} parent=1 // loop_header
      %s20 = sphi 0, %s24
      %p21 = scmp.ge.s32.totalorder %s20, 10
      %s30 = sphi 0, %s32
      %s33 = sphi 0, %s30
      %s34 = sphi 0, %s33
      %s50 = sphi 0, %s34
      %s58 = sphi 0, %s60
      %s61 = sphi 0, %s58
      %s62 = sphi 0, %s61
      %s78 = sphi 0, %s62
      %s82 = sphi 0, %s82
      %s84 = sphi 0, %s82
      %s85 = sphi 0, %s84
      %s99 = sphi 0, %s85
      %s103 = sphi 0, %s103
      %s105 = sphi 0, %s103
      %s106 = sphi 0, %s105
      %s120 = sphi 0, %s106
      %s124 = sphi 0, %s124
      %s126 = sphi 0, %s124
      %s127 = sphi 0, %s126
      %s141 = sphi 0, %s127
      %s145 = sphi 0, %s145
      %s147 = sphi 0, %s145
      %s148 = sphi 0, %s147
      %s162 = sphi 0, %s148
      %s166 = sphi 0, %s166
      %s168 = sphi 0, %s166
      %s169 = sphi 0, %s168
      %s183 = sphi 0, %s169
      %s187 = sphi 0, %s187
      %s189 = sphi 0, %s187
      %s190 = sphi 0, %s189
      %s204 = sphi 0, %s190
      %s208 = sphi 0, %s208
      %s210 = sphi 0, %s208
      %s211 = sphi 0, %s210
      %s225 = sphi 0, %s211
      %s229 = sphi 0, %s229
      %s231 = sphi 0, %s229
      %s232 = sphi 0, %s231
      %s246 = sphi 0, %s232
      %s250 = sphi 0, %s250
      %s252 = sphi 0, %s250
      %s253 = sphi 0, %s252
      %s267 = sphi 0, %s253
      %s271 = sphi 0, %s271
      %s273 = sphi 0, %s271
      %s274 = sphi 0, %s273
      %s288 = sphi 0, %s274
      %s292 = sphi 0, %s292
      %s294 = sphi 0, %s292
      %s295 = sphi 0, %s294
      %s309 = sphi 0, %s295
      %s313 = sphi 0, %s313
      %s315 = sphi 0, %s313
      %s316 = sphi 0, %s315
      %s330 = sphi 0, %s316
    $region4: #{lstm_base_forward.3} parent=1 // loop_header_branch
      %23 = sbr.rel (%p21) target = $region8
    $region5: #{lstm_base_forward.3} parent=1 // loop_body
      %s25 = ssub.s32 %s20, 1
      %s26 = ssub.s32 %s20, 2
      %s27 = sadd.s32 %s20, 1
      %s28 = ssub.s32 %s20, %s27
      %p29 = scmp.eq.s32.totalorder %s28, 0
      %s31 = sadd.s32 %s30, 1
      %s32 = scalar_select %p29, %s30, %s31
      %p35 = pneg %p29
      %p36 = scmp.eq.s32.totalorder %s20, 7
      %p37 = por %p35, %p36
      %p38 = scmp.ne.s32.totalorder %s30, %s33
      %p39 = scmp.eq.s32.totalorder %s20, 0
      %p40 = por %p38, %p39
      %p41 = scmp.ne.s32.totalorder %s30, %s33
      %p42 = scmp.eq.s32.totalorder %s25, 7
      %p43 = por %p41, %p42
      %p44 = scmp.ne.s32.totalorder %s33, %s34
      %p45 = scmp.eq.s32.totalorder %s25, 0
      %p46 = por %p44, %p45
      %p47 = scmp.ne.s32.totalorder %s33, %s34
      %p48 = scmp.eq.s32.totalorder %s26, 7
      %p49 = por %p47, %p48
      %p51 = scmp.ne.s32.totalorder %s34, %s50
      %p52 = scmp.eq.s32.totalorder %s26, 0
      %p53 = por %p51, %p52
      %s54 = ssub.s32 7, %s20
      %s55 = ssub.s32 7, %s27
      %s56 = ssub.s32 %s54, %s55
      %p57 = scmp.eq.s32.totalorder %s56, 0
      %s59 = sadd.s32 %s58, 1
      %s60 = scalar_select %p57, %s58, %s59
      %p63 = pneg %p57
      %p64 = scmp.eq.s32.totalorder %s20, 7
      %p65 = por %p63, %p64
      %p66 = scmp.ne.s32.totalorder %s58, %s61
      %p67 = scmp.eq.s32.totalorder %s20, 0
      %p68 = por %p66, %p67
      %p69 = scmp.ne.s32.totalorder %s58, %s61
      %p70 = scmp.eq.s32.totalorder %s25, 7
      %p71 = por %p69, %p70
      %p72 = scmp.ne.s32.totalorder %s61, %s62
      %p73 = scmp.eq.s32.totalorder %s25, 0
      %p74 = por %p72, %p73
      %p75 = scmp.ne.s32.totalorder %s61, %s62
      %p76 = scmp.eq.s32.totalorder %s26, 7
      %p77 = por %p75, %p76
      %p79 = scmp.ne.s32.totalorder %s62, %s78
      %p80 = scmp.eq.s32.totalorder %s26, 0
      %p81 = por %p79, %p80
      %s83 = sadd.s32 %s82, 1
      %p86 = scmp.eq.s32.totalorder %s20, 7
      %p87 = scmp.ne.s32.totalorder %s82, %s84
      %p88 = scmp.eq.s32.totalorder %s20, 0
      %p89 = por %p87, %p88
      %p90 = scmp.ne.s32.totalorder %s82, %s84
      %p91 = scmp.eq.s32.totalorder %s25, 7
      %p92 = por %p90, %p91
      %p93 = scmp.ne.s32.totalorder %s84, %s85
      %p94 = scmp.eq.s32.totalorder %s25, 0
      %p95 = por %p93, %p94
      %p96 = scmp.ne.s32.totalorder %s84, %s85
      %p97 = scmp.eq.s32.totalorder %s26, 7
      %p98 = por %p96, %p97
      %p100 = scmp.ne.s32.totalorder %s85, %s99
      %p101 = scmp.eq.s32.totalorder %s26, 0
      %p102 = por %p100, %p101
      %s104 = sadd.s32 %s103, 1
      %p107 = scmp.eq.s32.totalorder %s20, 7
      %p108 = scmp.ne.s32.totalorder %s103, %s105
      %p109 = scmp.eq.s32.totalorder %s20, 0
      %p110 = por %p108, %p109
      %p111 = scmp.ne.s32.totalorder %s103, %s105
      %p112 = scmp.eq.s32.totalorder %s25, 7
      %p113 = por %p111, %p112
      %p114 = scmp.ne.s32.totalorder %s105, %s106
      %p115 = scmp.eq.s32.totalorder %s25, 0
      %p116 = por %p114, %p115
      %p117 = scmp.ne.s32.totalorder %s105, %s106
      %p118 = scmp.eq.s32.totalorder %s26, 7
      %p119 = por %p117, %p118
      %p121 = scmp.ne.s32.totalorder %s106, %s120
      %p122 = scmp.eq.s32.totalorder %s26, 0
      %p123 = por %p121, %p122
      %s125 = sadd.s32 %s124, 1
      %p128 = scmp.eq.s32.totalorder %s20, 7
      %p129 = scmp.ne.s32.totalorder %s124, %s126
      %p130 = scmp.eq.s32.totalorder %s20, 0
      %p131 = por %p129, %p130
      %p132 = scmp.ne.s32.totalorder %s124, %s126
      %p133 = scmp.eq.s32.totalorder %s25, 7
      %p134 = por %p132, %p133
      %p135 = scmp.ne.s32.totalorder %s126, %s127
      %p136 = scmp.eq.s32.totalorder %s25, 0
      %p137 = por %p135, %p136
      %p138 = scmp.ne.s32.totalorder %s126, %s127
      %p139 = scmp.eq.s32.totalorder %s26, 7
      %p140 = por %p138, %p139
      %p142 = scmp.ne.s32.totalorder %s127, %s141
      %p143 = scmp.eq.s32.totalorder %s26, 0
      %p144 = por %p142, %p143
      %s146 = sadd.s32 %s145, 1
      %p149 = scmp.eq.s32.totalorder %s20, 7
      %p150 = scmp.ne.s32.totalorder %s145, %s147
      %p151 = scmp.eq.s32.totalorder %s20, 0
      %p152 = por %p150, %p151
      %p153 = scmp.ne.s32.totalorder %s145, %s147
      %p154 = scmp.eq.s32.totalorder %s25, 7
      %p155 = por %p153, %p154
      %p156 = scmp.ne.s32.totalorder %s147, %s148
      %p157 = scmp.eq.s32.totalorder %s25, 0
      %p158 = por %p156, %p157
      %p159 = scmp.ne.s32.totalorder %s147, %s148
      %p160 = scmp.eq.s32.totalorder %s26, 7
      %p161 = por %p159, %p160
      %p163 = scmp.ne.s32.totalorder %s148, %s162
      %p164 = scmp.eq.s32.totalorder %s26, 0
      %p165 = por %p163, %p164
      %s167 = sadd.s32 %s166, 1
      %p170 = scmp.eq.s32.totalorder %s20, 7
      %p171 = scmp.ne.s32.totalorder %s166, %s168
      %p172 = scmp.eq.s32.totalorder %s20, 0
      %p173 = por %p171, %p172
      %p174 = scmp.ne.s32.totalorder %s166, %s168
      %p175 = scmp.eq.s32.totalorder %s25, 7
      %p176 = por %p174, %p175
      %p177 = scmp.ne.s32.totalorder %s168, %s169
      %p178 = scmp.eq.s32.totalorder %s25, 0
      %p179 = por %p177, %p178
      %p180 = scmp.ne.s32.totalorder %s168, %s169
      %p181 = scmp.eq.s32.totalorder %s26, 7
      %p182 = por %p180, %p181
      %p184 = scmp.ne.s32.totalorder %s169, %s183
      %p185 = scmp.eq.s32.totalorder %s26, 0
      %p186 = por %p184, %p185
      %s188 = sadd.s32 %s187, 1
      %p191 = scmp.eq.s32.totalorder %s20, 7
      %p192 = scmp.ne.s32.totalorder %s187, %s189
      %p193 = scmp.eq.s32.totalorder %s20, 0
      %p194 = por %p192, %p193
      %p195 = scmp.ne.s32.totalorder %s187, %s189
      %p196 = scmp.eq.s32.totalorder %s25, 7
      %p197 = por %p195, %p196
      %p198 = scmp.ne.s32.totalorder %s189, %s190
      %p199 = scmp.eq.s32.totalorder %s25, 0
      %p200 = por %p198, %p199
      %p201 = scmp.ne.s32.totalorder %s189, %s190
      %p202 = scmp.eq.s32.totalorder %s26, 7
      %p203 = por %p201, %p202
      %p205 = scmp.ne.s32.totalorder %s190, %s204
      %p206 = scmp.eq.s32.totalorder %s26, 0
      %p207 = por %p205, %p206
      %s209 = sadd.s32 %s208, 1
      %p212 = scmp.eq.s32.totalorder %s20, 7
      %p213 = scmp.ne.s32.totalorder %s208, %s210
      %p214 = scmp.eq.s32.totalorder %s20, 0
      %p215 = por %p213, %p214
      %p216 = scmp.ne.s32.totalorder %s208, %s210
      %p217 = scmp.eq.s32.totalorder %s25, 7
      %p218 = por %p216, %p217
      %p219 = scmp.ne.s32.totalorder %s210, %s211
      %p220 = scmp.eq.s32.totalorder %s25, 0
      %p221 = por %p219, %p220
      %p222 = scmp.ne.s32.totalorder %s210, %s211
      %p223 = scmp.eq.s32.totalorder %s26, 7
      %p224 = por %p222, %p223
      %p226 = scmp.ne.s32.totalorder %s211, %s225
      %p227 = scmp.eq.s32.totalorder %s26, 0
      %p228 = por %p226, %p227
      %s230 = sadd.s32 %s229, 1
      %p233 = scmp.eq.s32.totalorder %s20, 7
      %p234 = scmp.ne.s32.totalorder %s229, %s231
      %p235 = scmp.eq.s32.totalorder %s20, 0
      %p236 = por %p234, %p235
      %p237 = scmp.ne.s32.totalorder %s229, %s231
      %p238 = scmp.eq.s32.totalorder %s25, 7
      %p239 = por %p237, %p238
      %p240 = scmp.ne.s32.totalorder %s231, %s232
      %p241 = scmp.eq.s32.totalorder %s25, 0
      %p242 = por %p240, %p241
      %p243 = scmp.ne.s32.totalorder %s231, %s232
      %p244 = scmp.eq.s32.totalorder %s26, 7
      %p245 = por %p243, %p244
      %p247 = scmp.ne.s32.totalorder %s232, %s246
      %p248 = scmp.eq.s32.totalorder %s26, 0
      %p249 = por %p247, %p248
      %s251 = sadd.s32 %s250, 1
      %p254 = scmp.eq.s32.totalorder %s20, 7
      %p255 = scmp.ne.s32.totalorder %s250, %s252
      %p256 = scmp.eq.s32.totalorder %s20, 0
      %p257 = por %p255, %p256
      %p258 = scmp.ne.s32.totalorder %s250, %s252
      %p259 = scmp.eq.s32.totalorder %s25, 7
      %p260 = por %p258, %p259
      %p261 = scmp.ne.s32.totalorder %s252, %s253
      %p262 = scmp.eq.s32.totalorder %s25, 0
      %p263 = por %p261, %p262
      %p264 = scmp.ne.s32.totalorder %s252, %s253
      %p265 = scmp.eq.s32.totalorder %s26, 7
      %p266 = por %p264, %p265
      %p268 = scmp.ne.s32.totalorder %s253, %s267
      %p269 = scmp.eq.s32.totalorder %s26, 0
      %p270 = por %p268, %p269
      %s272 = sadd.s32 %s271, 1
      %p275 = scmp.eq.s32.totalorder %s20, 7
      %p276 = scmp.ne.s32.totalorder %s271, %s273
      %p277 = scmp.eq.s32.totalorder %s20, 0
      %p278 = por %p276, %p277
      %p279 = scmp.ne.s32.totalorder %s271, %s273
      %p280 = scmp.eq.s32.totalorder %s25, 7
      %p281 = por %p279, %p280
      %p282 = scmp.ne.s32.totalorder %s273, %s274
      %p283 = scmp.eq.s32.totalorder %s25, 0
      %p284 = por %p282, %p283
      %p285 = scmp.ne.s32.totalorder %s273, %s274
      %p286 = scmp.eq.s32.totalorder %s26, 7
      %p287 = por %p285, %p286
      %p289 = scmp.ne.s32.totalorder %s274, %s288
      %p290 = scmp.eq.s32.totalorder %s26, 0
      %p291 = por %p289, %p290
      %s293 = sadd.s32 %s292, 1
      %p296 = scmp.eq.s32.totalorder %s20, 7
      %p297 = scmp.ne.s32.totalorder %s292, %s294
      %p298 = scmp.eq.s32.totalorder %s20, 0
      %p299 = por %p297, %p298
      %p300 = scmp.ne.s32.totalorder %s292, %s294
      %p301 = scmp.eq.s32.totalorder %s25, 7
      %p302 = por %p300, %p301
      %p303 = scmp.ne.s32.totalorder %s294, %s295
      %p304 = scmp.eq.s32.totalorder %s25, 0
      %p305 = por %p303, %p304
      %p306 = scmp.ne.s32.totalorder %s294, %s295
      %p307 = scmp.eq.s32.totalorder %s26, 7
      %p308 = por %p306, %p307
      %p310 = scmp.ne.s32.totalorder %s295, %s309
      %p311 = scmp.eq.s32.totalorder %s26, 0
      %p312 = por %p310, %p311
      %s314 = sadd.s32 %s313, 1
      %p317 = scmp.eq.s32.totalorder %s20, 7
      %p318 = scmp.ne.s32.totalorder %s313, %s315
      %p319 = scmp.eq.s32.totalorder %s20, 0
      %p320 = por %p318, %p319
      %p321 = scmp.ne.s32.totalorder %s313, %s315
      %p322 = scmp.eq.s32.totalorder %s25, 7
      %p323 = por %p321, %p322
      %p324 = scmp.ne.s32.totalorder %s315, %s316
      %p325 = scmp.eq.s32.totalorder %s25, 0
      %p326 = por %p324, %p325
      %p327 = scmp.ne.s32.totalorder %s315, %s316
      %p328 = scmp.eq.s32.totalorder %s26, 7
      %p329 = por %p327, %p328
      %p331 = scmp.ne.s32.totalorder %s316, %s330
      %p332 = scmp.eq.s32.totalorder %s26, 0
      %p333 = por %p331, %p332
      %p334 = scmp.le.s32.totalorder 1, %s20
      %p335 = scmp.lt.s32.totalorder %s20, 9
      %p336 = pnand %p334, %p335
      %p337 = pneg %p336
      // Predicated region
      $region9: #{lstm_base_forward.3} parent=5 // pred_check
        _
      $region10: #{lstm_base_forward.3} parent=5 // pred_check_branch
        %339 = sbr.rel (%p336) target = $region12
      $region11: #{lstm_base_forward.3} parent=5 // pred_region
        %s340 = ssub.s32 %s20, 1
        // Predicated region
        $region13: #{lstm_base_forward.3} parent=11 // pred_check
          %p341 = pneg %p95
        $region14: #{lstm_base_forward.3} parent=11 // pred_check_branch
          %343 = sbr.rel (%p341) target = $region16
        $region15: #{lstm_base_forward.3} parent=11 // pred_region
          _
        $region16: #{lstm_base_forward.3} parent=11 // pred_fallthru
          _
        // Predicated region
        $region17: #{lstm_base_forward.3} parent=11 // pred_check
          %p344 = pneg %p116
        $region18: #{lstm_base_forward.3} parent=11 // pred_check_branch
          %346 = sbr.rel (%p344) target = $region20
        $region19: #{lstm_base_forward.3} parent=11 // pred_region
          _
        $region20: #{lstm_base_forward.3} parent=11 // pred_fallthru
          _
        // Predicated region
        $region21: #{lstm_base_forward.3} parent=11 // pred_check
          %p347 = pneg %p137
        $region22: #{lstm_base_forward.3} parent=11 // pred_check_branch
          %349 = sbr.rel (%p347) target = $region24
        $region23: #{lstm_base_forward.3} parent=11 // pred_region
          _
        $region24: #{lstm_base_forward.3} parent=11 // pred_fallthru
          _
        // Predicated region
        $region25: #{lstm_base_forward.3} parent=11 // pred_check
          %p350 = pneg %p158
        $region26: #{lstm_base_forward.3} parent=11 // pred_check_branch
          %352 = sbr.rel (%p350) target = $region28
        $region27: #{lstm_base_forward.3} parent=11 // pred_region
          _
        $region28: #{lstm_base_forward.3} parent=11 // pred_fallthru
          _
        // Predicated region
        $region29: #{lstm_base_forward.3} parent=11 // pred_check
          %p353 = pneg %p179
        $region30: #{lstm_base_forward.3} parent=11 // pred_check_branch
          %355 = sbr.rel (%p353) target = $region32
        $region31: #{lstm_base_forward.3} parent=11 // pred_region
          _
        $region32: #{lstm_base_forward.3} parent=11 // pred_fallthru
          _
        // Predicated region
        $region33: #{lstm_base_forward.3} parent=11 // pred_check
          %p356 = pneg %p200
        $region34: #{lstm_base_forward.3} parent=11 // pred_check_branch
          %358 = sbr.rel (%p356) target = $region36
        $region35: #{lstm_base_forward.3} parent=11 // pred_region
          _
        $region36: #{lstm_base_forward.3} parent=11 // pred_fallthru
          _
        // Predicated region
        $region37: #{lstm_base_forward.3} parent=11 // pred_check
          %p359 = pneg %p221
        $region38: #{lstm_base_forward.3} parent=11 // pred_check_branch
          %361 = sbr.rel (%p359) target = $region40
        $region39: #{lstm_base_forward.3} parent=11 // pred_region
          _
        $region40: #{lstm_base_forward.3} parent=11 // pred_fallthru
          _
        // Predicated region
        $region41: #{lstm_base_forward.3} parent=11 // pred_check
          %p362 = pneg %p242
        $region42: #{lstm_base_forward.3} parent=11 // pred_check_branch
          %364 = sbr.rel (%p362) target = $region44
        $region43: #{lstm_base_forward.3} parent=11 // pred_region
          _
        $region44: #{lstm_base_forward.3} parent=11 // pred_fallthru
          _
        // Predicated region
        $region45: #{lstm_base_forward.3} parent=11 // pred_check
          %p365 = pneg %p263
        $region46: #{lstm_base_forward.3} parent=11 // pred_check_branch
          %367 = sbr.rel (%p365) target = $region48
        $region47: #{lstm_base_forward.3} parent=11 // pred_region
          _
        $region48: #{lstm_base_forward.3} parent=11 // pred_fallthru
          _
        // Predicated region
        $region49: #{lstm_base_forward.3} parent=11 // pred_check
          %p368 = pneg %p284
        $region50: #{lstm_base_forward.3} parent=11 // pred_check_branch
          %370 = sbr.rel (%p368) target = $region52
        $region51: #{lstm_base_forward.3} parent=11 // pred_region
          _
        $region52: #{lstm_base_forward.3} parent=11 // pred_fallthru
          _
        // Predicated region
        $region53: #{lstm_base_forward.3} parent=11 // pred_check
          %p371 = pneg %p305
        $region54: #{lstm_base_forward.3} parent=11 // pred_check_branch
          %373 = sbr.rel (%p371) target = $region56
        $region55: #{lstm_base_forward.3} parent=11 // pred_region
          _
        $region56: #{lstm_base_forward.3} parent=11 // pred_fallthru
          _
      $region12: #{lstm_base_forward.3} parent=5 // pred_fallthru
        _
      %p374 = scmp.lt.s32.totalorder %s20, 8
      // Predicated region
      $region57: #{lstm_base_forward.3} parent=5 // pred_check
        %p375 = pneg %p374
      $region58: #{lstm_base_forward.3} parent=5 // pred_check_branch
        %377 = sbr.rel (%p375) target = $region60
      $region59: #{lstm_base_forward.3} parent=5 // pred_region
        // Predicated region
        $region61: #{lstm_base_forward.3} parent=59 // pred_check
          %p378 = pneg %p40
        $region62: #{lstm_base_forward.3} parent=59 // pred_check_branch
          %380 = sbr.rel (%p378) target = $region64
        $region63: #{lstm_base_forward.3} parent=59 // pred_region
          %p381 = scmp.lt.s32.totalorder %s20, 7
          %s382 = scalar_select %p381, %s20, 7
          %s383 = smul.addr %s382, 2
          %s384 = smul.addr %s383, 4
          %s385 = scalar_lea.vmem %s0, %s384
        $region64: #{lstm_base_forward.3} parent=59 // pred_fallthru
          _
        // Predicated region
        $region65: #{lstm_base_forward.3} parent=59 // pred_check
          %p386 = pneg %p68
        $region66: #{lstm_base_forward.3} parent=59 // pred_check_branch
          %388 = sbr.rel (%p386) target = $region68
        $region67: #{lstm_base_forward.3} parent=59 // pred_region
          %s389 = ssub.s32 7, %s20
          %p390 = scmp.lt.s32.totalorder %s389, 7
          %s391 = scalar_select %p390, %s389, 7
          %s392 = smul.addr %s391, 2
          %s393 = smul.addr %s392, 4
          %s394 = scalar_lea.vmem %s1, %s393
          %s395 = ssub.s32 7, %s20
        $region68: #{lstm_base_forward.3} parent=59 // pred_fallthru
          _
      $region60: #{lstm_base_forward.3} parent=5 // pred_fallthru
        _
      %p396 = scmp.le.s32.totalorder 1, %s20
      %p397 = scmp.lt.s32.totalorder %s20, 9
      %p398 = pnand %p396, %p397
      %p399 = pneg %p398
      // Predicated region
      $region69: #{lstm_base_forward.3} parent=5 // pred_check
        _
      $region70: #{lstm_base_forward.3} parent=5 // pred_check_branch
        %401 = sbr.rel (%p398) target = $region72
      $region71: #{lstm_base_forward.3} parent=5 // pred_region
        %s402 = ssub.s32 %s20, 1
        %p403 = scmp.lt.s32.totalorder %s25, 7
        %s404 = scalar_select %p403, %s25, 7
        %s405 = smul.addr %s404, 2
        %s406 = smul.addr %s405, 4
        %s407 = scalar_lea.vmem %s0, %s406
        %p408 = pneg %p46
        %p409 = pneg %p43
        %s410 = ssub.s32 7, %s25
        %p411 = scmp.lt.s32.totalorder %s410, 7
        %s412 = scalar_select %p411, %s410, 7
        %s413 = smul.addr %s412, 2
        %s414 = smul.addr %s413, 4
        %s415 = scalar_lea.vmem %s1, %s414
        %p416 = pneg %p74
        %p417 = pneg %p71
        %p418 = pneg %p95
        %p419 = pneg %p92
        %p420 = pneg %p116
        %p421 = pneg %p113
        %p422 = pneg %p137
        %p423 = pneg %p134
        %p424 = pneg %p158
        %p425 = pneg %p155
        %p426 = pneg %p179
        %p427 = pneg %p176
        %p428 = pneg %p200
        %p429 = pneg %p197
        %p430 = pneg %p221
        %p431 = pneg %p218
        %p432 = pneg %p242
        %p433 = pneg %p239
        %p434 = pneg %p263
        %p435 = pneg %p260
        %p436 = pneg %p284
        %p437 = pneg %p281
        %p438 = pneg %p305
        %p439 = pneg %p302
        %p440 = pneg %p326
        %p441 = pneg %p323
        %p442 = scmp.lt.s32.totalorder %s25, 7
        %s443 = scalar_select %p442, %s25, 7
        %s444 = smul.addr %s443, 2
        %s445 = smul.addr %s444, 4
        %s446 = scalar_lea.vmem %s0, %s445
        %s447 = ssub.s32 7, %s25
        %p448 = scmp.lt.s32.totalorder %s447, 7
        %s449 = scalar_select %p448, %s447, 7
        %s450 = smul.addr %s449, 2
        %s451 = smul.addr %s450, 4
        %s452 = scalar_lea.vmem %s1, %s451
        %s453 = ssub.s32 7, %s25
        %p455 = scmp.eq.s32.totalorder %s25, 0
        // Predicated region
        $region73: #{lstm_base_forward.3} parent=71 // pred_check
          %p456 = pneg %p455
        $region74: #{lstm_base_forward.3} parent=71 // pred_check_branch
          %458 = sbr.rel (%p456) target = $region76
        $region75: #{lstm_base_forward.3} parent=71 // pred_region
          %459 = vst [vmem:[#allocation2] sm:$0xff] 0.0
          %460 = vst [vmem:[#allocation3] sm:$0xff] 0.0
          %461 = vst [vmem:[#allocation4] sm:$0xff] 0.0
          %462 = vst [vmem:[#allocation5] sm:$0xff] 0.0
          %463 = vst [vmem:[#allocation6] sm:$0xff] 0.0
          %464 = vst [vmem:[#allocation7] sm:$0xff] 0.0
        $region76: #{lstm_base_forward.3} parent=71 // pred_fallthru
          _
        %v465 = vld [vmem:[%s2] sm:$0xff]
        %v466 = vstv %s25
        %vm467 = vcmp.lt.s32.totalorder %v466, %v465
        %s468 = ssub.s32 7, %s25
        %v469 = vstv %s468
        %vm470 = vcmp.lt.s32.totalorder %v469, %v465
        %v471 = vld [vmem:[%s446] sm:$0xff]
        %v472 = vld [vmem:[%s3] sm:$0xff]
        %v473 = vld [vmem:[%s3 + $0x8] sm:$0xff]
        %v474 = vld [vmem:[%s3 + $0x10] sm:$0xff]
        %v475 = vld [vmem:[%s3 + $0x18] sm:$0xff]
        %v476 = vld [vmem:[%s3 + $0x20] sm:$0xff]
        %v477 = vld [vmem:[%s3 + $0x28] sm:$0xff]
        %v478 = vld [vmem:[%s3 + $0x30] sm:$0xff]
        %v479 = vld [vmem:[%s3 + $0x38] sm:$0xff]
        %v480 = vld [vmem:[%s3 + $0x40] sm:$0xff]
        %v481 = vld [vmem:[%s3 + $0x48] sm:$0xff]
        %v482 = vld [vmem:[%s3 + $0x50] sm:$0xff]
        %v483 = vld [vmem:[%s3 + $0x58] sm:$0xff]
        %v484 = vld [vmem:[%s3 + $0x60] sm:$0xff]
        %v485 = vld [vmem:[%s3 + $0x68] sm:$0xff]
        %v486 = vld [vmem:[%s3 + $0x70] sm:$0xff]
        %v487 = vld [vmem:[%s3 + $0x78] sm:$0xff]
        %v488 = vld [vmem:[%s3 + $0x80] sm:$0xff]
        %v489 = vld [vmem:[%s3 + $0x88] sm:$0xff]
        %v490 = vld [vmem:[%s3 + $0x90] sm:$0xff]
        %v491 = vld [vmem:[%s3 + $0x98] sm:$0xff]
        %v492 = vld [vmem:[%s3 + $0xa0] sm:$0xff]
        %v493 = vld [vmem:[%s3 + $0xa8] sm:$0xff]
        %v494 = vld [vmem:[%s3 + $0xb0] sm:$0xff]
        %v495 = vld [vmem:[%s3 + $0xb8] sm:$0xff]
        %v496 = vld [vmem:[%s3 + $0xc0] sm:$0xff]
        %v497 = vld [vmem:[%s3 + $0xc8] sm:$0xff]
        %v498 = vld [vmem:[%s3 + $0xd0] sm:$0xff]
        %v499 = vld [vmem:[%s3 + $0xd8] sm:$0xff]
        %v500 = vld [vmem:[%s3 + $0xe0] sm:$0xff]
        %v501 = vld [vmem:[%s3 + $0xe8] sm:$0xff]
        %v502 = vld [vmem:[%s3 + $0xf0] sm:$0xff]
        %v503 = vld [vmem:[%s3 + $0xf8] sm:$0xff]
        %v504 = vld [vmem:[%s3 + $0x100] sm:$0xff]
        %v505 = vld [vmem:[%s3 + $0x108] sm:$0xff]
        %v506 = vld [vmem:[%s3 + $0x110] sm:$0xff]
        %v507 = vld [vmem:[%s3 + $0x118] sm:$0xff]
        %v508 = vld [vmem:[%s3 + $0x120] sm:$0xff]
        %v509 = vld [vmem:[%s3 + $0x128] sm:$0xff]
        %v510 = vld [vmem:[%s3 + $0x130] sm:$0xff]
        %v511 = vld [vmem:[%s3 + $0x138] sm:$0xff]
        %v512 = vld [vmem:[%s3 + $0x140] sm:$0xff]
        %v513 = vld [vmem:[%s3 + $0x148] sm:$0xff]
        %v514 = vld [vmem:[%s3 + $0x150] sm:$0xff]
        %v515 = vld [vmem:[%s3 + $0x158] sm:$0xff]
        %v516 = vld [vmem:[%s3 + $0x160] sm:$0xff]
        %v517 = vld [vmem:[%s3 + $0x168] sm:$0xff]
        %v518 = vld [vmem:[%s3 + $0x170] sm:$0xff]
        %v519 = vld [vmem:[%s3 + $0x178] sm:$0xff]
        %v520 = vld [vmem:[%s3 + $0x180] sm:$0xff]
        %v521 = vld [vmem:[%s3 + $0x188] sm:$0xff]
        %v522 = vld [vmem:[%s3 + $0x190] sm:$0xff]
        %v523 = vld [vmem:[%s3 + $0x198] sm:$0xff]
        %v524 = vld [vmem:[%s3 + $0x1a0] sm:$0xff]
        %v525 = vld [vmem:[%s3 + $0x1a8] sm:$0xff]
        %v526 = vld [vmem:[%s3 + $0x1b0] sm:$0xff]
        %v527 = vld [vmem:[%s3 + $0x1b8] sm:$0xff]
        %v528 = vld [vmem:[%s3 + $0x1c0] sm:$0xff]
        %v529 = vld [vmem:[%s3 + $0x1c8] sm:$0xff]
        %v530 = vld [vmem:[%s3 + $0x1d0] sm:$0xff]
        %v531 = vld [vmem:[%s3 + $0x1d8] sm:$0xff]
        %v532 = vld [vmem:[%s3 + $0x1e0] sm:$0xff]
        %v533 = vld [vmem:[%s3 + $0x1e8] sm:$0xff]
        %v534 = vld [vmem:[%s3 + $0x1f0] sm:$0xff]
        %v535 = vld [vmem:[%s3 + $0x1f8] sm:$0xff]
        %v536 = vld [vmem:[#allocation2] sm:$0xff]
        %v537 = vpack.c.bf16 %v536, %v536
        %v538 = vld [vmem:[%s4] sm:$0xff]
        %v539 = vld [vmem:[%s4 + $0x8] sm:$0xff]
        %v540 = vld [vmem:[%s4 + $0x10] sm:$0xff]
        %v541 = vld [vmem:[%s4 + $0x18] sm:$0xff]
        %v542 = vld [vmem:[%s4 + $0x20] sm:$0xff]
        %v543 = vld [vmem:[%s4 + $0x28] sm:$0xff]
        %v544 = vld [vmem:[%s4 + $0x30] sm:$0xff]
        %v545 = vld [vmem:[%s4 + $0x38] sm:$0xff]
        %v546 = vld [vmem:[%s4 + $0x40] sm:$0xff]
        %v547 = vld [vmem:[%s4 + $0x48] sm:$0xff]
        %v548 = vld [vmem:[%s4 + $0x50] sm:$0xff]
        %v549 = vld [vmem:[%s4 + $0x58] sm:$0xff]
        %v550 = vld [vmem:[%s4 + $0x60] sm:$0xff]
        %v551 = vld [vmem:[%s4 + $0x68] sm:$0xff]
        %v552 = vld [vmem:[%s4 + $0x70] sm:$0xff]
        %v553 = vld [vmem:[%s4 + $0x78] sm:$0xff]
        %v554 = vld [vmem:[%s4 + $0x80] sm:$0xff]
        %v555 = vld [vmem:[%s4 + $0x88] sm:$0xff]
        %v556 = vld [vmem:[%s4 + $0x90] sm:$0xff]
        %v557 = vld [vmem:[%s4 + $0x98] sm:$0xff]
        %v558 = vld [vmem:[%s4 + $0xa0] sm:$0xff]
        %v559 = vld [vmem:[%s4 + $0xa8] sm:$0xff]
        %v560 = vld [vmem:[%s4 + $0xb0] sm:$0xff]
        %v561 = vld [vmem:[%s4 + $0xb8] sm:$0xff]
        %v562 = vld [vmem:[%s4 + $0xc0] sm:$0xff]
        %v563 = vld [vmem:[%s4 + $0xc8] sm:$0xff]
        %v564 = vld [vmem:[%s4 + $0xd0] sm:$0xff]
        %v565 = vld [vmem:[%s4 + $0xd8] sm:$0xff]
        %v566 = vld [vmem:[%s4 + $0xe0] sm:$0xff]
        %v567 = vld [vmem:[%s4 + $0xe8] sm:$0xff]
        %v568 = vld [vmem:[%s4 + $0xf0] sm:$0xff]
        %v569 = vld [vmem:[%s4 + $0xf8] sm:$0xff]
        %v602 = vunpack.c.l.b16 %v538
        %v603 = vunpack.c.h.b16 %v538
        %v604 = vunpack.c.l.b16 %v539
        %v605 = vunpack.c.h.b16 %v539
        %v606 = vunpack.c.l.b16 %v540
        %v607 = vunpack.c.h.b16 %v540
        %v608 = vunpack.c.l.b16 %v541
        %v609 = vunpack.c.h.b16 %v541
        %v610 = vunpack.c.l.b16 %v542
        %v611 = vunpack.c.h.b16 %v542
        %v612 = vunpack.c.l.b16 %v543
        %v613 = vunpack.c.h.b16 %v543
        %v614 = vunpack.c.l.b16 %v544
        %v615 = vunpack.c.h.b16 %v544
        %v616 = vunpack.c.l.b16 %v545
        %v617 = vunpack.c.h.b16 %v545
        %v618 = vunpack.c.l.b16 %v546
        %v619 = vunpack.c.h.b16 %v546
        %v620 = vunpack.c.l.b16 %v547
        %v621 = vunpack.c.h.b16 %v547
        %v622 = vunpack.c.l.b16 %v548
        %v623 = vunpack.c.h.b16 %v548
        %v624 = vunpack.c.l.b16 %v549
        %v625 = vunpack.c.h.b16 %v549
        %v626 = vunpack.c.l.b16 %v550
        %v627 = vunpack.c.h.b16 %v550
        %v628 = vunpack.c.l.b16 %v551
        %v629 = vunpack.c.h.b16 %v551
        %v630 = vunpack.c.l.b16 %v552
        %v631 = vunpack.c.h.b16 %v552
        %v632 = vunpack.c.l.b16 %v553
        %v633 = vunpack.c.h.b16 %v553
        %v634 = vunpack.c.l.b16 %v554
        %v635 = vunpack.c.h.b16 %v554
        %v636 = vunpack.c.l.b16 %v555
        %v637 = vunpack.c.h.b16 %v555
        %v638 = vunpack.c.l.b16 %v556
        %v639 = vunpack.c.h.b16 %v556
        %v640 = vunpack.c.l.b16 %v557
        %v641 = vunpack.c.h.b16 %v557
        %v642 = vunpack.c.l.b16 %v558
        %v643 = vunpack.c.h.b16 %v558
        %v644 = vunpack.c.l.b16 %v559
        %v645 = vunpack.c.h.b16 %v559
        %v646 = vunpack.c.l.b16 %v560
        %v647 = vunpack.c.h.b16 %v560
        %v648 = vunpack.c.l.b16 %v561
        %v649 = vunpack.c.h.b16 %v561
        %v650 = vunpack.c.l.b16 %v562
        %v651 = vunpack.c.h.b16 %v562
        %v652 = vunpack.c.l.b16 %v563
        %v653 = vunpack.c.h.b16 %v563
        %v654 = vunpack.c.l.b16 %v564
        %v655 = vunpack.c.h.b16 %v564
        %v656 = vunpack.c.l.b16 %v565
        %v657 = vunpack.c.h.b16 %v565
        %v658 = vunpack.c.l.b16 %v566
        %v659 = vunpack.c.h.b16 %v566
        %v660 = vunpack.c.l.b16 %v567
        %v661 = vunpack.c.h.b16 %v567
        %v662 = vunpack.c.l.b16 %v568
        %v663 = vunpack.c.h.b16 %v568
        %v664 = vunpack.c.l.b16 %v569
        %v665 = vunpack.c.h.b16 %v569
        %v666 = vpack.c.b16 %v606, %v602
        %v667 = vpack.c.b16 %v607, %v603
        %v668 = vpack.c.b16 %v608, %v604
        %v669 = vpack.c.b16 %v609, %v605
        %v670 = vpack.c.b16 %v614, %v610
        %v671 = vpack.c.b16 %v615, %v611
        %v672 = vpack.c.b16 %v616, %v612
        %v673 = vpack.c.b16 %v617, %v613
        %v674 = vpack.c.b16 %v622, %v618
        %v675 = vpack.c.b16 %v623, %v619
        %v676 = vpack.c.b16 %v624, %v620
        %v677 = vpack.c.b16 %v625, %v621
        %v678 = vpack.c.b16 %v630, %v626
        %v679 = vpack.c.b16 %v631, %v627
        %v680 = vpack.c.b16 %v632, %v628
        %v681 = vpack.c.b16 %v633, %v629
        %v682 = vpack.c.b16 %v638, %v634
        %v683 = vpack.c.b16 %v639, %v635
        %v684 = vpack.c.b16 %v640, %v636
        %v685 = vpack.c.b16 %v641, %v637
        %v686 = vpack.c.b16 %v646, %v642
        %v687 = vpack.c.b16 %v647, %v643
        %v688 = vpack.c.b16 %v648, %v644
        %v689 = vpack.c.b16 %v649, %v645
        %v690 = vpack.c.b16 %v654, %v650
        %v691 = vpack.c.b16 %v655, %v651
        %v692 = vpack.c.b16 %v656, %v652
        %v693 = vpack.c.b16 %v657, %v653
        %v694 = vpack.c.b16 %v662, %v658
        %v695 = vpack.c.b16 %v663, %v659
        %v696 = vpack.c.b16 %v664, %v660
        %v697 = vpack.c.b16 %v665, %v661
        %730 = vmatprep.subr.bf16.mxu0 %v667
        %731 = vmatpush1.bf16.msra.mxu0 %v666
        %732 = vmatprep.subr.bf16.mxu0 %v671
        %733 = vmatpush1.bf16.msra.mxu0 %v670
        %734 = vmatprep.subr.bf16.mxu0 %v675
        %735 = vmatpush1.bf16.msra.mxu0 %v674
        %736 = vmatprep.subr.bf16.mxu0 %v679
        %737 = vmatpush1.bf16.msra.mxu0 %v678
        %738 = vmatprep.subr.bf16.mxu0 %v683
        %739 = vmatpush1.bf16.msra.mxu0 %v682
        %740 = vmatprep.subr.bf16.mxu0 %v687
        %741 = vmatpush1.bf16.msra.mxu0 %v686
        %742 = vmatprep.subr.bf16.mxu0 %v691
        %743 = vmatpush1.bf16.msra.mxu0 %v690
        %744 = vmatprep.subr.bf16.mxu0 %v695
        %745 = vmatpush1.bf16.msra.mxu0 %v694
        %746 = vmatprep.subr.bf16.mxu0 0
        %747 = vmatpush1.bf16.msra.mxu0 0
        %748 = vmatprep.subr.bf16.mxu0 0
        %749 = vmatpush1.bf16.msra.mxu0 0
        %750 = vmatprep.subr.bf16.mxu0 0
        %751 = vmatpush1.bf16.msra.mxu0 0
        %752 = vmatprep.subr.bf16.mxu0 0
        %753 = vmatpush1.bf16.msra.mxu0 0
        %754 = vmatprep.subr.bf16.mxu0 0
        %755 = vmatpush1.bf16.msra.mxu0 0
        %756 = vmatprep.subr.bf16.mxu0 0
        %757 = vmatpush1.bf16.msra.mxu0 0
        %758 = vmatprep.subr.bf16.mxu0 0
        %759 = vmatpush1.bf16.msra.mxu0 0
        %760 = vmatprep.subr.bf16.mxu0 0
        %761 = vmatpush1.bf16.msra.mxu0 0
        %762 = vmatprep.mubr.bf16.mxu0 0
        %763 = vmatmul.mubr.bf16.gmra.mrb[0].mxu0 %v537
        %v764 = vpop.f32.mrb[0].mxu0
        %v765 = vadd.f32 0.0, %v764
        %v766 = vpop.f32.mrb[0].mxu0
        %v767 = vadd.f32 0.0, %v766
        %v768 = vpop.f32.mrb[0].mxu0
        %v769 = vpop.f32.mrb[0].mxu0
        %770 = vdwg.mxu0
        %771 = vmatprep.subr.bf16.mxu0 %v669
        %772 = vmatpush1.bf16.msra.mxu0 %v668
        %773 = vmatprep.subr.bf16.mxu0 %v673
        %774 = vmatpush1.bf16.msra.mxu0 %v672
        %775 = vmatprep.subr.bf16.mxu0 %v677
        %776 = vmatpush1.bf16.msra.mxu0 %v676
        %777 = vmatprep.subr.bf16.mxu0 %v681
        %778 = vmatpush1.bf16.msra.mxu0 %v680
        %779 = vmatprep.subr.bf16.mxu0 %v685
        %780 = vmatpush1.bf16.msra.mxu0 %v684
        %781 = vmatprep.subr.bf16.mxu0 %v689
        %782 = vmatpush1.bf16.msra.mxu0 %v688
        %783 = vmatprep.subr.bf16.mxu0 %v693
        %784 = vmatpush1.bf16.msra.mxu0 %v692
        %785 = vmatprep.subr.bf16.mxu0 %v697
        %786 = vmatpush1.bf16.msra.mxu0 %v696
        %787 = vmatprep.subr.bf16.mxu0 0
        %788 = vmatpush1.bf16.msra.mxu0 0
        %789 = vmatprep.subr.bf16.mxu0 0
        %790 = vmatpush1.bf16.msra.mxu0 0
        %791 = vmatprep.subr.bf16.mxu0 0
        %792 = vmatpush1.bf16.msra.mxu0 0
        %793 = vmatprep.subr.bf16.mxu0 0
        %794 = vmatpush1.bf16.msra.mxu0 0
        %795 = vmatprep.subr.bf16.mxu0 0
        %796 = vmatpush1.bf16.msra.mxu0 0
        %797 = vmatprep.subr.bf16.mxu0 0
        %798 = vmatpush1.bf16.msra.mxu0 0
        %799 = vmatprep.subr.bf16.mxu0 0
        %800 = vmatpush1.bf16.msra.mxu0 0
        %801 = vmatprep.subr.bf16.mxu0 0
        %802 = vmatpush1.bf16.msra.mxu0 0
        %803 = vmatprep.mubr.bf16.mxu0 0
        %804 = vmatmul.mubr.bf16.gmra.mrb[0].mxu0 %v537
        %v805 = vpop.f32.mrb[0].mxu0
        %v806 = vadd.f32 0.0, %v805
        %v807 = vpop.f32.mrb[0].mxu0
        %v808 = vadd.f32 0.0, %v807
        %v809 = vpop.f32.mrb[0].mxu0
        %v810 = vpop.f32.mrb[0].mxu0
        %811 = vdwg.mxu0
        %v813 = vunpack.c.l.b16 %v471
        %v814 = vunpack.c.h.b16 %v471
        %v815 = vpack.c.b16 %v813, %v813
        %v816 = vpack.c.b16 %v814, %v814
        %v883 = vunpack.c.l.b16 %v472
        %v884 = vunpack.c.h.b16 %v472
        %v885 = vunpack.c.l.b16 %v473
        %v886 = vunpack.c.h.b16 %v473
        %v887 = vunpack.c.l.b16 %v474
        %v888 = vunpack.c.h.b16 %v474
        %v889 = vunpack.c.l.b16 %v475
        %v890 = vunpack.c.h.b16 %v475
        %v891 = vunpack.c.l.b16 %v476
        %v892 = vunpack.c.h.b16 %v476
        %v893 = vunpack.c.l.b16 %v477
        %v894 = vunpack.c.h.b16 %v477
        %v895 = vunpack.c.l.b16 %v478
        %v896 = vunpack.c.h.b16 %v478
        %v897 = vunpack.c.l.b16 %v479
        %v898 = vunpack.c.h.b16 %v479
        %v899 = vunpack.c.l.b16 %v480
        %v900 = vunpack.c.h.b16 %v480
        %v901 = vunpack.c.l.b16 %v481
        %v902 = vunpack.c.h.b16 %v481
        %v903 = vunpack.c.l.b16 %v482
        %v904 = vunpack.c.h.b16 %v482
        %v905 = vunpack.c.l.b16 %v483
        %v906 = vunpack.c.h.b16 %v483
        %v907 = vunpack.c.l.b16 %v484
        %v908 = vunpack.c.h.b16 %v484
        %v909 = vunpack.c.l.b16 %v485
        %v910 = vunpack.c.h.b16 %v485
        %v911 = vunpack.c.l.b16 %v486
        %v912 = vunpack.c.h.b16 %v486
        %v913 = vunpack.c.l.b16 %v487
        %v914 = vunpack.c.h.b16 %v487
        %v915 = vunpack.c.l.b16 %v488
        %v916 = vunpack.c.h.b16 %v488
        %v917 = vunpack.c.l.b16 %v489
        %v918 = vunpack.c.h.b16 %v489
        %v919 = vunpack.c.l.b16 %v490
        %v920 = vunpack.c.h.b16 %v490
        %v921 = vunpack.c.l.b16 %v491
        %v922 = vunpack.c.h.b16 %v491
        %v923 = vunpack.c.l.b16 %v492
        %v924 = vunpack.c.h.b16 %v492
        %v925 = vunpack.c.l.b16 %v493
        %v926 = vunpack.c.h.b16 %v493
        %v927 = vunpack.c.l.b16 %v494
        %v928 = vunpack.c.h.b16 %v494
        %v929 = vunpack.c.l.b16 %v495
        %v930 = vunpack.c.h.b16 %v495
        %v931 = vunpack.c.l.b16 %v496
        %v932 = vunpack.c.h.b16 %v496
        %v933 = vunpack.c.l.b16 %v497
        %v934 = vunpack.c.h.b16 %v497
        %v935 = vunpack.c.l.b16 %v498
        %v936 = vunpack.c.h.b16 %v498
        %v937 = vunpack.c.l.b16 %v499
        %v938 = vunpack.c.h.b16 %v499
        %v939 = vunpack.c.l.b16 %v500
        %v940 = vunpack.c.h.b16 %v500
        %v941 = vunpack.c.l.b16 %v501
        %v942 = vunpack.c.h.b16 %v501
        %v943 = vunpack.c.l.b16 %v502
        %v944 = vunpack.c.h.b16 %v502
        %v945 = vunpack.c.l.b16 %v503
        %v946 = vunpack.c.h.b16 %v503
        %v947 = vunpack.c.l.b16 %v504
        %v948 = vunpack.c.h.b16 %v504
        %v949 = vunpack.c.l.b16 %v505
        %v950 = vunpack.c.h.b16 %v505
        %v951 = vunpack.c.l.b16 %v506
        %v952 = vunpack.c.h.b16 %v506
        %v953 = vunpack.c.l.b16 %v507
        %v954 = vunpack.c.h.b16 %v507
        %v955 = vunpack.c.l.b16 %v508
        %v956 = vunpack.c.h.b16 %v508
        %v957 = vunpack.c.l.b16 %v509
        %v958 = vunpack.c.h.b16 %v509
        %v959 = vunpack.c.l.b16 %v510
        %v960 = vunpack.c.h.b16 %v510
        %v961 = vunpack.c.l.b16 %v511
        %v962 = vunpack.c.h.b16 %v511
        %v963 = vunpack.c.l.b16 %v512
        %v964 = vunpack.c.h.b16 %v512
        %v965 = vunpack.c.l.b16 %v513
        %v966 = vunpack.c.h.b16 %v513
        %v967 = vunpack.c.l.b16 %v514
        %v968 = vunpack.c.h.b16 %v514
        %v969 = vunpack.c.l.b16 %v515
        %v970 = vunpack.c.h.b16 %v515
        %v971 = vunpack.c.l.b16 %v516
        %v972 = vunpack.c.h.b16 %v516
        %v973 = vunpack.c.l.b16 %v517
        %v974 = vunpack.c.h.b16 %v517
        %v975 = vunpack.c.l.b16 %v518
        %v976 = vunpack.c.h.b16 %v518
        %v977 = vunpack.c.l.b16 %v519
        %v978 = vunpack.c.h.b16 %v519
        %v979 = vunpack.c.l.b16 %v520
        %v980 = vunpack.c.h.b16 %v520
        %v981 = vunpack.c.l.b16 %v521
        %v982 = vunpack.c.h.b16 %v521
        %v983 = vunpack.c.l.b16 %v522
        %v984 = vunpack.c.h.b16 %v522
        %v985 = vunpack.c.l.b16 %v523
        %v986 = vunpack.c.h.b16 %v523
        %v987 = vunpack.c.l.b16 %v524
        %v988 = vunpack.c.h.b16 %v524
        %v989 = vunpack.c.l.b16 %v525
        %v990 = vunpack.c.h.b16 %v525
        %v991 = vunpack.c.l.b16 %v526
        %v992 = vunpack.c.h.b16 %v526
        %v993 = vunpack.c.l.b16 %v527
        %v994 = vunpack.c.h.b16 %v527
        %v995 = vunpack.c.l.b16 %v528
        %v996 = vunpack.c.h.b16 %v528
        %v997 = vunpack.c.l.b16 %v529
        %v998 = vunpack.c.h.b16 %v529
        %v999 = vunpack.c.l.b16 %v530
        %v1000 = vunpack.c.h.b16 %v530
        %v1001 = vunpack.c.l.b16 %v531
        %v1002 = vunpack.c.h.b16 %v531
        %v1003 = vunpack.c.l.b16 %v532
        %v1004 = vunpack.c.h.b16 %v532
        %v1005 = vunpack.c.l.b16 %v533
        %v1006 = vunpack.c.h.b16 %v533
        %v1007 = vunpack.c.l.b16 %v534
        %v1008 = vunpack.c.h.b16 %v534
        %v1009 = vunpack.c.l.b16 %v535
        %v1010 = vunpack.c.h.b16 %v535
        %v1011 = vpack.c.b16 %v887, %v883
        %v1012 = vpack.c.b16 %v888, %v884
        %v1013 = vpack.c.b16 %v889, %v885
        %v1014 = vpack.c.b16 %v890, %v886
        %v1015 = vpack.c.b16 %v895, %v891
        %v1016 = vpack.c.b16 %v896, %v892
        %v1017 = vpack.c.b16 %v897, %v893
        %v1018 = vpack.c.b16 %v898, %v894
        %v1019 = vpack.c.b16 %v903, %v899
        %v1020 = vpack.c.b16 %v904, %v900
        %v1021 = vpack.c.b16 %v905, %v901
        %v1022 = vpack.c.b16 %v906, %v902
        %v1023 = vpack.c.b16 %v911, %v907
        %v1024 = vpack.c.b16 %v912, %v908
        %v1025 = vpack.c.b16 %v913, %v909
        %v1026 = vpack.c.b16 %v914, %v910
        %v1027 = vpack.c.b16 %v919, %v915
        %v1028 = vpack.c.b16 %v920, %v916
        %v1029 = vpack.c.b16 %v921, %v917
        %v1030 = vpack.c.b16 %v922, %v918
        %v1031 = vpack.c.b16 %v927, %v923
        %v1032 = vpack.c.b16 %v928, %v924
        %v1033 = vpack.c.b16 %v929, %v925
        %v1034 = vpack.c.b16 %v930, %v926
        %v1035 = vpack.c.b16 %v935, %v931
        %v1036 = vpack.c.b16 %v936, %v932
        %v1037 = vpack.c.b16 %v937, %v933
        %v1038 = vpack.c.b16 %v938, %v934
        %v1039 = vpack.c.b16 %v943, %v939
        %v1040 = vpack.c.b16 %v944, %v940
        %v1041 = vpack.c.b16 %v945, %v941
        %v1042 = vpack.c.b16 %v946, %v942
        %v1043 = vpack.c.b16 %v951, %v947
        %v1044 = vpack.c.b16 %v952, %v948
        %v1045 = vpack.c.b16 %v953, %v949
        %v1046 = vpack.c.b16 %v954, %v950
        %v1047 = vpack.c.b16 %v959, %v955
        %v1048 = vpack.c.b16 %v960, %v956
        %v1049 = vpack.c.b16 %v961, %v957
        %v1050 = vpack.c.b16 %v962, %v958
        %v1051 = vpack.c.b16 %v967, %v963
        %v1052 = vpack.c.b16 %v968, %v964
        %v1053 = vpack.c.b16 %v969, %v965
        %v1054 = vpack.c.b16 %v970, %v966
        %v1055 = vpack.c.b16 %v975, %v971
        %v1056 = vpack.c.b16 %v976, %v972
        %v1057 = vpack.c.b16 %v977, %v973
        %v1058 = vpack.c.b16 %v978, %v974
        %v1059 = vpack.c.b16 %v983, %v979
        %v1060 = vpack.c.b16 %v984, %v980
        %v1061 = vpack.c.b16 %v985, %v981
        %v1062 = vpack.c.b16 %v986, %v982
        %v1063 = vpack.c.b16 %v991, %v987
        %v1064 = vpack.c.b16 %v992, %v988
        %v1065 = vpack.c.b16 %v993, %v989
        %v1066 = vpack.c.b16 %v994, %v990
        %v1067 = vpack.c.b16 %v999, %v995
        %v1068 = vpack.c.b16 %v1000, %v996
        %v1069 = vpack.c.b16 %v1001, %v997
        %v1070 = vpack.c.b16 %v1002, %v998
        %v1071 = vpack.c.b16 %v1007, %v1003
        %v1072 = vpack.c.b16 %v1008, %v1004
        %v1073 = vpack.c.b16 %v1009, %v1005
        %v1074 = vpack.c.b16 %v1010, %v1006
        %1139 = vmatprep.subr.bf16.mxu0 %v1012
        %1140 = vmatpush1.bf16.msra.mxu0 %v1011
        %1141 = vmatprep.subr.bf16.mxu0 %v1016
        %1142 = vmatpush1.bf16.msra.mxu0 %v1015
        %1143 = vmatprep.subr.bf16.mxu0 %v1020
        %1144 = vmatpush1.bf16.msra.mxu0 %v1019
        %1145 = vmatprep.subr.bf16.mxu0 %v1024
        %1146 = vmatpush1.bf16.msra.mxu0 %v1023
        %1147 = vmatprep.subr.bf16.mxu0 %v1028
        %1148 = vmatpush1.bf16.msra.mxu0 %v1027
        %1149 = vmatprep.subr.bf16.mxu0 %v1032
        %1150 = vmatpush1.bf16.msra.mxu0 %v1031
        %1151 = vmatprep.subr.bf16.mxu0 %v1036
        %1152 = vmatpush1.bf16.msra.mxu0 %v1035
        %1153 = vmatprep.subr.bf16.mxu0 %v1040
        %1154 = vmatpush1.bf16.msra.mxu0 %v1039
        %1155 = vmatprep.subr.bf16.mxu0 %v1044
        %1156 = vmatpush1.bf16.msra.mxu0 %v1043
        %1157 = vmatprep.subr.bf16.mxu0 %v1048
        %1158 = vmatpush1.bf16.msra.mxu0 %v1047
        %1159 = vmatprep.subr.bf16.mxu0 %v1052
        %1160 = vmatpush1.bf16.msra.mxu0 %v1051
        %1161 = vmatprep.subr.bf16.mxu0 %v1056
        %1162 = vmatpush1.bf16.msra.mxu0 %v1055
        %1163 = vmatprep.subr.bf16.mxu0 %v1060
        %1164 = vmatpush1.bf16.msra.mxu0 %v1059
        %1165 = vmatprep.subr.bf16.mxu0 %v1064
        %1166 = vmatpush1.bf16.msra.mxu0 %v1063
        %1167 = vmatprep.subr.bf16.mxu0 %v1068
        %1168 = vmatpush1.bf16.msra.mxu0 %v1067
        %1169 = vmatprep.subr.bf16.mxu0 %v1072
        %1170 = vmatpush1.bf16.msra.mxu0 %v1071
        %1171 = vmatprep.mubr.bf16.mxu0 %v816
        %1172 = vmatmul.mubr.bf16.gmra.mrb[0].mxu0 %v815
        %v1173 = vpop.f32.mrb[0].mxu0
        %v1174 = vadd.f32 %v765, %v1173
        %v1175 = vpop.f32.mrb[0].mxu0
        %v1176 = vadd.f32 %v767, %v1175
        %v1177 = vpop.f32.mrb[0].mxu0
        %v1178 = vpop.f32.mrb[0].mxu0
        %1179 = vdwg.mxu0
        %1180 = vmatprep.subr.bf16.mxu0 %v1014
        %1181 = vmatpush1.bf16.msra.mxu0 %v1013
        %1182 = vmatprep.subr.bf16.mxu0 %v1018
        %1183 = vmatpush1.bf16.msra.mxu0 %v1017
        %1184 = vmatprep.subr.bf16.mxu0 %v1022
        %1185 = vmatpush1.bf16.msra.mxu0 %v1021
        %1186 = vmatprep.subr.bf16.mxu0 %v1026
        %1187 = vmatpush1.bf16.msra.mxu0 %v1025
        %1188 = vmatprep.subr.bf16.mxu0 %v1030
        %1189 = vmatpush1.bf16.msra.mxu0 %v1029
        %1190 = vmatprep.subr.bf16.mxu0 %v1034
        %1191 = vmatpush1.bf16.msra.mxu0 %v1033
        %1192 = vmatprep.subr.bf16.mxu0 %v1038
        %1193 = vmatpush1.bf16.msra.mxu0 %v1037
        %1194 = vmatprep.subr.bf16.mxu0 %v1042
        %1195 = vmatpush1.bf16.msra.mxu0 %v1041
        %1196 = vmatprep.subr.bf16.mxu0 %v1046
        %1197 = vmatpush1.bf16.msra.mxu0 %v1045
        %1198 = vmatprep.subr.bf16.mxu0 %v1050
        %1199 = vmatpush1.bf16.msra.mxu0 %v1049
        %1200 = vmatprep.subr.bf16.mxu0 %v1054
        %1201 = vmatpush1.bf16.msra.mxu0 %v1053
        %1202 = vmatprep.subr.bf16.mxu0 %v1058
        %1203 = vmatpush1.bf16.msra.mxu0 %v1057
        %1204 = vmatprep.subr.bf16.mxu0 %v1062
        %1205 = vmatpush1.bf16.msra.mxu0 %v1061
        %1206 = vmatprep.subr.bf16.mxu0 %v1066
        %1207 = vmatpush1.bf16.msra.mxu0 %v1065
        %1208 = vmatprep.subr.bf16.mxu0 %v1070
        %1209 = vmatpush1.bf16.msra.mxu0 %v1069
        %1210 = vmatprep.subr.bf16.mxu0 %v1074
        %1211 = vmatpush1.bf16.msra.mxu0 %v1073
        %1212 = vmatprep.mubr.bf16.mxu0 %v816
        %1213 = vmatmul.mubr.bf16.gmra.mrb[0].mxu0 %v815
        %v1214 = vpop.f32.mrb[0].mxu0
        %v1215 = vadd.f32 %v806, %v1214
        %v1216 = vpop.f32.mrb[0].mxu0
        %v1217 = vadd.f32 %v808, %v1216
        %v1218 = vpop.f32.mrb[0].mxu0
        %v1219 = vpop.f32.mrb[0].mxu0
        %1220 = vdwg.mxu0
        %v1221 = vld [vmem:[%s5] sm:$0xf]
        %v1223 = vlaneseq
        %v1224 = vshrl.u32 %v1223, 7
        %v1225 = vsub.s32 0, %v1224
        %v1226 = vrot.slane %v1221, %v1225
        %v1227 = vlaneseq
        %v1228 = vshrl.u32 %v1227, 7
        %v1229 = vsub.s32 1, %v1228
        %v1230 = vrot.slane %v1221, %v1229
        %v1231 = vlaneseq
        %v1232 = vshrl.u32 %v1231, 7
        %v1233 = vsub.s32 2, %v1232
        %v1234 = vrot.slane %v1221, %v1233
        %v1235 = vlaneseq
        %v1236 = vshrl.u32 %v1235, 7
        %v1237 = vsub.s32 3, %v1236
        %v1238 = vrot.slane %v1221, %v1237
        %v1243 = vadd.f32 %v1174, %v1226
        %v1244 = vadd.f32 %v1176, %v1230
        %v1245 = vadd.f32 %v1215, %v1234
        %v1246 = vadd.f32 %v1217, %v1238
        %v1247 = vld [vmem:[%s452] sm:$0xff]
        %v1248 = vld [vmem:[%s6] sm:$0xff]
        %v1249 = vld [vmem:[%s6 + $0x8] sm:$0xff]
        %v1250 = vld [vmem:[%s6 + $0x10] sm:$0xff]
        %v1251 = vld [vmem:[%s6 + $0x18] sm:$0xff]
        %v1252 = vld [vmem:[%s6 + $0x20] sm:$0xff]
        %v1253 = vld [vmem:[%s6 + $0x28] sm:$0xff]
        %v1254 = vld [vmem:[%s6 + $0x30] sm:$0xff]
        %v1255 = vld [vmem:[%s6 + $0x38] sm:$0xff]
        %v1256 = vld [vmem:[%s6 + $0x40] sm:$0xff]
        %v1257 = vld [vmem:[%s6 + $0x48] sm:$0xff]
        %v1258 = vld [vmem:[%s6 + $0x50] sm:$0xff]
        %v1259 = vld [vmem:[%s6 + $0x58] sm:$0xff]
        %v1260 = vld [vmem:[%s6 + $0x60] sm:$0xff]
        %v1261 = vld [vmem:[%s6 + $0x68] sm:$0xff]
        %v1262 = vld [vmem:[%s6 + $0x70] sm:$0xff]
        %v1263 = vld [vmem:[%s6 + $0x78] sm:$0xff]
        %v1264 = vld [vmem:[%s6 + $0x80] sm:$0xff]
        %v1265 = vld [vmem:[%s6 + $0x88] sm:$0xff]
        %v1266 = vld [vmem:[%s6 + $0x90] sm:$0xff]
        %v1267 = vld [vmem:[%s6 + $0x98] sm:$0xff]
        %v1268 = vld [vmem:[%s6 + $0xa0] sm:$0xff]
        %v1269 = vld [vmem:[%s6 + $0xa8] sm:$0xff]
        %v1270 = vld [vmem:[%s6 + $0xb0] sm:$0xff]
        %v1271 = vld [vmem:[%s6 + $0xb8] sm:$0xff]
        %v1272 = vld [vmem:[%s6 + $0xc0] sm:$0xff]
        %v1273 = vld [vmem:[%s6 + $0xc8] sm:$0xff]
        %v1274 = vld [vmem:[%s6 + $0xd0] sm:$0xff]
        %v1275 = vld [vmem:[%s6 + $0xd8] sm:$0xff]
        %v1276 = vld [vmem:[%s6 + $0xe0] sm:$0xff]
        %v1277 = vld [vmem:[%s6 + $0xe8] sm:$0xff]
        %v1278 = vld [vmem:[%s6 + $0xf0] sm:$0xff]
        %v1279 = vld [vmem:[%s6 + $0xf8] sm:$0xff]
        %v1280 = vld [vmem:[%s6 + $0x100] sm:$0xff]
        %v1281 = vld [vmem:[%s6 + $0x108] sm:$0xff]
        %v1282 = vld [vmem:[%s6 + $0x110] sm:$0xff]
        %v1283 = vld [vmem:[%s6 + $0x118] sm:$0xff]
        %v1284 = vld [vmem:[%s6 + $0x120] sm:$0xff]
        %v1285 = vld [vmem:[%s6 + $0x128] sm:$0xff]
        %v1286 = vld [vmem:[%s6 + $0x130] sm:$0xff]
        %v1287 = vld [vmem:[%s6 + $0x138] sm:$0xff]
        %v1288 = vld [vmem:[%s6 + $0x140] sm:$0xff]
        %v1289 = vld [vmem:[%s6 + $0x148] sm:$0xff]
        %v1290 = vld [vmem:[%s6 + $0x150] sm:$0xff]
        %v1291 = vld [vmem:[%s6 + $0x158] sm:$0xff]
        %v1292 = vld [vmem:[%s6 + $0x160] sm:$0xff]
        %v1293 = vld [vmem:[%s6 + $0x168] sm:$0xff]
        %v1294 = vld [vmem:[%s6 + $0x170] sm:$0xff]
        %v1295 = vld [vmem:[%s6 + $0x178] sm:$0xff]
        %v1296 = vld [vmem:[%s6 + $0x180] sm:$0xff]
        %v1297 = vld [vmem:[%s6 + $0x188] sm:$0xff]
        %v1298 = vld [vmem:[%s6 + $0x190] sm:$0xff]
        %v1299 = vld [vmem:[%s6 + $0x198] sm:$0xff]
        %v1300 = vld [vmem:[%s6 + $0x1a0] sm:$0xff]
        %v1301 = vld [vmem:[%s6 + $0x1a8] sm:$0xff]
        %v1302 = vld [vmem:[%s6 + $0x1b0] sm:$0xff]
        %v1303 = vld [vmem:[%s6 + $0x1b8] sm:$0xff]
        %v1304 = vld [vmem:[%s6 + $0x1c0] sm:$0xff]
        %v1305 = vld [vmem:[%s6 + $0x1c8] sm:$0xff]
        %v1306 = vld [vmem:[%s6 + $0x1d0] sm:$0xff]
        %v1307 = vld [vmem:[%s6 + $0x1d8] sm:$0xff]
        %v1308 = vld [vmem:[%s6 + $0x1e0] sm:$0xff]
        %v1309 = vld [vmem:[%s6 + $0x1e8] sm:$0xff]
        %v1310 = vld [vmem:[%s6 + $0x1f0] sm:$0xff]
        %v1311 = vld [vmem:[%s6 + $0x1f8] sm:$0xff]
        %v1312 = vld [vmem:[#allocation4] sm:$0xff]
        %v1313 = vpack.c.bf16 %v1312, %v1312
        %v1314 = vld [vmem:[%s7] sm:$0xff]
        %v1315 = vld [vmem:[%s7 + $0x8] sm:$0xff]
        %v1316 = vld [vmem:[%s7 + $0x10] sm:$0xff]
        %v1317 = vld [vmem:[%s7 + $0x18] sm:$0xff]
        %v1318 = vld [vmem:[%s7 + $0x20] sm:$0xff]
        %v1319 = vld [vmem:[%s7 + $0x28] sm:$0xff]
        %v1320 = vld [vmem:[%s7 + $0x30] sm:$0xff]
        %v1321 = vld [vmem:[%s7 + $0x38] sm:$0xff]
        %v1322 = vld [vmem:[%s7 + $0x40] sm:$0xff]
        %v1323 = vld [vmem:[%s7 + $0x48] sm:$0xff]
        %v1324 = vld [vmem:[%s7 + $0x50] sm:$0xff]
        %v1325 = vld [vmem:[%s7 + $0x58] sm:$0xff]
        %v1326 = vld [vmem:[%s7 + $0x60] sm:$0xff]
        %v1327 = vld [vmem:[%s7 + $0x68] sm:$0xff]
        %v1328 = vld [vmem:[%s7 + $0x70] sm:$0xff]
        %v1329 = vld [vmem:[%s7 + $0x78] sm:$0xff]
        %v1330 = vld [vmem:[%s7 + $0x80] sm:$0xff]
        %v1331 = vld [vmem:[%s7 + $0x88] sm:$0xff]
        %v1332 = vld [vmem:[%s7 + $0x90] sm:$0xff]
        %v1333 = vld [vmem:[%s7 + $0x98] sm:$0xff]
        %v1334 = vld [vmem:[%s7 + $0xa0] sm:$0xff]
        %v1335 = vld [vmem:[%s7 + $0xa8] sm:$0xff]
        %v1336 = vld [vmem:[%s7 + $0xb0] sm:$0xff]
        %v1337 = vld [vmem:[%s7 + $0xb8] sm:$0xff]
        %v1338 = vld [vmem:[%s7 + $0xc0] sm:$0xff]
        %v1339 = vld [vmem:[%s7 + $0xc8] sm:$0xff]
        %v1340 = vld [vmem:[%s7 + $0xd0] sm:$0xff]
        %v1341 = vld [vmem:[%s7 + $0xd8] sm:$0xff]
        %v1342 = vld [vmem:[%s7 + $0xe0] sm:$0xff]
        %v1343 = vld [vmem:[%s7 + $0xe8] sm:$0xff]
        %v1344 = vld [vmem:[%s7 + $0xf0] sm:$0xff]
        %v1345 = vld [vmem:[%s7 + $0xf8] sm:$0xff]
        %v1378 = vunpack.c.l.b16 %v1314
        %v1379 = vunpack.c.h.b16 %v1314
        %v1380 = vunpack.c.l.b16 %v1315
        %v1381 = vunpack.c.h.b16 %v1315
        %v1382 = vunpack.c.l.b16 %v1316
        %v1383 = vunpack.c.h.b16 %v1316
        %v1384 = vunpack.c.l.b16 %v1317
        %v1385 = vunpack.c.h.b16 %v1317
        %v1386 = vunpack.c.l.b16 %v1318
        %v1387 = vunpack.c.h.b16 %v1318
        %v1388 = vunpack.c.l.b16 %v1319
        %v1389 = vunpack.c.h.b16 %v1319
        %v1390 = vunpack.c.l.b16 %v1320
        %v1391 = vunpack.c.h.b16 %v1320
        %v1392 = vunpack.c.l.b16 %v1321
        %v1393 = vunpack.c.h.b16 %v1321
        %v1394 = vunpack.c.l.b16 %v1322
        %v1395 = vunpack.c.h.b16 %v1322
        %v1396 = vunpack.c.l.b16 %v1323
        %v1397 = vunpack.c.h.b16 %v1323
        %v1398 = vunpack.c.l.b16 %v1324
        %v1399 = vunpack.c.h.b16 %v1324
        %v1400 = vunpack.c.l.b16 %v1325
        %v1401 = vunpack.c.h.b16 %v1325
        %v1402 = vunpack.c.l.b16 %v1326
        %v1403 = vunpack.c.h.b16 %v1326
        %v1404 = vunpack.c.l.b16 %v1327
        %v1405 = vunpack.c.h.b16 %v1327
        %v1406 = vunpack.c.l.b16 %v1328
        %v1407 = vunpack.c.h.b16 %v1328
        %v1408 = vunpack.c.l.b16 %v1329
        %v1409 = vunpack.c.h.b16 %v1329
        %v1410 = vunpack.c.l.b16 %v1330
        %v1411 = vunpack.c.h.b16 %v1330
        %v1412 = vunpack.c.l.b16 %v1331
        %v1413 = vunpack.c.h.b16 %v1331
        %v1414 = vunpack.c.l.b16 %v1332
        %v1415 = vunpack.c.h.b16 %v1332
        %v1416 = vunpack.c.l.b16 %v1333
        %v1417 = vunpack.c.h.b16 %v1333
        %v1418 = vunpack.c.l.b16 %v1334
        %v1419 = vunpack.c.h.b16 %v1334
        %v1420 = vunpack.c.l.b16 %v1335
        %v1421 = vunpack.c.h.b16 %v1335
        %v1422 = vunpack.c.l.b16 %v1336
        %v1423 = vunpack.c.h.b16 %v1336
        %v1424 = vunpack.c.l.b16 %v1337
        %v1425 = vunpack.c.h.b16 %v1337
        %v1426 = vunpack.c.l.b16 %v1338
        %v1427 = vunpack.c.h.b16 %v1338
        %v1428 = vunpack.c.l.b16 %v1339
        %v1429 = vunpack.c.h.b16 %v1339
        %v1430 = vunpack.c.l.b16 %v1340
        %v1431 = vunpack.c.h.b16 %v1340
        %v1432 = vunpack.c.l.b16 %v1341
        %v1433 = vunpack.c.h.b16 %v1341
        %v1434 = vunpack.c.l.b16 %v1342
        %v1435 = vunpack.c.h.b16 %v1342
        %v1436 = vunpack.c.l.b16 %v1343
        %v1437 = vunpack.c.h.b16 %v1343
        %v1438 = vunpack.c.l.b16 %v1344
        %v1439 = vunpack.c.h.b16 %v1344
        %v1440 = vunpack.c.l.b16 %v1345
        %v1441 = vunpack.c.h.b16 %v1345
        %v1442 = vpack.c.b16 %v1382, %v1378
        %v1443 = vpack.c.b16 %v1383, %v1379
        %v1444 = vpack.c.b16 %v1384, %v1380
        %v1445 = vpack.c.b16 %v1385, %v1381
        %v1446 = vpack.c.b16 %v1390, %v1386
        %v1447 = vpack.c.b16 %v1391, %v1387
        %v1448 = vpack.c.b16 %v1392, %v1388
        %v1449 = vpack.c.b16 %v1393, %v1389
        %v1450 = vpack.c.b16 %v1398, %v1394
        %v1451 = vpack.c.b16 %v1399, %v1395
        %v1452 = vpack.c.b16 %v1400, %v1396
        %v1453 = vpack.c.b16 %v1401, %v1397
        %v1454 = vpack.c.b16 %v1406, %v1402
        %v1455 = vpack.c.b16 %v1407, %v1403
        %v1456 = vpack.c.b16 %v1408, %v1404
        %v1457 = vpack.c.b16 %v1409, %v1405
        %v1458 = vpack.c.b16 %v1414, %v1410
        %v1459 = vpack.c.b16 %v1415, %v1411
        %v1460 = vpack.c.b16 %v1416, %v1412
        %v1461 = vpack.c.b16 %v1417, %v1413
        %v1462 = vpack.c.b16 %v1422, %v1418
        %v1463 = vpack.c.b16 %v1423, %v1419
        %v1464 = vpack.c.b16 %v1424, %v1420
        %v1465 = vpack.c.b16 %v1425, %v1421
        %v1466 = vpack.c.b16 %v1430, %v1426
        %v1467 = vpack.c.b16 %v1431, %v1427
        %v1468 = vpack.c.b16 %v1432, %v1428
        %v1469 = vpack.c.b16 %v1433, %v1429
        %v1470 = vpack.c.b16 %v1438, %v1434
        %v1471 = vpack.c.b16 %v1439, %v1435
        %v1472 = vpack.c.b16 %v1440, %v1436
        %v1473 = vpack.c.b16 %v1441, %v1437
        %1506 = vmatprep.subr.bf16.mxu0 %v1443
        %1507 = vmatpush1.bf16.msra.mxu0 %v1442
        %1508 = vmatprep.subr.bf16.mxu0 %v1447
        %1509 = vmatpush1.bf16.msra.mxu0 %v1446
        %1510 = vmatprep.subr.bf16.mxu0 %v1451
        %1511 = vmatpush1.bf16.msra.mxu0 %v1450
        %1512 = vmatprep.subr.bf16.mxu0 %v1455
        %1513 = vmatpush1.bf16.msra.mxu0 %v1454
        %1514 = vmatprep.subr.bf16.mxu0 %v1459
        %1515 = vmatpush1.bf16.msra.mxu0 %v1458
        %1516 = vmatprep.subr.bf16.mxu0 %v1463
        %1517 = vmatpush1.bf16.msra.mxu0 %v1462
        %1518 = vmatprep.subr.bf16.mxu0 %v1467
        %1519 = vmatpush1.bf16.msra.mxu0 %v1466
        %1520 = vmatprep.subr.bf16.mxu0 %v1471
        %1521 = vmatpush1.bf16.msra.mxu0 %v1470
        %1522 = vmatprep.subr.bf16.mxu0 0
        %1523 = vmatpush1.bf16.msra.mxu0 0
        %1524 = vmatprep.subr.bf16.mxu0 0
        %1525 = vmatpush1.bf16.msra.mxu0 0
        %1526 = vmatprep.subr.bf16.mxu0 0
        %1527 = vmatpush1.bf16.msra.mxu0 0
        %1528 = vmatprep.subr.bf16.mxu0 0
        %1529 = vmatpush1.bf16.msra.mxu0 0
        %1530 = vmatprep.subr.bf16.mxu0 0
        %1531 = vmatpush1.bf16.msra.mxu0 0
        %1532 = vmatprep.subr.bf16.mxu0 0
        %1533 = vmatpush1.bf16.msra.mxu0 0
        %1534 = vmatprep.subr.bf16.mxu0 0
        %1535 = vmatpush1.bf16.msra.mxu0 0
        %1536 = vmatprep.subr.bf16.mxu0 0
        %1537 = vmatpush1.bf16.msra.mxu0 0
        %1538 = vmatprep.mubr.bf16.mxu0 0
        %1539 = vmatmul.mubr.bf16.gmra.mrb[0].mxu0 %v1313
        %v1540 = vpop.f32.mrb[0].mxu0
        %v1541 = vadd.f32 0.0, %v1540
        %v1542 = vpop.f32.mrb[0].mxu0
        %v1543 = vadd.f32 0.0, %v1542
        %v1544 = vpop.f32.mrb[0].mxu0
        %v1545 = vpop.f32.mrb[0].mxu0
        %1546 = vdwg.mxu0
        %1547 = vmatprep.subr.bf16.mxu0 %v1445
        %1548 = vmatpush1.bf16.msra.mxu0 %v1444
        %1549 = vmatprep.subr.bf16.mxu0 %v1449
        %1550 = vmatpush1.bf16.msra.mxu0 %v1448
        %1551 = vmatprep.subr.bf16.mxu0 %v1453
        %1552 = vmatpush1.bf16.msra.mxu0 %v1452
        %1553 = vmatprep.subr.bf16.mxu0 %v1457
        %1554 = vmatpush1.bf16.msra.mxu0 %v1456
        %1555 = vmatprep.subr.bf16.mxu0 %v1461
        %1556 = vmatpush1.bf16.msra.mxu0 %v1460
        %1557 = vmatprep.subr.bf16.mxu0 %v1465
        %1558 = vmatpush1.bf16.msra.mxu0 %v1464
        %1559 = vmatprep.subr.bf16.mxu0 %v1469
        %1560 = vmatpush1.bf16.msra.mxu0 %v1468
        %1561 = vmatprep.subr.bf16.mxu0 %v1473
        %1562 = vmatpush1.bf16.msra.mxu0 %v1472
        %1563 = vmatprep.subr.bf16.mxu0 0
        %1564 = vmatpush1.bf16.msra.mxu0 0
        %1565 = vmatprep.subr.bf16.mxu0 0
        %1566 = vmatpush1.bf16.msra.mxu0 0
        %1567 = vmatprep.subr.bf16.mxu0 0
        %1568 = vmatpush1.bf16.msra.mxu0 0
        %1569 = vmatprep.subr.bf16.mxu0 0
        %1570 = vmatpush1.bf16.msra.mxu0 0
        %1571 = vmatprep.subr.bf16.mxu0 0
        %1572 = vmatpush1.bf16.msra.mxu0 0
        %1573 = vmatprep.subr.bf16.mxu0 0
        %1574 = vmatpush1.bf16.msra.mxu0 0
        %1575 = vmatprep.subr.bf16.mxu0 0
        %1576 = vmatpush1.bf16.msra.mxu0 0
        %1577 = vmatprep.subr.bf16.mxu0 0
        %1578 = vmatpush1.bf16.msra.mxu0 0
        %1579 = vmatprep.mubr.bf16.mxu0 0
        %1580 = vmatmul.mubr.bf16.gmra.mrb[0].mxu0 %v1313
        %v1581 = vpop.f32.mrb[0].mxu0
        %v1582 = vadd.f32 0.0, %v1581
        %v1583 = vpop.f32.mrb[0].mxu0
        %v1584 = vadd.f32 0.0, %v1583
        %v1585 = vpop.f32.mrb[0].mxu0
        %v1586 = vpop.f32.mrb[0].mxu0
        %1587 = vdwg.mxu0
        %v1589 = vunpack.c.l.b16 %v1247
        %v1590 = vunpack.c.h.b16 %v1247
        %v1591 = vpack.c.b16 %v1589, %v1589
        %v1592 = vpack.c.b16 %v1590, %v1590
        %v1659 = vunpack.c.l.b16 %v1248
        %v1660 = vunpack.c.h.b16 %v1248
        %v1661 = vunpack.c.l.b16 %v1249
        %v1662 = vunpack.c.h.b16 %v1249
        %v1663 = vunpack.c.l.b16 %v1250
        %v1664 = vunpack.c.h.b16 %v1250
        %v1665 = vunpack.c.l.b16 %v1251
        %v1666 = vunpack.c.h.b16 %v1251
        %v1667 = vunpack.c.l.b16 %v1252
        %v1668 = vunpack.c.h.b16 %v1252
        %v1669 = vunpack.c.l.b16 %v1253
        %v1670 = vunpack.c.h.b16 %v1253
        %v1671 = vunpack.c.l.b16 %v1254
        %v1672 = vunpack.c.h.b16 %v1254
        %v1673 = vunpack.c.l.b16 %v1255
        %v1674 = vunpack.c.h.b16 %v1255
        %v1675 = vunpack.c.l.b16 %v1256
        %v1676 = vunpack.c.h.b16 %v1256
        %v1677 = vunpack.c.l.b16 %v1257
        %v1678 = vunpack.c.h.b16 %v1257
        %v1679 = vunpack.c.l.b16 %v1258
        %v1680 = vunpack.c.h.b16 %v1258
        %v1681 = vunpack.c.l.b16 %v1259
        %v1682 = vunpack.c.h.b16 %v1259
        %v1683 = vunpack.c.l.b16 %v1260
        %v1684 = vunpack.c.h.b16 %v1260
        %v1685 = vunpack.c.l.b16 %v1261
        %v1686 = vunpack.c.h.b16 %v1261
        %v1687 = vunpack.c.l.b16 %v1262
        %v1688 = vunpack.c.h.b16 %v1262
        %v1689 = vunpack.c.l.b16 %v1263
        %v1690 = vunpack.c.h.b16 %v1263
        %v1691 = vunpack.c.l.b16 %v1264
        %v1692 = vunpack.c.h.b16 %v1264
        %v1693 = vunpack.c.l.b16 %v1265
        %v1694 = vunpack.c.h.b16 %v1265
        %v1695 = vunpack.c.l.b16 %v1266
        %v1696 = vunpack.c.h.b16 %v1266
        %v1697 = vunpack.c.l.b16 %v1267
        %v1698 = vunpack.c.h.b16 %v1267
        %v1699 = vunpack.c.l.b16 %v1268
        %v1700 = vunpack.c.h.b16 %v1268
        %v1701 = vunpack.c.l.b16 %v1269
        %v1702 = vunpack.c.h.b16 %v1269
        %v1703 = vunpack.c.l.b16 %v1270
        %v1704 = vunpack.c.h.b16 %v1270
        %v1705 = vunpack.c.l.b16 %v1271
        %v1706 = vunpack.c.h.b16 %v1271
        %v1707 = vunpack.c.l.b16 %v1272
        %v1708 = vunpack.c.h.b16 %v1272
        %v1709 = vunpack.c.l.b16 %v1273
        %v1710 = vunpack.c.h.b16 %v1273
        %v1711 = vunpack.c.l.b16 %v1274
        %v1712 = vunpack.c.h.b16 %v1274
        %v1713 = vunpack.c.l.b16 %v1275
        %v1714 = vunpack.c.h.b16 %v1275
        %v1715 = vunpack.c.l.b16 %v1276
        %v1716 = vunpack.c.h.b16 %v1276
        %v1717 = vunpack.c.l.b16 %v1277
        %v1718 = vunpack.c.h.b16 %v1277
        %v1719 = vunpack.c.l.b16 %v1278
        %v1720 = vunpack.c.h.b16 %v1278
        %v1721 = vunpack.c.l.b16 %v1279
        %v1722 = vunpack.c.h.b16 %v1279
        %v1723 = vunpack.c.l.b16 %v1280
        %v1724 = vunpack.c.h.b16 %v1280
        %v1725 = vunpack.c.l.b16 %v1281
        %v1726 = vunpack.c.h.b16 %v1281
        %v1727 = vunpack.c.l.b16 %v1282
        %v1728 = vunpack.c.h.b16 %v1282
        %v1729 = vunpack.c.l.b16 %v1283
        %v1730 = vunpack.c.h.b16 %v1283
        %v1731 = vunpack.c.l.b16 %v1284
        %v1732 = vunpack.c.h.b16 %v1284
        %v1733 = vunpack.c.l.b16 %v1285
        %v1734 = vunpack.c.h.b16 %v1285
        %v1735 = vunpack.c.l.b16 %v1286
        %v1736 = vunpack.c.h.b16 %v1286
        %v1737 = vunpack.c.l.b16 %v1287
        %v1738 = vunpack.c.h.b16 %v1287
        %v1739 = vunpack.c.l.b16 %v1288
        %v1740 = vunpack.c.h.b16 %v1288
        %v1741 = vunpack.c.l.b16 %v1289
        %v1742 = vunpack.c.h.b16 %v1289
        %v1743 = vunpack.c.l.b16 %v1290
        %v1744 = vunpack.c.h.b16 %v1290
        %v1745 = vunpack.c.l.b16 %v1291
        %v1746 = vunpack.c.h.b16 %v1291
        %v1747 = vunpack.c.l.b16 %v1292
        %v1748 = vunpack.c.h.b16 %v1292
        %v1749 = vunpack.c.l.b16 %v1293
        %v1750 = vunpack.c.h.b16 %v1293
        %v1751 = vunpack.c.l.b16 %v1294
        %v1752 = vunpack.c.h.b16 %v1294
        %v1753 = vunpack.c.l.b16 %v1295
        %v1754 = vunpack.c.h.b16 %v1295
        %v1755 = vunpack.c.l.b16 %v1296
        %v1756 = vunpack.c.h.b16 %v1296
        %v1757 = vunpack.c.l.b16 %v1297
        %v1758 = vunpack.c.h.b16 %v1297
        %v1759 = vunpack.c.l.b16 %v1298
        %v1760 = vunpack.c.h.b16 %v1298
        %v1761 = vunpack.c.l.b16 %v1299
        %v1762 = vunpack.c.h.b16 %v1299
        %v1763 = vunpack.c.l.b16 %v1300
        %v1764 = vunpack.c.h.b16 %v1300
        %v1765 = vunpack.c.l.b16 %v1301
        %v1766 = vunpack.c.h.b16 %v1301
        %v1767 = vunpack.c.l.b16 %v1302
        %v1768 = vunpack.c.h.b16 %v1302
        %v1769 = vunpack.c.l.b16 %v1303
        %v1770 = vunpack.c.h.b16 %v1303
        %v1771 = vunpack.c.l.b16 %v1304
        %v1772 = vunpack.c.h.b16 %v1304
        %v1773 = vunpack.c.l.b16 %v1305
        %v1774 = vunpack.c.h.b16 %v1305
        %v1775 = vunpack.c.l.b16 %v1306
        %v1776 = vunpack.c.h.b16 %v1306
        %v1777 = vunpack.c.l.b16 %v1307
        %v1778 = vunpack.c.h.b16 %v1307
        %v1779 = vunpack.c.l.b16 %v1308
        %v1780 = vunpack.c.h.b16 %v1308
        %v1781 = vunpack.c.l.b16 %v1309
        %v1782 = vunpack.c.h.b16 %v1309
        %v1783 = vunpack.c.l.b16 %v1310
        %v1784 = vunpack.c.h.b16 %v1310
        %v1785 = vunpack.c.l.b16 %v1311
        %v1786 = vunpack.c.h.b16 %v1311
        %v1787 = vpack.c.b16 %v1663, %v1659
        %v1788 = vpack.c.b16 %v1664, %v1660
        %v1789 = vpack.c.b16 %v1665, %v1661
        %v1790 = vpack.c.b16 %v1666, %v1662
        %v1791 = vpack.c.b16 %v1671, %v1667
        %v1792 = vpack.c.b16 %v1672, %v1668
        %v1793 = vpack.c.b16 %v1673, %v1669
        %v1794 = vpack.c.b16 %v1674, %v1670
        %v1795 = vpack.c.b16 %v1679, %v1675
        %v1796 = vpack.c.b16 %v1680, %v1676
        %v1797 = vpack.c.b16 %v1681, %v1677
        %v1798 = vpack.c.b16 %v1682, %v1678
        %v1799 = vpack.c.b16 %v1687, %v1683
        %v1800 = vpack.c.b16 %v1688, %v1684
        %v1801 = vpack.c.b16 %v1689, %v1685
        %v1802 = vpack.c.b16 %v1690, %v1686
        %v1803 = vpack.c.b16 %v1695, %v1691
        %v1804 = vpack.c.b16 %v1696, %v1692
        %v1805 = vpack.c.b16 %v1697, %v1693
        %v1806 = vpack.c.b16 %v1698, %v1694
        %v1807 = vpack.c.b16 %v1703, %v1699
        %v1808 = vpack.c.b16 %v1704, %v1700
        %v1809 = vpack.c.b16 %v1705, %v1701
        %v1810 = vpack.c.b16 %v1706, %v1702
        %v1811 = vpack.c.b16 %v1711, %v1707
        %v1812 = vpack.c.b16 %v1712, %v1708
        %v1813 = vpack.c.b16 %v1713, %v1709
        %v1814 = vpack.c.b16 %v1714, %v1710
        %v1815 = vpack.c.b16 %v1719, %v1715
        %v1816 = vpack.c.b16 %v1720, %v1716
        %v1817 = vpack.c.b16 %v1721, %v1717
        %v1818 = vpack.c.b16 %v1722, %v1718
        %v1819 = vpack.c.b16 %v1727, %v1723
        %v1820 = vpack.c.b16 %v1728, %v1724
        %v1821 = vpack.c.b16 %v1729, %v1725
        %v1822 = vpack.c.b16 %v1730, %v1726
        %v1823 = vpack.c.b16 %v1735, %v1731
        %v1824 = vpack.c.b16 %v1736, %v1732
        %v1825 = vpack.c.b16 %v1737, %v1733
        %v1826 = vpack.c.b16 %v1738, %v1734
        %v1827 = vpack.c.b16 %v1743, %v1739
        %v1828 = vpack.c.b16 %v1744, %v1740
        %v1829 = vpack.c.b16 %v1745, %v1741
        %v1830 = vpack.c.b16 %v1746, %v1742
        %v1831 = vpack.c.b16 %v1751, %v1747
        %v1832 = vpack.c.b16 %v1752, %v1748
        %v1833 = vpack.c.b16 %v1753, %v1749
        %v1834 = vpack.c.b16 %v1754, %v1750
        %v1835 = vpack.c.b16 %v1759, %v1755
        %v1836 = vpack.c.b16 %v1760, %v1756
        %v1837 = vpack.c.b16 %v1761, %v1757
        %v1838 = vpack.c.b16 %v1762, %v1758
        %v1839 = vpack.c.b16 %v1767, %v1763
        %v1840 = vpack.c.b16 %v1768, %v1764
        %v1841 = vpack.c.b16 %v1769, %v1765
        %v1842 = vpack.c.b16 %v1770, %v1766
        %v1843 = vpack.c.b16 %v1775, %v1771
        %v1844 = vpack.c.b16 %v1776, %v1772
        %v1845 = vpack.c.b16 %v1777, %v1773
        %v1846 = vpack.c.b16 %v1778, %v1774
        %v1847 = vpack.c.b16 %v1783, %v1779
        %v1848 = vpack.c.b16 %v1784, %v1780
        %v1849 = vpack.c.b16 %v1785, %v1781
        %v1850 = vpack.c.b16 %v1786, %v1782
        %1915 = vmatprep.subr.bf16.mxu0 %v1788
        %1916 = vmatpush1.bf16.msra.mxu0 %v1787
        %1917 = vmatprep.subr.bf16.mxu0 %v1792
        %1918 = vmatpush1.bf16.msra.mxu0 %v1791
        %1919 = vmatprep.subr.bf16.mxu0 %v1796
        %1920 = vmatpush1.bf16.msra.mxu0 %v1795
        %1921 = vmatprep.subr.bf16.mxu0 %v1800
        %1922 = vmatpush1.bf16.msra.mxu0 %v1799
        %1923 = vmatprep.subr.bf16.mxu0 %v1804
        %1924 = vmatpush1.bf16.msra.mxu0 %v1803
        %1925 = vmatprep.subr.bf16.mxu0 %v1808
        %1926 = vmatpush1.bf16.msra.mxu0 %v1807
        %1927 = vmatprep.subr.bf16.mxu0 %v1812
        %1928 = vmatpush1.bf16.msra.mxu0 %v1811
        %1929 = vmatprep.subr.bf16.mxu0 %v1816
        %1930 = vmatpush1.bf16.msra.mxu0 %v1815
        %1931 = vmatprep.subr.bf16.mxu0 %v1820
        %1932 = vmatpush1.bf16.msra.mxu0 %v1819
        %1933 = vmatprep.subr.bf16.mxu0 %v1824
        %1934 = vmatpush1.bf16.msra.mxu0 %v1823
        %1935 = vmatprep.subr.bf16.mxu0 %v1828
        %1936 = vmatpush1.bf16.msra.mxu0 %v1827
        %1937 = vmatprep.subr.bf16.mxu0 %v1832
        %1938 = vmatpush1.bf16.msra.mxu0 %v1831
        %1939 = vmatprep.subr.bf16.mxu0 %v1836
        %1940 = vmatpush1.bf16.msra.mxu0 %v1835
        %1941 = vmatprep.subr.bf16.mxu0 %v1840
        %1942 = vmatpush1.bf16.msra.mxu0 %v1839
        %1943 = vmatprep.subr.bf16.mxu0 %v1844
        %1944 = vmatpush1.bf16.msra.mxu0 %v1843
        %1945 = vmatprep.subr.bf16.mxu0 %v1848
        %1946 = vmatpush1.bf16.msra.mxu0 %v1847
        %1947 = vmatprep.mubr.bf16.mxu0 %v1592
        %1948 = vmatmul.mubr.bf16.gmra.mrb[0].mxu0 %v1591
        %v1949 = vpop.f32.mrb[0].mxu0
        %v1950 = vadd.f32 %v1541, %v1949
        %v1951 = vpop.f32.mrb[0].mxu0
        %v1952 = vadd.f32 %v1543, %v1951
        %v1953 = vpop.f32.mrb[0].mxu0
        %v1954 = vpop.f32.mrb[0].mxu0
        %1955 = vdwg.mxu0
        %1956 = vmatprep.subr.bf16.mxu0 %v1790
        %1957 = vmatpush1.bf16.msra.mxu0 %v1789
        %1958 = vmatprep.subr.bf16.mxu0 %v1794
        %1959 = vmatpush1.bf16.msra.mxu0 %v1793
        %1960 = vmatprep.subr.bf16.mxu0 %v1798
        %1961 = vmatpush1.bf16.msra.mxu0 %v1797
        %1962 = vmatprep.subr.bf16.mxu0 %v1802
        %1963 = vmatpush1.bf16.msra.mxu0 %v1801
        %1964 = vmatprep.subr.bf16.mxu0 %v1806
        %1965 = vmatpush1.bf16.msra.mxu0 %v1805
        %1966 = vmatprep.subr.bf16.mxu0 %v1810
        %1967 = vmatpush1.bf16.msra.mxu0 %v1809
        %1968 = vmatprep.subr.bf16.mxu0 %v1814
        %1969 = vmatpush1.bf16.msra.mxu0 %v1813
        %1970 = vmatprep.subr.bf16.mxu0 %v1818
        %1971 = vmatpush1.bf16.msra.mxu0 %v1817
        %1972 = vmatprep.subr.bf16.mxu0 %v1822
        %1973 = vmatpush1.bf16.msra.mxu0 %v1821
        %1974 = vmatprep.subr.bf16.mxu0 %v1826
        %1975 = vmatpush1.bf16.msra.mxu0 %v1825
        %1976 = vmatprep.subr.bf16.mxu0 %v1830
        %1977 = vmatpush1.bf16.msra.mxu0 %v1829
        %1978 = vmatprep.subr.bf16.mxu0 %v1834
        %1979 = vmatpush1.bf16.msra.mxu0 %v1833
        %1980 = vmatprep.subr.bf16.mxu0 %v1838
        %1981 = vmatpush1.bf16.msra.mxu0 %v1837
        %1982 = vmatprep.subr.bf16.mxu0 %v1842
        %1983 = vmatpush1.bf16.msra.mxu0 %v1841
        %1984 = vmatprep.subr.bf16.mxu0 %v1846
        %1985 = vmatpush1.bf16.msra.mxu0 %v1845
        %1986 = vmatprep.subr.bf16.mxu0 %v1850
        %1987 = vmatpush1.bf16.msra.mxu0 %v1849
        %1988 = vmatprep.mubr.bf16.mxu0 %v1592
        %1989 = vmatmul.mubr.bf16.gmra.mrb[0].mxu0 %v1591
        %v1990 = vpop.f32.mrb[0].mxu0
        %v1991 = vadd.f32 %v1582, %v1990
        %v1992 = vpop.f32.mrb[0].mxu0
        %v1993 = vadd.f32 %v1584, %v1992
        %v1994 = vpop.f32.mrb[0].mxu0
        %v1995 = vpop.f32.mrb[0].mxu0
        %1996 = vdwg.mxu0
        %v1997 = vld [vmem:[%s8] sm:$0xf]
        %v1999 = vlaneseq
        %v2000 = vshrl.u32 %v1999, 7
        %v2001 = vsub.s32 0, %v2000
        %v2002 = vrot.slane %v1997, %v2001
        %v2003 = vlaneseq
        %v2004 = vshrl.u32 %v2003, 7
        %v2005 = vsub.s32 1, %v2004
        %v2006 = vrot.slane %v1997, %v2005
        %v2007 = vlaneseq
        %v2008 = vshrl.u32 %v2007, 7
        %v2009 = vsub.s32 2, %v2008
        %v2010 = vrot.slane %v1997, %v2009
        %v2011 = vlaneseq
        %v2012 = vshrl.u32 %v2011, 7
        %v2013 = vsub.s32 3, %v2012
        %v2014 = vrot.slane %v1997, %v2013
        %v2019 = vadd.f32 %v1950, %v2002
        %v2020 = vadd.f32 %v1952, %v2006
        %v2021 = vadd.f32 %v1991, %v2010
        %v2022 = vadd.f32 %v1993, %v2014
        %v2023 = vld [vmem:[#allocation3] sm:$0xff]
        %v2024 = vxor.u32 %v1243, 2147483648
        %v2025 = vmul.f32 %v2024, 1.442695
        %v2026 = vpow.pop %v2025
        %v2027 = vadd.f32 %v2026, 1.0
        %v2028 = vrcp.pop %v2027
        %v2029 = vmul.f32 1.0, %v2028
        %v2030 = vxor.u32 %v1244, 2147483648
        %v2031 = vmul.f32 %v2030, 1.442695
        %v2032 = vpow.pop %v2031
        %v2033 = vadd.f32 %v2032, 1.0
        %v2034 = vrcp.pop %v2033
        %v2035 = vmul.f32 1.0, %v2034
        %v2036 = vtanh.pop %v1245
        %v2037 = vxor.u32 %v1246, 2147483648
        %v2038 = vmul.f32 %v2037, 1.442695
        %v2039 = vpow.pop %v2038
        %v2040 = vadd.f32 %v2039, 1.0
        %v2041 = vrcp.pop %v2040
        %v2042 = vmul.f32 1.0, %v2041
        %v2043 = vmul.f32 %v2035, %v2023
        %v2044 = vmul.f32 %v2029, %v2036
        %v2045 = vadd.f32 %v2043, %v2044
        %v2046 = vtanh.pop %v2045
        %v2047 = vmul.f32 %v2042, %v2046
        %v2048 = vld [vmem:[#allocation5] sm:$0xff]
        %v2049 = vxor.u32 %v2019, 2147483648
        %v2050 = vmul.f32 %v2049, 1.442695
        %v2051 = vpow.pop %v2050
        %v2052 = vadd.f32 %v2051, 1.0
        %v2053 = vrcp.pop %v2052
        %v2054 = vmul.f32 1.0, %v2053
        %v2055 = vxor.u32 %v2020, 2147483648
        %v2056 = vmul.f32 %v2055, 1.442695
        %v2057 = vpow.pop %v2056
        %v2058 = vadd.f32 %v2057, 1.0
        %v2059 = vrcp.pop %v2058
        %v2060 = vmul.f32 1.0, %v2059
        %v2061 = vtanh.pop %v2021
        %v2062 = vxor.u32 %v2022, 2147483648
        %v2063 = vmul.f32 %v2062, 1.442695
        %v2064 = vpow.pop %v2063
        %v2065 = vadd.f32 %v2064, 1.0
        %v2066 = vrcp.pop %v2065
        %v2067 = vmul.f32 1.0, %v2066
        %v2068 = vmul.f32 %v2060, %v2048
        %v2069 = vmul.f32 %v2054, %v2061
        %v2070 = vadd.f32 %v2068, %v2069
        %v2071 = vtanh.pop %v2070
        %v2072 = vmul.f32 %v2067, %v2071
        %v2073 = vld [vmem:[#allocation6] sm:$0xff]
        %v2074 = vsel %vm467, 1, 0
        %2075 = vset.pattern.permute.xlu0 0
        %2076 = vperm.xlu0 %2075, %v2074
        %v2077 = vpop.permute.xlu0 %2076
        %vm2078 = vcmp.eq.s32.totalorder %v2077, 1
        %v2079 = vsel %vm2078, %v2047, 0.0
        %v2080 = vadd.f32 %v2073, %v2079
        %2081 = vst [vmem:[#allocation6] sm:$0xff] %v2080
        %v2082 = vld [vmem:[#allocation7] sm:$0xff]
        %v2083 = vsel %vm470, 1, 0
        %2084 = vset.pattern.permute.xlu0 0
        %2085 = vperm.xlu0 %2084, %v2083
        %v2086 = vpop.permute.xlu0 %2085
        %vm2087 = vcmp.eq.s32.totalorder %v2086, 1
        %v2088 = vsel %vm2087, %v2072, 0.0
        %v2089 = vadd.f32 %v2082, %v2088
        %2090 = vst [vmem:[#allocation7] sm:$0xff] %v2089
        %v2091 = vld [vmem:[#allocation2] sm:$0xff]
        %v2092 = vsel %vm2078, %v2047, %v2091
        %2093 = vst [vmem:[#allocation2] sm:$0xff] %v2092
        %v2094 = vld [vmem:[#allocation3] sm:$0xff]
        %v2095 = vsel %vm2078, %v2045, %v2094
        %2096 = vst [vmem:[#allocation3] sm:$0xff] %v2095
        %v2097 = vld [vmem:[#allocation4] sm:$0xff]
        %v2098 = vsel %vm2087, %v2072, %v2097
        %2099 = vst [vmem:[#allocation4] sm:$0xff] %v2098
        %v2100 = vld [vmem:[#allocation5] sm:$0xff]
        %v2101 = vsel %vm2087, %v2070, %v2100
        %2102 = vst [vmem:[#allocation5] sm:$0xff] %v2101
        %p2103 = scmp.eq.s32.totalorder %s25, 7
        // Predicated region
        $region77: #{lstm_base_forward.3} parent=71 // pred_check
          %p2104 = pneg %p2103
        $region78: #{lstm_base_forward.3} parent=71 // pred_check_branch
          %2106 = sbr.rel (%p2104) target = $region80
        $region79: #{lstm_base_forward.3} parent=71 // pred_region
          %v2107 = vld [vmem:[%s2] sm:$0xff]
          %v2108 = vcvt.s32.f32 %v2107
          %v2109 = vmax.f32 %v2108, 1.0
          %v2110 = vrcp.pop %v2109
          %v2111 = vmul.f32 1.0, %v2110
          %v2112 = vld [vmem:[#allocation6] sm:$0xff]
          %v2113 = vld [vmem:[#allocation7] sm:$0xff]
          %2115 = vset.pattern.permute.xlu0 0
          %2116 = vperm.xlu0 %2115, %v2111
          %v2117 = vpop.permute.xlu0 %2116
          %v2119 = vmul.f32 %v2112, %v2117
          %v2120 = vmul.f32 %v2113, %v2117
          %v2123 = vrot.slane %v2119, 2
          %v2124 = vrot.slane %v2120, 2
          %v2127 = vsub.f32 %v2119, %v2123
          %v2128 = vsub.f32 %v2120, %v2124
          %v2129 = vld [vmem:[%s9] sm:$0xff]
          %v2130 = vld [vmem:[%s9 + $0x8] sm:$0xff]
          %v2131 = vld [vmem:[%s9 + $0x10] sm:$0xff]
          %v2132 = vld [vmem:[%s9 + $0x18] sm:$0xff]
          %v2133 = vld [vmem:[%s9 + $0x20] sm:$0xff]
          %v2134 = vld [vmem:[%s9 + $0x28] sm:$0xff]
          %v2135 = vld [vmem:[%s9 + $0x30] sm:$0xff]
          %v2136 = vld [vmem:[%s9 + $0x38] sm:$0xff]
          %v2137 = vld [vmem:[%s9 + $0x40] sm:$0xff]
          %v2138 = vld [vmem:[%s9 + $0x48] sm:$0xff]
          %v2139 = vld [vmem:[%s9 + $0x50] sm:$0xff]
          %v2140 = vld [vmem:[%s9 + $0x58] sm:$0xff]
          %v2141 = vld [vmem:[%s9 + $0x60] sm:$0xff]
          %v2142 = vld [vmem:[%s9 + $0x68] sm:$0xff]
          %v2143 = vld [vmem:[%s9 + $0x70] sm:$0xff]
          %v2144 = vld [vmem:[%s9 + $0x78] sm:$0xff]
          %v2145 = vld [vmem:[%s9 + $0x80] sm:$0xff]
          %v2146 = vld [vmem:[%s9 + $0x88] sm:$0xff]
          %v2147 = vld [vmem:[%s9 + $0x90] sm:$0xff]
          %v2148 = vld [vmem:[%s9 + $0x98] sm:$0xff]
          %v2149 = vld [vmem:[%s9 + $0xa0] sm:$0xff]
          %v2150 = vld [vmem:[%s9 + $0xa8] sm:$0xff]
          %v2151 = vld [vmem:[%s9 + $0xb0] sm:$0xff]
          %v2152 = vld [vmem:[%s9 + $0xb8] sm:$0xff]
          %v2153 = vld [vmem:[%s9 + $0xc0] sm:$0xff]
          %v2154 = vld [vmem:[%s9 + $0xc8] sm:$0xff]
          %v2155 = vld [vmem:[%s9 + $0xd0] sm:$0xff]
          %v2156 = vld [vmem:[%s9 + $0xd8] sm:$0xff]
          %v2157 = vld [vmem:[%s9 + $0xe0] sm:$0xff]
          %v2158 = vld [vmem:[%s9 + $0xe8] sm:$0xff]
          %v2159 = vld [vmem:[%s9 + $0xf0] sm:$0xff]
          %v2160 = vld [vmem:[%s9 + $0xf8] sm:$0xff]
          %v2161 = vld [vmem:[%s9 + $0x100] sm:$0xff]
          %v2162 = vld [vmem:[%s9 + $0x108] sm:$0xff]
          %v2163 = vld [vmem:[%s9 + $0x110] sm:$0xff]
          %v2164 = vld [vmem:[%s9 + $0x118] sm:$0xff]
          %v2165 = vld [vmem:[%s9 + $0x120] sm:$0xff]
          %v2166 = vld [vmem:[%s9 + $0x128] sm:$0xff]
          %v2167 = vld [vmem:[%s9 + $0x130] sm:$0xff]
          %v2168 = vld [vmem:[%s9 + $0x138] sm:$0xff]
          %v2169 = vld [vmem:[%s9 + $0x140] sm:$0xff]
          %v2170 = vld [vmem:[%s9 + $0x148] sm:$0xff]
          %v2171 = vld [vmem:[%s9 + $0x150] sm:$0xff]
          %v2172 = vld [vmem:[%s9 + $0x158] sm:$0xff]
          %v2173 = vld [vmem:[%s9 + $0x160] sm:$0xff]
          %v2174 = vld [vmem:[%s9 + $0x168] sm:$0xff]
          %v2175 = vld [vmem:[%s9 + $0x170] sm:$0xff]
          %v2176 = vld [vmem:[%s9 + $0x178] sm:$0xff]
          %v2177 = vld [vmem:[%s9 + $0x180] sm:$0xff]
          %v2178 = vld [vmem:[%s9 + $0x188] sm:$0xff]
          %v2179 = vld [vmem:[%s9 + $0x190] sm:$0xff]
          %v2180 = vld [vmem:[%s9 + $0x198] sm:$0xff]
          %v2181 = vld [vmem:[%s9 + $0x1a0] sm:$0xff]
          %v2182 = vld [vmem:[%s9 + $0x1a8] sm:$0xff]
          %v2183 = vld [vmem:[%s9 + $0x1b0] sm:$0xff]
          %v2184 = vld [vmem:[%s9 + $0x1b8] sm:$0xff]
          %v2185 = vld [vmem:[%s9 + $0x1c0] sm:$0xff]
          %v2186 = vld [vmem:[%s9 + $0x1c8] sm:$0xff]
          %v2187 = vld [vmem:[%s9 + $0x1d0] sm:$0xff]
          %v2188 = vld [vmem:[%s9 + $0x1d8] sm:$0xff]
          %v2189 = vld [vmem:[%s9 + $0x1e0] sm:$0xff]
          %v2190 = vld [vmem:[%s9 + $0x1e8] sm:$0xff]
          %v2191 = vld [vmem:[%s9 + $0x1f0] sm:$0xff]
          %v2192 = vld [vmem:[%s9 + $0x1f8] sm:$0xff]
          %v2193 = vld [vmem:[%s9 + $0x200] sm:$0xff]
          %v2194 = vld [vmem:[%s9 + $0x208] sm:$0xff]
          %v2195 = vld [vmem:[%s9 + $0x210] sm:$0xff]
          %v2196 = vld [vmem:[%s9 + $0x218] sm:$0xff]
          %v2197 = vld [vmem:[%s9 + $0x220] sm:$0xff]
          %v2198 = vld [vmem:[%s9 + $0x228] sm:$0xff]
          %v2199 = vld [vmem:[%s9 + $0x230] sm:$0xff]
          %v2200 = vld [vmem:[%s9 + $0x238] sm:$0xff]
          %v2201 = vld [vmem:[%s9 + $0x240] sm:$0xff]
          %v2202 = vld [vmem:[%s9 + $0x248] sm:$0xff]
          %v2203 = vld [vmem:[%s9 + $0x250] sm:$0xff]
          %v2204 = vld [vmem:[%s9 + $0x258] sm:$0xff]
          %v2205 = vld [vmem:[%s9 + $0x260] sm:$0xff]
          %v2206 = vld [vmem:[%s9 + $0x268] sm:$0xff]
          %v2207 = vld [vmem:[%s9 + $0x270] sm:$0xff]
          %v2208 = vld [vmem:[%s9 + $0x278] sm:$0xff]
          %v2209 = vld [vmem:[%s9 + $0x280] sm:$0xff]
          %v2210 = vld [vmem:[%s9 + $0x288] sm:$0xff]
          %v2211 = vld [vmem:[%s9 + $0x290] sm:$0xff]
          %v2212 = vld [vmem:[%s9 + $0x298] sm:$0xff]
          %v2213 = vld [vmem:[%s9 + $0x2a0] sm:$0xff]
          %v2214 = vld [vmem:[%s9 + $0x2a8] sm:$0xff]
          %v2215 = vld [vmem:[%s9 + $0x2b0] sm:$0xff]
          %v2216 = vld [vmem:[%s9 + $0x2b8] sm:$0xff]
          %v2217 = vld [vmem:[%s9 + $0x2c0] sm:$0xff]
          %v2218 = vld [vmem:[%s9 + $0x2c8] sm:$0xff]
          %v2219 = vld [vmem:[%s9 + $0x2d0] sm:$0xff]
          %v2220 = vld [vmem:[%s9 + $0x2d8] sm:$0xff]
          %v2221 = vld [vmem:[%s9 + $0x2e0] sm:$0xff]
          %v2222 = vld [vmem:[%s9 + $0x2e8] sm:$0xff]
          %v2223 = vld [vmem:[%s9 + $0x2f0] sm:$0xff]
          %v2224 = vld [vmem:[%s9 + $0x2f8] sm:$0xff]
          %v2225 = vld [vmem:[%s10] sm:$0x1]
          %v2227 = vlaneseq
          %v2228 = vshrl.u32 %v2227, 7
          %v2229 = vsub.s32 0, %v2228
          %v2230 = vrot.slane %v2225, %v2229
          %2232 = vmatprep.subr.mxu0 0.0
          %2233 = vmatpush1.msra.mxu0 %v2129
          %2234 = vmatprep.subr.mxu0 0.0
          %2235 = vmatpush1.msra.mxu0 %v2130
          %2236 = vmatprep.subr.mxu0 0.0
          %2237 = vmatpush1.msra.mxu0 %v2131
          %2238 = vmatprep.subr.mxu0 0.0
          %2239 = vmatpush1.msra.mxu0 %v2132
          %2240 = vmatprep.subr.mxu0 0.0
          %2241 = vmatpush1.msra.mxu0 %v2133
          %2242 = vmatprep.subr.mxu0 0.0
          %2243 = vmatpush1.msra.mxu0 %v2134
          %2244 = vmatprep.subr.mxu0 0.0
          %2245 = vmatpush1.msra.mxu0 %v2135
          %2246 = vmatprep.subr.mxu0 0.0
          %2247 = vmatpush1.msra.mxu0 %v2136
          %2248 = vmatprep.subr.mxu0 0.0
          %2249 = vmatpush1.msra.mxu0 %v2137
          %2250 = vmatprep.subr.mxu0 0.0
          %2251 = vmatpush1.msra.mxu0 %v2138
          %2252 = vmatprep.subr.mxu0 0.0
          %2253 = vmatpush1.msra.mxu0 %v2139
          %2254 = vmatprep.subr.mxu0 0.0
          %2255 = vmatpush1.msra.mxu0 %v2140
          %2256 = vmatprep.subr.mxu0 0.0
          %2257 = vmatpush1.msra.mxu0 %v2141
          %2258 = vmatprep.subr.mxu0 0.0
          %2259 = vmatpush1.msra.mxu0 %v2142
          %2260 = vmatprep.subr.mxu0 0.0
          %2261 = vmatpush1.msra.mxu0 %v2143
          %2262 = vmatprep.subr.mxu0 0.0
          %2263 = vmatpush1.msra.mxu0 %v2144
          %2264 = vmatprep.subr.mxu0 0.0
          %2265 = vmatpush1.msra.mxu0 %v2145
          %2266 = vmatprep.subr.mxu0 0.0
          %2267 = vmatpush1.msra.mxu0 %v2146
          %2268 = vmatprep.subr.mxu0 0.0
          %2269 = vmatpush1.msra.mxu0 %v2147
          %2270 = vmatprep.subr.mxu0 0.0
          %2271 = vmatpush1.msra.mxu0 %v2148
          %2272 = vmatprep.subr.mxu0 0.0
          %2273 = vmatpush1.msra.mxu0 %v2149
          %2274 = vmatprep.subr.mxu0 0.0
          %2275 = vmatpush1.msra.mxu0 %v2150
          %2276 = vmatprep.subr.mxu0 0.0
          %2277 = vmatpush1.msra.mxu0 %v2151
          %2278 = vmatprep.subr.mxu0 0.0
          %2279 = vmatpush1.msra.mxu0 %v2152
          %2280 = vmatprep.subr.mxu0 0.0
          %2281 = vmatpush1.msra.mxu0 %v2153
          %2282 = vmatprep.subr.mxu0 0.0
          %2283 = vmatpush1.msra.mxu0 %v2154
          %2284 = vmatprep.subr.mxu0 0.0
          %2285 = vmatpush1.msra.mxu0 %v2155
          %2286 = vmatprep.subr.mxu0 0.0
          %2287 = vmatpush1.msra.mxu0 %v2156
          %2288 = vmatprep.subr.mxu0 0.0
          %2289 = vmatpush1.msra.mxu0 %v2157
          %2290 = vmatprep.subr.mxu0 0.0
          %2291 = vmatpush1.msra.mxu0 %v2158
          %2292 = vmatprep.subr.mxu0 0.0
          %2293 = vmatpush1.msra.mxu0 %v2159
          %2294 = vmatprep.subr.mxu0 0.0
          %2295 = vmatpush1.msra.mxu0 %v2160
          %2296 = vmatprep.mubr.f32.mxu0 %v2120
          %2297 = vmatmul.mubr.f32.gmra.mrb[0].mxu0 %v2119
          %v2298 = vpop.f32.mrb[0].mxu0
          %v2299 = vadd.f32 %v2230, %v2298
          %v2300 = vpop.f32.mrb[0].mxu0
          %2301 = vdwg.mxu0
          %2302 = vmatprep.subr.mxu0 0.0
          %2303 = vmatpush1.msra.mxu0 %v2161
          %2304 = vmatprep.subr.mxu0 0.0
          %2305 = vmatpush1.msra.mxu0 %v2162
          %2306 = vmatprep.subr.mxu0 0.0
          %2307 = vmatpush1.msra.mxu0 %v2163
          %2308 = vmatprep.subr.mxu0 0.0
          %2309 = vmatpush1.msra.mxu0 %v2164
          %2310 = vmatprep.subr.mxu0 0.0
          %2311 = vmatpush1.msra.mxu0 %v2165
          %2312 = vmatprep.subr.mxu0 0.0
          %2313 = vmatpush1.msra.mxu0 %v2166
          %2314 = vmatprep.subr.mxu0 0.0
          %2315 = vmatpush1.msra.mxu0 %v2167
          %2316 = vmatprep.subr.mxu0 0.0
          %2317 = vmatpush1.msra.mxu0 %v2168
          %2318 = vmatprep.subr.mxu0 0.0
          %2319 = vmatpush1.msra.mxu0 %v2169
          %2320 = vmatprep.subr.mxu0 0.0
          %2321 = vmatpush1.msra.mxu0 %v2170
          %2322 = vmatprep.subr.mxu0 0.0
          %2323 = vmatpush1.msra.mxu0 %v2171
          %2324 = vmatprep.subr.mxu0 0.0
          %2325 = vmatpush1.msra.mxu0 %v2172
          %2326 = vmatprep.subr.mxu0 0.0
          %2327 = vmatpush1.msra.mxu0 %v2173
          %2328 = vmatprep.subr.mxu0 0.0
          %2329 = vmatpush1.msra.mxu0 %v2174
          %2330 = vmatprep.subr.mxu0 0.0
          %2331 = vmatpush1.msra.mxu0 %v2175
          %2332 = vmatprep.subr.mxu0 0.0
          %2333 = vmatpush1.msra.mxu0 %v2176
          %2334 = vmatprep.subr.mxu0 0.0
          %2335 = vmatpush1.msra.mxu0 %v2177
          %2336 = vmatprep.subr.mxu0 0.0
          %2337 = vmatpush1.msra.mxu0 %v2178
          %2338 = vmatprep.subr.mxu0 0.0
          %2339 = vmatpush1.msra.mxu0 %v2179
          %2340 = vmatprep.subr.mxu0 0.0
          %2341 = vmatpush1.msra.mxu0 %v2180
          %2342 = vmatprep.subr.mxu0 0.0
          %2343 = vmatpush1.msra.mxu0 %v2181
          %2344 = vmatprep.subr.mxu0 0.0
          %2345 = vmatpush1.msra.mxu0 %v2182
          %2346 = vmatprep.subr.mxu0 0.0
          %2347 = vmatpush1.msra.mxu0 %v2183
          %2348 = vmatprep.subr.mxu0 0.0
          %2349 = vmatpush1.msra.mxu0 %v2184
          %2350 = vmatprep.subr.mxu0 0.0
          %2351 = vmatpush1.msra.mxu0 %v2185
          %2352 = vmatprep.subr.mxu0 0.0
          %2353 = vmatpush1.msra.mxu0 %v2186
          %2354 = vmatprep.subr.mxu0 0.0
          %2355 = vmatpush1.msra.mxu0 %v2187
          %2356 = vmatprep.subr.mxu0 0.0
          %2357 = vmatpush1.msra.mxu0 %v2188
          %2358 = vmatprep.subr.mxu0 0.0
          %2359 = vmatpush1.msra.mxu0 %v2189
          %2360 = vmatprep.subr.mxu0 0.0
          %2361 = vmatpush1.msra.mxu0 %v2190
          %2362 = vmatprep.subr.mxu0 0.0
          %2363 = vmatpush1.msra.mxu0 %v2191
          %2364 = vmatprep.subr.mxu0 0.0
          %2365 = vmatpush1.msra.mxu0 %v2192
          %2366 = vmatprep.mubr.f32.mxu0 %v2124
          %2367 = vmatmul.mubr.f32.gmra.mrb[0].mxu0 %v2123
          %v2368 = vpop.f32.mrb[0].mxu0
          %v2369 = vadd.f32 %v2299, %v2368
          %v2370 = vpop.f32.mrb[0].mxu0
          %2371 = vdwg.mxu0
          %2372 = vmatprep.subr.mxu0 0.0
          %2373 = vmatpush1.msra.mxu0 %v2193
          %2374 = vmatprep.subr.mxu0 0.0
          %2375 = vmatpush1.msra.mxu0 %v2194
          %2376 = vmatprep.subr.mxu0 0.0
          %2377 = vmatpush1.msra.mxu0 %v2195
          %2378 = vmatprep.subr.mxu0 0.0
          %2379 = vmatpush1.msra.mxu0 %v2196
          %2380 = vmatprep.subr.mxu0 0.0
          %2381 = vmatpush1.msra.mxu0 %v2197
          %2382 = vmatprep.subr.mxu0 0.0
          %2383 = vmatpush1.msra.mxu0 %v2198
          %2384 = vmatprep.subr.mxu0 0.0
          %2385 = vmatpush1.msra.mxu0 %v2199
          %2386 = vmatprep.subr.mxu0 0.0
          %2387 = vmatpush1.msra.mxu0 %v2200
          %2388 = vmatprep.subr.mxu0 0.0
          %2389 = vmatpush1.msra.mxu0 %v2201
          %2390 = vmatprep.subr.mxu0 0.0
          %2391 = vmatpush1.msra.mxu0 %v2202
          %2392 = vmatprep.subr.mxu0 0.0
          %2393 = vmatpush1.msra.mxu0 %v2203
          %2394 = vmatprep.subr.mxu0 0.0
          %2395 = vmatpush1.msra.mxu0 %v2204
          %2396 = vmatprep.subr.mxu0 0.0
          %2397 = vmatpush1.msra.mxu0 %v2205
          %2398 = vmatprep.subr.mxu0 0.0
          %2399 = vmatpush1.msra.mxu0 %v2206
          %2400 = vmatprep.subr.mxu0 0.0
          %2401 = vmatpush1.msra.mxu0 %v2207
          %2402 = vmatprep.subr.mxu0 0.0
          %2403 = vmatpush1.msra.mxu0 %v2208
          %2404 = vmatprep.subr.mxu0 0.0
          %2405 = vmatpush1.msra.mxu0 %v2209
          %2406 = vmatprep.subr.mxu0 0.0
          %2407 = vmatpush1.msra.mxu0 %v2210
          %2408 = vmatprep.subr.mxu0 0.0
          %2409 = vmatpush1.msra.mxu0 %v2211
          %2410 = vmatprep.subr.mxu0 0.0
          %2411 = vmatpush1.msra.mxu0 %v2212
          %2412 = vmatprep.subr.mxu0 0.0
          %2413 = vmatpush1.msra.mxu0 %v2213
          %2414 = vmatprep.subr.mxu0 0.0
          %2415 = vmatpush1.msra.mxu0 %v2214
          %2416 = vmatprep.subr.mxu0 0.0
          %2417 = vmatpush1.msra.mxu0 %v2215
          %2418 = vmatprep.subr.mxu0 0.0
          %2419 = vmatpush1.msra.mxu0 %v2216
          %2420 = vmatprep.subr.mxu0 0.0
          %2421 = vmatpush1.msra.mxu0 %v2217
          %2422 = vmatprep.subr.mxu0 0.0
          %2423 = vmatpush1.msra.mxu0 %v2218
          %2424 = vmatprep.subr.mxu0 0.0
          %2425 = vmatpush1.msra.mxu0 %v2219
          %2426 = vmatprep.subr.mxu0 0.0
          %2427 = vmatpush1.msra.mxu0 %v2220
          %2428 = vmatprep.subr.mxu0 0.0
          %2429 = vmatpush1.msra.mxu0 %v2221
          %2430 = vmatprep.subr.mxu0 0.0
          %2431 = vmatpush1.msra.mxu0 %v2222
          %2432 = vmatprep.subr.mxu0 0.0
          %2433 = vmatpush1.msra.mxu0 %v2223
          %2434 = vmatprep.subr.mxu0 0.0
          %2435 = vmatpush1.msra.mxu0 %v2224
          %2436 = vmatprep.mubr.f32.mxu0 %v2128
          %2437 = vmatmul.mubr.f32.gmra.mrb[0].mxu0 %v2127
          %v2438 = vpop.f32.mrb[0].mxu0
          %v2439 = vadd.f32 %v2369, %v2438
          %v2440 = vpop.f32.mrb[0].mxu0
          %2441 = vdwg.mxu0
          %v2442 = vtanh.pop %v2439
          %v2443 = vld [vmem:[%s11] sm:$0xff]
          %v2444 = vld [vmem:[%s11 + $0x8] sm:$0xff]
          %v2445 = vld [vmem:[%s11 + $0x10] sm:$0xff]
          %v2446 = vld [vmem:[%s11 + $0x18] sm:$0xff]
          %v2447 = vld [vmem:[%s12] sm:$0x1]
          %v2449 = vlaneseq
          %v2450 = vshrl.u32 %v2449, 7
          %v2451 = vsub.s32 0, %v2450
          %v2452 = vrot.slane %v2447, %v2451
          %vm2454 = vcmask 261120
          %v2456 = vsel %vm2454, %v2442, 0
          %2458 = vmatprep.subr.mxu0 0.0
          %2459 = vmatpush1.msra.mxu0 %v2443
          %2460 = vmatprep.subr.mxu0 0.0
          %2461 = vmatpush1.msra.mxu0 %v2444
          %2462 = vmatprep.subr.mxu0 0.0
          %2463 = vmatpush1.msra.mxu0 %v2445
          %2464 = vmatprep.subr.mxu0 0.0
          %2465 = vmatpush1.msra.mxu0 %v2446
          %2466 = vmatprep.subr.mxu0 0.0
          %2467 = vmatpush1.msra.mxu0 0.0
          %2468 = vmatprep.subr.mxu0 0.0
          %2469 = vmatpush1.msra.mxu0 0.0
          %2470 = vmatprep.subr.mxu0 0.0
          %2471 = vmatpush1.msra.mxu0 0.0
          %2472 = vmatprep.subr.mxu0 0.0
          %2473 = vmatpush1.msra.mxu0 0.0
          %2474 = vmatprep.subr.mxu0 0.0
          %2475 = vmatpush1.msra.mxu0 0.0
          %2476 = vmatprep.subr.mxu0 0.0
          %2477 = vmatpush1.msra.mxu0 0.0
          %2478 = vmatprep.subr.mxu0 0.0
          %2479 = vmatpush1.msra.mxu0 0.0
          %2480 = vmatprep.subr.mxu0 0.0
          %2481 = vmatpush1.msra.mxu0 0.0
          %2482 = vmatprep.subr.mxu0 0.0
          %2483 = vmatpush1.msra.mxu0 0.0
          %2484 = vmatprep.subr.mxu0 0.0
          %2485 = vmatpush1.msra.mxu0 0.0
          %2486 = vmatprep.subr.mxu0 0.0
          %2487 = vmatpush1.msra.mxu0 0.0
          %2488 = vmatprep.subr.mxu0 0.0
          %2489 = vmatpush1.msra.mxu0 0.0
          %2490 = vmatprep.subr.mxu0 0.0
          %2491 = vmatpush1.msra.mxu0 0.0
          %2492 = vmatprep.subr.mxu0 0.0
          %2493 = vmatpush1.msra.mxu0 0.0
          %2494 = vmatprep.subr.mxu0 0.0
          %2495 = vmatpush1.msra.mxu0 0.0
          %2496 = vmatprep.subr.mxu0 0.0
          %2497 = vmatpush1.msra.mxu0 0.0
          %2498 = vmatprep.subr.mxu0 0.0
          %2499 = vmatpush1.msra.mxu0 0.0
          %2500 = vmatprep.subr.mxu0 0.0
          %2501 = vmatpush1.msra.mxu0 0.0
          %2502 = vmatprep.subr.mxu0 0.0
          %2503 = vmatpush1.msra.mxu0 0.0
          %2504 = vmatprep.subr.mxu0 0.0
          %2505 = vmatpush1.msra.mxu0 0.0
          %2506 = vmatprep.subr.mxu0 0.0
          %2507 = vmatpush1.msra.mxu0 0.0
          %2508 = vmatprep.subr.mxu0 0.0
          %2509 = vmatpush1.msra.mxu0 0.0
          %2510 = vmatprep.subr.mxu0 0.0
          %2511 = vmatpush1.msra.mxu0 0.0
          %2512 = vmatprep.subr.mxu0 0.0
          %2513 = vmatpush1.msra.mxu0 0.0
          %2514 = vmatprep.subr.mxu0 0.0
          %2515 = vmatpush1.msra.mxu0 0.0
          %2516 = vmatprep.subr.mxu0 0.0
          %2517 = vmatpush1.msra.mxu0 0.0
          %2518 = vmatprep.subr.mxu0 0.0
          %2519 = vmatpush1.msra.mxu0 0.0
          %2520 = vmatprep.subr.mxu0 0.0
          %2521 = vmatpush1.msra.mxu0 0.0
          %2522 = vmatprep.mubr.f32.mxu0 0.0
          %2523 = vmatmul.mubr.f32.gmra.mrb[0].mxu0 %v2456
          %v2524 = vpop.f32.mrb[0].mxu0
          %v2525 = vadd.f32 %v2452, %v2524
          %v2526 = vpop.f32.mrb[0].mxu0
          %2527 = vdwg.mxu0
          %vm2528 = vcmask 17408
          %2529 = vst.msk [vmem:[#allocation8] sm:$0x3] %vm2528, %v2525
        $region80: #{lstm_base_forward.3} parent=71 // pred_fallthru
          _
        // Predicated region
        $region81: #{lstm_base_forward.3} parent=71 // pred_check
          %p2530 = pneg %p323
        $region82: #{lstm_base_forward.3} parent=71 // pred_check_branch
          %2532 = sbr.rel (%p2530) target = $region84
        $region83: #{lstm_base_forward.3} parent=71 // pred_region
          %s2534 = ssub.s32 32, 32
          %2535 = vsyncadd [#allocation9], %s2534
          %s2537 = sshll.u32 [#allocation8], 4
          %s2538 = int_to_ptr.vmem [resolvable:$true] %s2537
          %2540 = dma.vmem_to_hbm [thread:$0]  %s2538, 32, %s13, [#allocation9]
        $region84: #{lstm_base_forward.3} parent=71 // pred_fallthru
          _
        // Predicated region
        $region85: #{lstm_base_forward.3} parent=71 // pred_check
          %p2541 = pneg %p323
        $region86: #{lstm_base_forward.3} parent=71 // pred_check_branch
          %2543 = sbr.rel (%p2541) target = $region88
        $region87: #{lstm_base_forward.3} parent=71 // pred_region
          %2544 = dma.done [#allocation9], 32
        $region88: #{lstm_base_forward.3} parent=71 // pred_fallthru
          _
      $region72: #{lstm_base_forward.3} parent=5 // pred_fallthru
        _
      %p2545 = scmp.le.s32.totalorder 2, %s20
      // Predicated region
      $region89: #{lstm_base_forward.3} parent=5 // pred_check
        %p2546 = pneg %p2545
      $region90: #{lstm_base_forward.3} parent=5 // pred_check_branch
        %2548 = sbr.rel (%p2546) target = $region92
      $region91: #{lstm_base_forward.3} parent=5 // pred_region
        %s2549 = ssub.s32 %s20, 2
      $region92: #{lstm_base_forward.3} parent=5 // pred_fallthru
        _
    $region6: #{lstm_base_forward.3} parent=1 // loop_footer
      %s24 = sadd.s32 1, %s20
    $region7: #{lstm_base_forward.3} parent=1 // loop_footer_branch
      %19 = sbr.rel target = $region3
    $region8: #{lstm_base_forward.3} parent=1 // loop_exit
      _
    %2550 = vsyncpa [#allocation9], 1
    %s2551 = scalar_lea.sflag [#allocation9], 1
    %2552 = vsyncpa %s2551, 1

</llo_original>
